<compile_context>
chip_gen: v6e
topology: v6e:2x2x1
jax: 0.10.0
libtpu: 0.0.40
codegen_flags: <defaults>
</compile_context>

<pallas_src>
import jax
import jax.numpy as jnp
from jax.experimental import pallas as pl
from jax.experimental.pallas import tpu as pltpu

EPS = 1e-6          # VNLeakyReLU epsilon (Pocket2Mol invariant.py)
VN_SLOPE = 0.2      # VNLeakyReLU default negative_slope
SCA_SLOPE = 0.01    # nn.LeakyReLU default negative_slope


def _round_up(x, m):
    return ((x + m - 1) // m) * m


# ----------------------- in-kernel math helpers (values) --------------------

def _mm(x, w_t):
    """(N, Cin) @ (Cin, Cout) on the MXU: bf16 operands, f32 accumulation."""
    return jnp.dot(x.astype(jnp.bfloat16), w_t,
                   preferred_element_type=jnp.float32)


def _vnlinear(v, w_t):
    """v: (3, TN, Cin) stacked spatial components -> (3, TN, Cout) f32.
    Single matmul over all three spatial slabs."""
    three, tn, cin = v.shape
    return _mm(v.reshape(three * tn, cin), w_t).reshape(three, tn, -1)


def _vdot3(a, b):
    # per-channel dot over the spatial (leading, size-3) axis
    return a[0] * b[0] + a[1] * b[1] + a[2] * b[2]


def _gv_linear(s, v, wv1, ws, wv2, wg, bg):
    """GVLinear. Scalar branch is ONE K-fused matmul on the lane-concatenated
    [v_norm | s] (width <= 128 -> single lane tile)."""
    v_inter = _vnlinear(v, wv1)                          # (3, TN, H)
    v_norm = jnp.sqrt(_vdot3(v_inter, v_inter))          # (TN, H)
    feat = jnp.concatenate([v_norm, s.astype(jnp.float32)], axis=-1)
    out_s = _mm(feat, ws)                                # (TN, F0)
    out_v = _vnlinear(v_inter, wv2)                      # (3, TN, Cv_out)
    gate = jax.nn.sigmoid(_mm(out_s, wg) + bg)           # (TN, Cv_out)
    return out_s, out_v * gate[None]


def _vn_leaky_relu(v, wd):
    d = _vnlinear(v, wd)                                 # (3, TN, C)
    dot = _vdot3(v, d)                                   # (TN, C)
    d_sq = _vdot3(d, d)
    scale = dot * pl.reciprocal(d_sq + EPS, approx=True)   # EUP slot
    keep = jnp.where(dot[None] >= 0, v, v - scale[None] * d)
    return VN_SLOPE * v + (1.0 - VN_SLOPE) * keep


def _leaky_relu(s):
    return jnp.where(s >= 0, s, SCA_SLOPE * s)


# ----------------------------------- kernel ---------------------------------

def _build_kernel(w_offs, b_offs):
    """Kernel closure over static slab offsets (free static .at[] slices)."""

    def kernel(h_sca_ref, h_vec_ref, relpos_ref, w_ref, b_ref, out_ref):
        def W(name):
            r, k, n = w_offs[name]
            return w_ref[r:r + k, :n]                    # (K, N) bf16

        def B(name):
            r, n = b_offs[name]
            return b_ref[r:r + 1, :n]                    # (1, N) f32

        s = h_sca_ref[...]           # (TN, Cs)     bf16
        v = h_vec_ref[...]           # (3, TN, Cv)  bf16 (stacked spatial comps)
        relpos = relpos_ref[...]     # (TN, 3)      f32

        # --- self.gvp[0]: GVPerceptronVN(in_sca, in_vec, F0, F1) ---
        s, v = _gv_linear(s, v, W("wv1_0"), W("ws_0"), W("wv2_0"),
                          W("wg_0"), B("bg_0"))
        v = _vn_leaky_relu(v, W("wd_0"))
        s = _leaky_relu(s)

        # --- self.gvp[1]: GVLinear(F0, F1, F0, F1) ---
        s, v = _gv_linear(s, v, W("wv1_1"), W("ws_1"), W("wv2_1"),
                          W("wg_1"), B("bg_1"))

        # --- self.addi_gvp1: GVPerceptronVN(F0, F1, F0, 2*F1) ---
        s1, v1 = _gv_linear(s, v, W("wv1_2"), W("ws_2"), W("wv2_2"),
                            W("wg_2"), B("bg_2"))
        v1 = _vn_leaky_relu(v1, W("wd_2"))
        s1 = _leaky_relu(s1)

        # split vector channels into two halves (channel dim = lane dim)
        half = v1.shape[-1] // 2
        x_vec = v1[:, :, :half]                          # (3, TN, F1)
        x_vec2 = v1[:, :, half:]                         # (3, TN, F1)

        # inner_product = sum_spatial(x_vec2 * relpos)
        inner = (x_vec2[0] * relpos[:, 0:1] +
                 x_vec2[1] * relpos[:, 1:2] +
                 x_vec2[2] * relpos[:, 2:3])             # (TN, F1)

        # --- self.addi_gvp2: GVPerceptronVN(2*F0, F1, F0, F1) ---
        # scalar input cat([v_norm3, s1, inner]) -> ONE K=96 matmul.
        v_inter3 = _vnlinear(x_vec, W("wv1_3"))
        v_norm3 = jnp.sqrt(_vdot3(v_inter3, v_inter3))
        s3 = _mm(jnp.concatenate([v_norm3, s1, inner], axis=-1), W("ws_3"))
        out_v3 = _vnlinear(v_inter3, W("wv2_3"))
        gate3 = jax.nn.sigmoid(_mm(s3, W("wg_3")) + B("bg_3"))
        v2 = _vn_leaky_relu(out_v3 * gate3[None], W("wd_3"))
        s2 = _leaky_relu(s3)

        # --- self.final_linear: GVLinear(F0, F1, 1, None), scalar branch only.
        # N=1 matmul replaced by elementwise multiply + lane reduction.
        v_inter4 = _vnlinear(v2, W("wv1_4"))
        v_norm4 = jnp.sqrt(_vdot3(v_inter4, v_inter4))   # (TN, F1)
        out_col = (jnp.sum(v_norm4 * B("ws4_n"), axis=-1, keepdims=True)
                   + jnp.sum(s2 * B("ws4_s"), axis=-1, keepdims=True))  # (TN,1)

        # lane-dense store: (TN, 1) -> (1, 1, TN); transpose uses the idle XLU.
        out_ref[...] = jnp.transpose(out_col, (1, 0))[None].astype(out_ref.dtype)

    return kernel


# ------------------------------ weight preparation ---------------------------

_W_NAMES = ["wv1_0", "ws_0", "wv2_0", "wg_0", "wd_0",
            "wv1_1", "ws_1", "wv2_1", "wg_1",
            "wv1_2", "ws_2", "wv2_2", "wg_2", "wd_2",
            "wv1_3", "ws_3", "wv2_3", "wg_3", "wd_3",
            "wv1_4"]


def _prep_weights(params):
    """Pack all weights into two slabs:
      * (R, Nmax) bf16 slab: every matmul weight transposed to (in, out) at a
        sublane-aligned (multiple-of-8) row offset,
      * (8, Bmax) f32 slab: gate biases + final-layer scalar row vectors.
    Returns (w_slab, b_slab, w_offsets, b_offsets); offsets are static ints."""
    p = {k: jnp.asarray(v, jnp.float32) for k, v in params.items()}
    mats = [(name, p[name].T) for name in _W_NAMES]      # (in, out)

    n_max = max(int(m.shape[1]) for _, m in mats)
    row = 0
    w_offs = {}
    pieces = []
    for name, m in mats:
        k, n = int(m.shape[0]), int(m.shape[1])
        w_offs[name] = (row, k, n)
        pad_k = _round_up(k, 8)
        pieces.append(jnp.zeros((pad_k, n_max), jnp.float32).at[:k, :n].set(m))
        row += pad_k
    w_slab = jnp.concatenate(pieces, axis=0).astype(jnp.bfloat16)

    h4 = int(p["wv1_4"].shape[0])
    brow_list = [("bg_0", p["bg_0"][0]), ("bg_1", p["bg_1"][0]),
                 ("bg_2", p["bg_2"][0]), ("bg_3", p["bg_3"][0]),
                 ("ws4_n", p["ws_4"][0, :h4]), ("ws4_s", p["ws_4"][0, h4:])]
    b_max = max(int(v.shape[0]) for _, v in brow_list)
    b_offs = {}
    brows = []
    for i, (name, vec) in enumerate(brow_list):
        n = int(vec.shape[0])
        b_offs[name] = (i, n)
        brows.append(jnp.zeros((b_max,), jnp.float32).at[:n].set(vec))
    b_slab = jnp.stack(brows, axis=0)
    pad_r = _round_up(b_slab.shape[0], 8) - b_slab.shape[0]
    b_slab = jnp.pad(b_slab, ((0, pad_r), (0, 0)))
    return w_slab, b_slab, w_offs, b_offs


# ----------------------------------- wrapper --------------------------------

def position_evaluator_forward(h_sca, h_vec_t, pos_compose, idx_focal, pos,
                               params, *, tile_n=None):
    """h_sca: (Nc, Cs); h_vec_t: (3, Nc, Cv)  [spatial-major layout -- keep
    vector features in this layout upstream so no minor-dim transpose is ever
    needed]; pos_compose: (Nc, 3); idx_focal: (Nf,); pos: (Nf, 3).
    Returns (Nf, 1) float32."""
    n_focal = int(pos.shape[0])

    # JAX glue: one fused gather over the focal rows (no transpose).
    # TODO(synk): fold the gather itself into the kernel (scalar-prefetched
    # idx_focal + per-row DMA gather) to remove this extra HBM pass at very
    # large Nf / Nc.
    h_sca_f = h_sca[idx_focal].astype(jnp.bfloat16)                  # (Nf, Cs)
    h_vec_f = h_vec_t[:, idx_focal, :].astype(jnp.bfloat16)          # (3, Nf, Cv)
    relpos = (pos - pos_compose[idx_focal]).astype(jnp.float32)      # (Nf, 3)

    # Tiling: multiple of 16 rows (bf16 sublane packing); ~256-row sweet spot
    # (vreg pressure vs per-step overhead); >=2 tiles when Nf allows so both
    # v7x TensorCores get work under dimension_semantics=("parallel",).
    if tile_n is None:
        tile_n = min(256, _round_up(max((n_focal + 1) // 2, 16), 16))
    tile_n = _round_up(tile_n, 16)
    n_pad = _round_up(max(n_focal, 1), tile_n)
    pad = n_pad - n_focal
    if pad:
        h_sca_f = jnp.pad(h_sca_f, ((0, pad), (0, 0)))
        h_vec_f = jnp.pad(h_vec_f, ((0, 0), (0, pad), (0, 0)))
        relpos = jnp.pad(relpos, ((0, pad), (0, 0)))
    num_tiles = n_pad // tile_n

    w_slab, b_slab, w_offs, b_offs = _prep_weights(params)
    kernel = _build_kernel(w_offs, b_offs)

    out = pl.pallas_call(
        kernel,
        out_shape=jax.ShapeDtypeStruct((num_tiles, 1, tile_n), jnp.float32),
        grid=(num_tiles,),
        in_specs=[
            pl.BlockSpec((tile_n, h_sca_f.shape[1]), lambda i: (i, 0)),
            pl.BlockSpec((3, tile_n, h_vec_f.shape[2]), lambda i: (0, i, 0)),
            pl.BlockSpec((tile_n, 3), lambda i: (i, 0)),
            pl.BlockSpec(w_slab.shape, lambda i: (0, 0)),
            pl.BlockSpec(b_slab.shape, lambda i: (0, 0)),
        ],
        out_specs=pl.BlockSpec((1, 1, tile_n), lambda i: (i, 0, 0)),
        compiler_params=pltpu.CompilerParams(
            dimension_semantics=("parallel",)),
    )(h_sca_f, h_vec_f, relpos, w_slab, b_slab)

    return out.reshape(-1)[:n_focal].reshape(n_focal, 1)


# ------------------------------ pure-JAX reference ---------------------------

def _forward_ref(h_sca, h_vec_t, pos_compose, idx_focal, pos, params):
    """f32 reference mirroring the PyTorch module (for tolerance checking)."""
    p = {k: jnp.asarray(v, jnp.float32) for k, v in params.items()}
    s = jnp.asarray(h_sca, jnp.float32)[idx_focal]
    v = jnp.asarray(h_vec_t, jnp.float32)[:, idx_focal, :]
    relpos = (pos - pos_compose[idx_focal]).astype(jnp.float32)

    vnlin = lambda vv, w: jnp.einsum("snc,oc->sno", vv, w)
    lrelu = lambda x: jnp.where(x >= 0, x, SCA_SLOPE * x)

    def gvlin(s_, v_, wv1, ws, wv2, wg, bg):
        vi = vnlin(v_, wv1)
        vn = jnp.sqrt(jnp.sum(vi * vi, axis=0))
        out_s = jnp.concatenate([vn, s_], axis=-1) @ ws.T
        out_v = vnlin(vi, wv2)
        gate = jax.nn.sigmoid(out_s @ wg.T + bg)
        return out_s, out_v * gate[None]

    def vnlrelu(v_, wd):
        d = vnlin(v_, wd)
        dot = jnp.sum(v_ * d, axis=0)
        dsq = jnp.sum(d * d, axis=0)
        keep = jnp.where(dot[None] >= 0, v_, v_ - (dot / (dsq + EPS))[None] * d)
        return VN_SLOPE * v_ + (1.0 - VN_SLOPE) * keep

    s, v = gvlin(s, v, p["wv1_0"], p["ws_0"], p["wv2_0"], p["wg_0"], p["bg_0"])
    v = vnlrelu(v, p["wd_0"]); s = lrelu(s)
    s, v = gvlin(s, v, p["wv1_1"], p["ws_1"], p["wv2_1"], p["wg_1"], p["bg_1"])
    s1, v1 = gvlin(s, v, p["wv1_2"], p["ws_2"], p["wv2_2"], p["wg_2"], p["bg_2"])
    v1 = vnlrelu(v1, p["wd_2"]); s1 = lrelu(s1)

    half = v1.shape[-1] // 2
    x_vec, x_vec2 = v1[..., :half], v1[..., half:]
    inner = jnp.einsum("snc,ns->nc", x_vec2, relpos)

    s3, v2 = gvlin(jnp.concatenate([s1, inner], axis=-1), x_vec,
                   p["wv1_3"], p["ws_3"], p["wv2_3"], p["wg_3"], p["bg_3"])
    v2 = vnlrelu(v2, p["wd_3"]); s2 = lrelu(s3)

    vi4 = vnlin(v2, p["wv1_4"])
    vn4 = jnp.sqrt(jnp.sum(vi4 * vi4, axis=0))
    return jnp.concatenate([vn4, s2], axis=-1) @ p["ws_4"].T       # (Nf, 1)


# ------------------------------- parameter init -----------------------------

def init_params(key, in_sca, in_vec, f0, f1):
    """Deterministic synthetic weights, PyTorch (out, in) convention."""
    def lin(k, out_dim, in_dim):
        return (jax.random.normal(k, (out_dim, in_dim), jnp.float32)
                / jnp.sqrt(jnp.float32(in_dim)))

    keys = iter(jax.random.split(key, 40))
    p = {}
    h0 = max(in_vec, f1)
    # gvp[0] = GVPerceptronVN(in_sca, in_vec, f0, f1)
    p["wv1_0"] = lin(next(keys), h0, in_vec)
    p["wv2_0"] = lin(next(keys), f1, h0)
    p["wg_0"] = lin(next(keys), f1, f0)
    p["bg_0"] = 0.1 * jax.random.normal(next(keys), (1, f1), jnp.float32)
    p["ws_0"] = lin(next(keys), f0, in_sca + h0)
    p["wd_0"] = lin(next(keys), f1, f1)
    # gvp[1] = GVLinear(f0, f1, f0, f1)
    p["wv1_1"] = lin(next(keys), f1, f1)
    p["wv2_1"] = lin(next(keys), f1, f1)
    p["wg_1"] = lin(next(keys), f1, f0)
    p["bg_1"] = 0.1 * jax.random.normal(next(keys), (1, f1), jnp.float32)
    p["ws_1"] = lin(next(keys), f0, f0 + f1)
    # addi_gvp1 = GVPerceptronVN(f0, f1, f0, 2*f1)
    h2 = 2 * f1
    p["wv1_2"] = lin(next(keys), h2, f1)
    p["wv2_2"] = lin(next(keys), h2, h2)
    p["wg_2"] = lin(next(keys), h2, f0)
    p["bg_2"] = 0.1 * jax.random.normal(next(keys), (1, h2), jnp.float32)
    p["ws_2"] = lin(next(keys), f0, f0 + h2)
    p["wd_2"] = lin(next(keys), h2, h2)
    # addi_gvp2 = GVPerceptronVN(2*f0, f1, f0, f1)  (forward requires f0 == f1)
    p["wv1_3"] = lin(next(keys), f1, f1)
    p["wv2_3"] = lin(next(keys), f1, f1)
    p["wg_3"] = lin(next(keys), f1, f0)
    p["bg_3"] = 0.1 * jax.random.normal(next(keys), (1, f1), jnp.float32)
    p["ws_3"] = lin(next(keys), f0, 2 * f0 + f1)
    p["wd_3"] = lin(next(keys), f1, f1)
    # final_linear = GVLinear(f0, f1, 1, None): scalar branch only, dim_hid = f1
    p["wv1_4"] = lin(next(keys), f1, f1)
    p["ws_4"] = lin(next(keys), 1, f0 + f1)
    return p


# ------------------------------------ main -----------------------------------

if __name__ == "__main__":
    in_sca, in_vec = 16, 8
    F0, F1 = 32, 32                 # num_filters; forward requires F0 == F1
    n_compose, n_focal = 64, 16

    key = jax.random.PRNGKey(0)
    k1, k2, k3, k4, k5, kp = jax.random.split(key, 6)
    h_sca = jax.random.normal(k1, (n_compose, in_sca), jnp.float32)
    h_vec = jax.random.normal(k2, (n_compose, in_vec, 3), jnp.float32)  # (N, C, 3)
    pos_compose = jax.random.normal(k3, (n_compose, 3), jnp.float32)
    idx_focal = jax.random.randint(k4, (n_focal,), 0, n_compose)
    pos = jax.random.normal(k5, (n_focal, 3), jnp.float32)

    params = init_params(kp, in_sca, in_vec, F0, F1)

    # Vector features are carried spatial-major; one-time layout conversion of
    # the PyTorch-style (N, C, 3) input (upstream code should keep it this way).
    h_vec_t = jnp.transpose(h_vec, (2, 0, 1))            # (3, Nc, Cv)

    out = position_evaluator_forward(h_sca, h_vec_t, pos_compose, idx_focal,
                                     pos, params)
    out = jax.block_until_ready(out)
    assert out.shape == (n_focal, 1), out.shape
    assert bool(jnp.all(jnp.isfinite(out)))

    ref = _forward_ref(h_sca, h_vec_t, pos_compose, idx_focal, pos, params)
    err = float(jnp.max(jnp.abs(out - ref)))
    scale = 1.0 + float(jnp.max(jnp.abs(ref)))
    assert err <= 0.1 * scale, (err, scale)

    print("KERNEL_OK")
</pallas_src>

<mosaic_0001>
module attributes {stable_mosaic.version = 11 : i64} {
  func.func @kernel(%arg0: i32, %arg1: memref<16x16xbf16, #tpu.memory_space<vmem>>, %arg2: memref<3x16x8xbf16, #tpu.memory_space<vmem>>, %arg3: memref<16x3xf32, #tpu.memory_space<vmem>>, %arg4: memref<856x64xbf16, #tpu.memory_space<vmem>>, %arg5: memref<8x64xf32, #tpu.memory_space<vmem>>, %arg6: memref<1x1x16xf32, #tpu.memory_space<vmem>>) attributes {dimension_semantics = [#tpu.dimension_semantics<parallel>], iteration_bounds = array<i64: 1>, scalar_prefetch = 0 : i64, scratch_operands = 0 : i64, tpu.core_type = #tpu.core_type<tc>, window_params = [{transform_indices = @transform_0, window_bounds = array<i64: 16, 16>}, {transform_indices = @transform_1, window_bounds = array<i64: 3, 16, 8>}, {transform_indices = @transform_2, window_bounds = array<i64: 16, 3>}, {pipeline_mode = #tpu.pipeline_mode<synchronous>, transform_indices = @transform_3, window_bounds = array<i64: 856, 64>}, {pipeline_mode = #tpu.pipeline_mode<synchronous>, transform_indices = @transform_4, window_bounds = array<i64: 8, 64>}, {transform_indices = @transform_5, window_bounds = array<i64: 1, 1, 16>}]} {
    %c0 = arith.constant 0 : index
    %c0_0 = arith.constant 0 : index
    %0 = vector.load %arg1[%c0, %c0_0] : memref<16x16xbf16, #tpu.memory_space<vmem>>, vector<16x16xbf16>
    %c0_1 = arith.constant 0 : index
    %c0_2 = arith.constant 0 : index
    %c0_3 = arith.constant 0 : index
    %1 = vector.load %arg2[%c0_1, %c0_2, %c0_3] : memref<3x16x8xbf16, #tpu.memory_space<vmem>>, vector<3x16x8xbf16>
    %c0_4 = arith.constant 0 : index
    %c0_5 = arith.constant 0 : index
    %2 = vector.load %arg3[%c0_4, %c0_5] : memref<16x3xf32, #tpu.memory_space<vmem>>, vector<16x3xf32>
    %c0_6 = arith.constant 0 : index
    %c0_7 = arith.constant 0 : index
    %3 = vector.load %arg4[%c0_6, %c0_7] : memref<856x64xbf16, #tpu.memory_space<vmem>>, vector<8x32xbf16>
    %c8 = arith.constant 8 : index
    %c0_8 = arith.constant 0 : index
    %4 = vector.load %arg4[%c8, %c0_8] : memref<856x64xbf16, #tpu.memory_space<vmem>>, vector<48x32xbf16>
    %c56 = arith.constant 56 : index
    %c0_9 = arith.constant 0 : index
    %5 = vector.load %arg4[%c56, %c0_9] : memref<856x64xbf16, #tpu.memory_space<vmem>>, vector<32x32xbf16>
    %c88 = arith.constant 88 : index
    %c0_10 = arith.constant 0 : index
    %6 = vector.load %arg4[%c88, %c0_10] : memref<856x64xbf16, #tpu.memory_space<vmem>>, vector<32x32xbf16>
    %c0_11 = arith.constant 0 : index
    %c0_12 = arith.constant 0 : index
    %7 = vector.load %arg5[%c0_11, %c0_12] : memref<8x64xf32, #tpu.memory_space<vmem>>, vector<1x32xf32>
    %8 = vector.shape_cast %1 : vector<3x16x8xbf16> to vector<48x8xbf16>
    %cst = arith.constant dense<0.000000e+00> : vector<48x32xf32>
    %9 = tpu.matmul %8, %3, %cst {dimension_numbers = #tpu.dot_dimension_numbers<[1], [0], [0], [1], [0, 0, 1, 1], [], []>} : vector<48x8xbf16>, vector<8x32xbf16>, vector<48x32xf32> -> vector<48x32xf32>
    %10 = vector.shape_cast %9 : vector<48x32xf32> to vector<3x16x32xf32>
    %11 = vector.extract_strided_slice %10 {offsets = [0, 0, 0], sizes = [1, 16, 32], strides = [1, 1, 1]} : vector<3x16x32xf32> to vector<1x16x32xf32>
    %12 = vector.shape_cast %11 : vector<1x16x32xf32> to vector<16x32xf32>
    %13 = vector.extract_strided_slice %10 {offsets = [0, 0, 0], sizes = [1, 16, 32], strides = [1, 1, 1]} : vector<3x16x32xf32> to vector<1x16x32xf32>
    %14 = vector.shape_cast %13 : vector<1x16x32xf32> to vector<16x32xf32>
    %15 = arith.mulf %12, %14 : vector<16x32xf32>
    %16 = vector.extract_strided_slice %10 {offsets = [1, 0, 0], sizes = [1, 16, 32], strides = [1, 1, 1]} : vector<3x16x32xf32> to vector<1x16x32xf32>
    %17 = vector.shape_cast %16 : vector<1x16x32xf32> to vector<16x32xf32>
    %18 = vector.extract_strided_slice %10 {offsets = [1, 0, 0], sizes = [1, 16, 32], strides = [1, 1, 1]} : vector<3x16x32xf32> to vector<1x16x32xf32>
    %19 = vector.shape_cast %18 : vector<1x16x32xf32> to vector<16x32xf32>
    %20 = arith.mulf %17, %19 : vector<16x32xf32>
    %21 = arith.addf %15, %20 : vector<16x32xf32>
    %22 = vector.extract_strided_slice %10 {offsets = [2, 0, 0], sizes = [1, 16, 32], strides = [1, 1, 1]} : vector<3x16x32xf32> to vector<1x16x32xf32>
    %23 = vector.shape_cast %22 : vector<1x16x32xf32> to vector<16x32xf32>
    %24 = vector.extract_strided_slice %10 {offsets = [2, 0, 0], sizes = [1, 16, 32], strides = [1, 1, 1]} : vector<3x16x32xf32> to vector<1x16x32xf32>
    %25 = vector.shape_cast %24 : vector<1x16x32xf32> to vector<16x32xf32>
    %26 = arith.mulf %23, %25 : vector<16x32xf32>
    %27 = arith.addf %21, %26 : vector<16x32xf32>
    %28 = math.sqrt %27 : vector<16x32xf32>
    %29 = arith.extf %0 : vector<16x16xbf16> to vector<16x16xf32>
    %30 = tpu.concatenate %28, %29 in 1 : vector<16x32xf32>, vector<16x16xf32> -> vector<16x48xf32>
    %31 = arith.truncf %30 : vector<16x48xf32> to vector<16x48xbf16>
    %cst_13 = arith.constant dense<0.000000e+00> : vector<16x32xf32>
    %32 = tpu.matmul %31, %4, %cst_13 {dimension_numbers = #tpu.dot_dimension_numbers<[1], [0], [0], [1], [0, 0, 1, 1], [], []>} : vector<16x48xbf16>, vector<48x32xbf16>, vector<16x32xf32> -> vector<16x32xf32>
    %33 = vector.shape_cast %10 : vector<3x16x32xf32> to vector<48x32xf32>
    %34 = arith.truncf %33 : vector<48x32xf32> to vector<48x32xbf16>
    %cst_14 = arith.constant dense<0.000000e+00> : vector<48x32xf32>
    %35 = tpu.matmul %34, %5, %cst_14 {dimension_numbers = #tpu.dot_dimension_numbers<[1], [0], [0], [1], [0, 0, 1, 1], [], []>} : vector<48x32xbf16>, vector<32x32xbf16>, vector<48x32xf32> -> vector<48x32xf32>
    %36 = vector.shape_cast %35 : vector<48x32xf32> to vector<3x16x32xf32>
    %37 = arith.truncf %32 : vector<16x32xf32> to vector<16x32xbf16>
    %cst_15 = arith.constant dense<0.000000e+00> : vector<16x32xf32>
    %38 = tpu.matmul %37, %6, %cst_15 {dimension_numbers = #tpu.dot_dimension_numbers<[1], [0], [0], [1], [0, 0, 1, 1], [], []>} : vector<16x32xbf16>, vector<32x32xbf16>, vector<16x32xf32> -> vector<16x32xf32>
    %39 = vector.broadcast %7 : vector<1x32xf32> to vector<16x32xf32>
    %40 = arith.addf %38, %39 : vector<16x32xf32>
    %41 = arith.negf %40 : vector<16x32xf32>
    %42 = math.exp %41 : vector<16x32xf32>
    %cst_16 = arith.constant 1.000000e+00 : f32
    %43 = vector.broadcast %cst_16 : f32 to vector<16x32xf32>
    %44 = arith.addf %43, %42 : vector<16x32xf32>
    %45 = arith.divf %43, %44 : vector<16x32xf32>
    %46 = vector.shape_cast %45 : vector<16x32xf32> to vector<1x16x32xf32>
    %47 = vector.broadcast %46 : vector<1x16x32xf32> to vector<3x16x32xf32>
    %48 = arith.mulf %36, %47 : vector<3x16x32xf32>
    %c120 = arith.constant 120 : index
    %c0_17 = arith.constant 0 : index
    %49 = vector.load %arg4[%c120, %c0_17] : memref<856x64xbf16, #tpu.memory_space<vmem>>, vector<32x32xbf16>
    %50 = vector.shape_cast %48 : vector<3x16x32xf32> to vector<48x32xf32>
    %51 = arith.truncf %50 : vector<48x32xf32> to vector<48x32xbf16>
    %cst_18 = arith.constant dense<0.000000e+00> : vector<48x32xf32>
    %52 = tpu.matmul %51, %49, %cst_18 {dimension_numbers = #tpu.dot_dimension_numbers<[1], [0], [0], [1], [0, 0, 1, 1], [], []>} : vector<48x32xbf16>, vector<32x32xbf16>, vector<48x32xf32> -> vector<48x32xf32>
    %53 = vector.shape_cast %52 : vector<48x32xf32> to vector<3x16x32xf32>
    %54 = vector.extract_strided_slice %48 {offsets = [0, 0, 0], sizes = [1, 16, 32], strides = [1, 1, 1]} : vector<3x16x32xf32> to vector<1x16x32xf32>
    %55 = vector.shape_cast %54 : vector<1x16x32xf32> to vector<16x32xf32>
    %56 = vector.extract_strided_slice %53 {offsets = [0, 0, 0], sizes = [1, 16, 32], strides = [1, 1, 1]} : vector<3x16x32xf32> to vector<1x16x32xf32>
    %57 = vector.shape_cast %56 : vector<1x16x32xf32> to vector<16x32xf32>
    %58 = arith.mulf %55, %57 : vector<16x32xf32>
    %59 = vector.extract_strided_slice %48 {offsets = [1, 0, 0], sizes = [1, 16, 32], strides = [1, 1, 1]} : vector<3x16x32xf32> to vector<1x16x32xf32>
    %60 = vector.shape_cast %59 : vector<1x16x32xf32> to vector<16x32xf32>
    %61 = vector.extract_strided_slice %53 {offsets = [1, 0, 0], sizes = [1, 16, 32], strides = [1, 1, 1]} : vector<3x16x32xf32> to vector<1x16x32xf32>
    %62 = vector.shape_cast %61 : vector<1x16x32xf32> to vector<16x32xf32>
    %63 = arith.mulf %60, %62 : vector<16x32xf32>
    %64 = arith.addf %58, %63 : vector<16x32xf32>
    %65 = vector.extract_strided_slice %48 {offsets = [2, 0, 0], sizes = [1, 16, 32], strides = [1, 1, 1]} : vector<3x16x32xf32> to vector<1x16x32xf32>
    %66 = vector.shape_cast %65 : vector<1x16x32xf32> to vector<16x32xf32>
    %67 = vector.extract_strided_slice %53 {offsets = [2, 0, 0], sizes = [1, 16, 32], strides = [1, 1, 1]} : vector<3x16x32xf32> to vector<1x16x32xf32>
    %68 = vector.shape_cast %67 : vector<1x16x32xf32> to vector<16x32xf32>
    %69 = arith.mulf %66, %68 : vector<16x32xf32>
    %70 = arith.addf %64, %69 : vector<16x32xf32>
    %71 = vector.extract_strided_slice %53 {offsets = [0, 0, 0], sizes = [1, 16, 32], strides = [1, 1, 1]} : vector<3x16x32xf32> to vector<1x16x32xf32>
    %72 = vector.shape_cast %71 : vector<1x16x32xf32> to vector<16x32xf32>
    %73 = vector.extract_strided_slice %53 {offsets = [0, 0, 0], sizes = [1, 16, 32], strides = [1, 1, 1]} : vector<3x16x32xf32> to vector<1x16x32xf32>
    %74 = vector.shape_cast %73 : vector<1x16x32xf32> to vector<16x32xf32>
    %75 = arith.mulf %72, %74 : vector<16x32xf32>
    %76 = vector.extract_strided_slice %53 {offsets = [1, 0, 0], sizes = [1, 16, 32], strides = [1, 1, 1]} : vector<3x16x32xf32> to vector<1x16x32xf32>
    %77 = vector.shape_cast %76 : vector<1x16x32xf32> to vector<16x32xf32>
    %78 = vector.extract_strided_slice %53 {offsets = [1, 0, 0], sizes = [1, 16, 32], strides = [1, 1, 1]} : vector<3x16x32xf32> to vector<1x16x32xf32>
    %79 = vector.shape_cast %78 : vector<1x16x32xf32> to vector<16x32xf32>
    %80 = arith.mulf %77, %79 : vector<16x32xf32>
    %81 = arith.addf %75, %80 : vector<16x32xf32>
    %82 = vector.extract_strided_slice %53 {offsets = [2, 0, 0], sizes = [1, 16, 32], strides = [1, 1, 1]} : vector<3x16x32xf32> to vector<1x16x32xf32>
    %83 = vector.shape_cast %82 : vector<1x16x32xf32> to vector<16x32xf32>
    %84 = vector.extract_strided_slice %53 {offsets = [2, 0, 0], sizes = [1, 16, 32], strides = [1, 1, 1]} : vector<3x16x32xf32> to vector<1x16x32xf32>
    %85 = vector.shape_cast %84 : vector<1x16x32xf32> to vector<16x32xf32>
    %86 = arith.mulf %83, %85 : vector<16x32xf32>
    %87 = arith.addf %81, %86 : vector<16x32xf32>
    %cst_19 = arith.constant 9.99999997E-7 : f32
    %88 = vector.broadcast %cst_19 : f32 to vector<16x32xf32>
    %89 = arith.addf %87, %88 : vector<16x32xf32>
    %90 = tpu.reciprocal %89 {approx = true} : vector<16x32xf32> -> vector<16x32xf32>
    %91 = arith.mulf %70, %90 : vector<16x32xf32>
    %92 = vector.shape_cast %70 : vector<16x32xf32> to vector<1x16x32xf32>
    %cst_20 = arith.constant 0.000000e+00 : f32
    %93 = vector.broadcast %cst_20 : f32 to vector<1x16x32xf32>
    %94 = arith.cmpf oge, %92, %93 : vector<1x16x32xf32>
    %95 = vector.shape_cast %91 : vector<16x32xf32> to vector<1x16x32xf32>
    %96 = vector.broadcast %95 : vector<1x16x32xf32> to vector<3x16x32xf32>
    %97 = arith.mulf %96, %53 : vector<3x16x32xf32>
    %98 = arith.subf %48, %97 : vector<3x16x32xf32>
    %99 = vector.shape_cast %94 : vector<1x16x32xi1> to vector<1x16x32xi1>
    %100 = vector.broadcast %99 : vector<1x16x32xi1> to vector<3x16x32xi1>
    %101 = arith.select %100, %48, %98 : vector<3x16x32xi1>, vector<3x16x32xf32>
    %cst_21 = arith.constant 2.000000e-01 : f32
    %102 = vector.broadcast %cst_21 : f32 to vector<3x16x32xf32>
    %103 = arith.mulf %102, %48 : vector<3x16x32xf32>
    %cst_22 = arith.constant 8.000000e-01 : f32
    %104 = vector.broadcast %cst_22 : f32 to vector<3x16x32xf32>
    %105 = arith.mulf %104, %101 : vector<3x16x32xf32>
    %106 = arith.addf %103, %105 : vector<3x16x32xf32>
    %cst_23 = arith.constant 0.000000e+00 : f32
    %107 = vector.broadcast %cst_23 : f32 to vector<16x32xf32>
    %108 = arith.cmpf oge, %32, %107 : vector<16x32xf32>
    %cst_24 = arith.constant 0.00999999977 : f32
    %109 = vector.broadcast %cst_24 : f32 to vector<16x32xf32>
    %110 = arith.mulf %109, %32 : vector<16x32xf32>
    %111 = arith.select %108, %32, %110 : vector<16x32xi1>, vector<16x32xf32>
    %c152 = arith.constant 152 : index
    %c0_25 = arith.constant 0 : index
    %112 = vector.load %arg4[%c152, %c0_25] : memref<856x64xbf16, #tpu.memory_space<vmem>>, vector<32x32xbf16>
    %c184 = arith.constant 184 : index
    %c0_26 = arith.constant 0 : index
    %113 = vector.load %arg4[%c184, %c0_26] : memref<856x64xbf16, #tpu.memory_space<vmem>>, vector<64x32xbf16>
    %c248 = arith.constant 248 : index
    %c0_27 = arith.constant 0 : index
    %114 = vector.load %arg4[%c248, %c0_27] : memref<856x64xbf16, #tpu.memory_space<vmem>>, vector<32x32xbf16>
    %c280 = arith.constant 280 : index
    %c0_28 = arith.constant 0 : index
    %115 = vector.load %arg4[%c280, %c0_28] : memref<856x64xbf16, #tpu.memory_space<vmem>>, vector<32x32xbf16>
    %c1 = arith.constant 1 : index
    %c0_29 = arith.constant 0 : index
    %116 = vector.load %arg5[%c1, %c0_29] : memref<8x64xf32, #tpu.memory_space<vmem>>, vector<1x32xf32>
    %117 = vector.shape_cast %106 : vector<3x16x32xf32> to vector<48x32xf32>
    %118 = arith.truncf %117 : vector<48x32xf32> to vector<48x32xbf16>
    %cst_30 = arith.constant dense<0.000000e+00> : vector<48x32xf32>
    %119 = tpu.matmul %118, %112, %cst_30 {dimension_numbers = #tpu.dot_dimension_numbers<[1], [0], [0], [1], [0, 0, 1, 1], [], []>} : vector<48x32xbf16>, vector<32x32xbf16>, vector<48x32xf32> -> vector<48x32xf32>
    %120 = vector.shape_cast %119 : vector<48x32xf32> to vector<3x16x32xf32>
    %121 = vector.extract_strided_slice %120 {offsets = [0, 0, 0], sizes = [1, 16, 32], strides = [1, 1, 1]} : vector<3x16x32xf32> to vector<1x16x32xf32>
    %122 = vector.shape_cast %121 : vector<1x16x32xf32> to vector<16x32xf32>
    %123 = vector.extract_strided_slice %120 {offsets = [0, 0, 0], sizes = [1, 16, 32], strides = [1, 1, 1]} : vector<3x16x32xf32> to vector<1x16x32xf32>
    %124 = vector.shape_cast %123 : vector<1x16x32xf32> to vector<16x32xf32>
    %125 = arith.mulf %122, %124 : vector<16x32xf32>
    %126 = vector.extract_strided_slice %120 {offsets = [1, 0, 0], sizes = [1, 16, 32], strides = [1, 1, 1]} : vector<3x16x32xf32> to vector<1x16x32xf32>
    %127 = vector.shape_cast %126 : vector<1x16x32xf32> to vector<16x32xf32>
    %128 = vector.extract_strided_slice %120 {offsets = [1, 0, 0], sizes = [1, 16, 32], strides = [1, 1, 1]} : vector<3x16x32xf32> to vector<1x16x32xf32>
    %129 = vector.shape_cast %128 : vector<1x16x32xf32> to vector<16x32xf32>
    %130 = arith.mulf %127, %129 : vector<16x32xf32>
    %131 = arith.addf %125, %130 : vector<16x32xf32>
    %132 = vector.extract_strided_slice %120 {offsets = [2, 0, 0], sizes = [1, 16, 32], strides = [1, 1, 1]} : vector<3x16x32xf32> to vector<1x16x32xf32>
    %133 = vector.shape_cast %132 : vector<1x16x32xf32> to vector<16x32xf32>
    %134 = vector.extract_strided_slice %120 {offsets = [2, 0, 0], sizes = [1, 16, 32], strides = [1, 1, 1]} : vector<3x16x32xf32> to vector<1x16x32xf32>
    %135 = vector.shape_cast %134 : vector<1x16x32xf32> to vector<16x32xf32>
    %136 = arith.mulf %133, %135 : vector<16x32xf32>
    %137 = arith.addf %131, %136 : vector<16x32xf32>
    %138 = math.sqrt %137 : vector<16x32xf32>
    %139 = tpu.concatenate %138, %111 in 1 : vector<16x32xf32>, vector<16x32xf32> -> vector<16x64xf32>
    %140 = arith.truncf %139 : vector<16x64xf32> to vector<16x64xbf16>
    %cst_31 = arith.constant dense<0.000000e+00> : vector<16x32xf32>
    %141 = tpu.matmul %140, %113, %cst_31 {dimension_numbers = #tpu.dot_dimension_numbers<[1], [0], [0], [1], [0, 0, 1, 1], [], []>} : vector<16x64xbf16>, vector<64x32xbf16>, vector<16x32xf32> -> vector<16x32xf32>
    %142 = vector.shape_cast %120 : vector<3x16x32xf32> to vector<48x32xf32>
    %143 = arith.truncf %142 : vector<48x32xf32> to vector<48x32xbf16>
    %cst_32 = arith.constant dense<0.000000e+00> : vector<48x32xf32>
    %144 = tpu.matmul %143, %114, %cst_32 {dimension_numbers = #tpu.dot_dimension_numbers<[1], [0], [0], [1], [0, 0, 1, 1], [], []>} : vector<48x32xbf16>, vector<32x32xbf16>, vector<48x32xf32> -> vector<48x32xf32>
    %145 = vector.shape_cast %144 : vector<48x32xf32> to vector<3x16x32xf32>
    %146 = arith.truncf %141 : vector<16x32xf32> to vector<16x32xbf16>
    %cst_33 = arith.constant dense<0.000000e+00> : vector<16x32xf32>
    %147 = tpu.matmul %146, %115, %cst_33 {dimension_numbers = #tpu.dot_dimension_numbers<[1], [0], [0], [1], [0, 0, 1, 1], [], []>} : vector<16x32xbf16>, vector<32x32xbf16>, vector<16x32xf32> -> vector<16x32xf32>
    %148 = vector.broadcast %116 : vector<1x32xf32> to vector<16x32xf32>
    %149 = arith.addf %147, %148 : vector<16x32xf32>
    %150 = arith.negf %149 : vector<16x32xf32>
    %151 = math.exp %150 : vector<16x32xf32>
    %cst_34 = arith.constant 1.000000e+00 : f32
    %152 = vector.broadcast %cst_34 : f32 to vector<16x32xf32>
    %153 = arith.addf %152, %151 : vector<16x32xf32>
    %154 = arith.divf %152, %153 : vector<16x32xf32>
    %155 = vector.shape_cast %154 : vector<16x32xf32> to vector<1x16x32xf32>
    %156 = vector.broadcast %155 : vector<1x16x32xf32> to vector<3x16x32xf32>
    %157 = arith.mulf %145, %156 : vector<3x16x32xf32>
    %c312 = arith.constant 312 : index
    %c0_35 = arith.constant 0 : index
    %158 = vector.load %arg4[%c312, %c0_35] : memref<856x64xbf16, #tpu.memory_space<vmem>>, vector<32x64xbf16>
    %c344 = arith.constant 344 : index
    %c0_36 = arith.constant 0 : index
    %159 = vector.load %arg4[%c344, %c0_36] : memref<856x64xbf16, #tpu.memory_space<vmem>>, vector<96x32xbf16>
    %c440 = arith.constant 440 : index
    %c0_37 = arith.constant 0 : index
    %160 = vector.load %arg4[%c440, %c0_37] : memref<856x64xbf16, #tpu.memory_space<vmem>>, vector<64x64xbf16>
    %c504 = arith.constant 504 : index
    %c0_38 = arith.constant 0 : index
    %161 = vector.load %arg4[%c504, %c0_38] : memref<856x64xbf16, #tpu.memory_space<vmem>>, vector<32x64xbf16>
    %c2 = arith.constant 2 : index
    %c0_39 = arith.constant 0 : index
    %162 = vector.load %arg5[%c2, %c0_39] : memref<8x64xf32, #tpu.memory_space<vmem>>, vector<1x64xf32>
    %163 = vector.shape_cast %157 : vector<3x16x32xf32> to vector<48x32xf32>
    %164 = arith.truncf %163 : vector<48x32xf32> to vector<48x32xbf16>
    %cst_40 = arith.constant dense<0.000000e+00> : vector<48x64xf32>
    %165 = tpu.matmul %164, %158, %cst_40 {dimension_numbers = #tpu.dot_dimension_numbers<[1], [0], [0], [1], [0, 0, 1, 1], [], []>} : vector<48x32xbf16>, vector<32x64xbf16>, vector<48x64xf32> -> vector<48x64xf32>
    %166 = vector.shape_cast %165 : vector<48x64xf32> to vector<3x16x64xf32>
    %167 = vector.extract_strided_slice %166 {offsets = [0, 0, 0], sizes = [1, 16, 64], strides = [1, 1, 1]} : vector<3x16x64xf32> to vector<1x16x64xf32>
    %168 = vector.shape_cast %167 : vector<1x16x64xf32> to vector<16x64xf32>
    %169 = vector.extract_strided_slice %166 {offsets = [0, 0, 0], sizes = [1, 16, 64], strides = [1, 1, 1]} : vector<3x16x64xf32> to vector<1x16x64xf32>
    %170 = vector.shape_cast %169 : vector<1x16x64xf32> to vector<16x64xf32>
    %171 = arith.mulf %168, %170 : vector<16x64xf32>
    %172 = vector.extract_strided_slice %166 {offsets = [1, 0, 0], sizes = [1, 16, 64], strides = [1, 1, 1]} : vector<3x16x64xf32> to vector<1x16x64xf32>
    %173 = vector.shape_cast %172 : vector<1x16x64xf32> to vector<16x64xf32>
    %174 = vector.extract_strided_slice %166 {offsets = [1, 0, 0], sizes = [1, 16, 64], strides = [1, 1, 1]} : vector<3x16x64xf32> to vector<1x16x64xf32>
    %175 = vector.shape_cast %174 : vector<1x16x64xf32> to vector<16x64xf32>
    %176 = arith.mulf %173, %175 : vector<16x64xf32>
    %177 = arith.addf %171, %176 : vector<16x64xf32>
    %178 = vector.extract_strided_slice %166 {offsets = [2, 0, 0], sizes = [1, 16, 64], strides = [1, 1, 1]} : vector<3x16x64xf32> to vector<1x16x64xf32>
    %179 = vector.shape_cast %178 : vector<1x16x64xf32> to vector<16x64xf32>
    %180 = vector.extract_strided_slice %166 {offsets = [2, 0, 0], sizes = [1, 16, 64], strides = [1, 1, 1]} : vector<3x16x64xf32> to vector<1x16x64xf32>
    %181 = vector.shape_cast %180 : vector<1x16x64xf32> to vector<16x64xf32>
    %182 = arith.mulf %179, %181 : vector<16x64xf32>
    %183 = arith.addf %177, %182 : vector<16x64xf32>
    %184 = math.sqrt %183 : vector<16x64xf32>
    %185 = tpu.concatenate %184, %141 in 1 : vector<16x64xf32>, vector<16x32xf32> -> vector<16x96xf32>
    %186 = arith.truncf %185 : vector<16x96xf32> to vector<16x96xbf16>
    %cst_41 = arith.constant dense<0.000000e+00> : vector<16x32xf32>
    %187 = tpu.matmul %186, %159, %cst_41 {dimension_numbers = #tpu.dot_dimension_numbers<[1], [0], [0], [1], [0, 0, 1, 1], [], []>} : vector<16x96xbf16>, vector<96x32xbf16>, vector<16x32xf32> -> vector<16x32xf32>
    %188 = vector.shape_cast %166 : vector<3x16x64xf32> to vector<48x64xf32>
    %189 = arith.truncf %188 : vector<48x64xf32> to vector<48x64xbf16>
    %cst_42 = arith.constant dense<0.000000e+00> : vector<48x64xf32>
    %190 = tpu.matmul %189, %160, %cst_42 {dimension_numbers = #tpu.dot_dimension_numbers<[1], [0], [0], [1], [0, 0, 1, 1], [], []>} : vector<48x64xbf16>, vector<64x64xbf16>, vector<48x64xf32> -> vector<48x64xf32>
    %191 = vector.shape_cast %190 : vector<48x64xf32> to vector<3x16x64xf32>
    %192 = arith.truncf %187 : vector<16x32xf32> to vector<16x32xbf16>
    %cst_43 = arith.constant dense<0.000000e+00> : vector<16x64xf32>
    %193 = tpu.matmul %192, %161, %cst_43 {dimension_numbers = #tpu.dot_dimension_numbers<[1], [0], [0], [1], [0, 0, 1, 1], [], []>} : vector<16x32xbf16>, vector<32x64xbf16>, vector<16x64xf32> -> vector<16x64xf32>
    %194 = vector.broadcast %162 : vector<1x64xf32> to vector<16x64xf32>
    %195 = arith.addf %193, %194 : vector<16x64xf32>
    %196 = arith.negf %195 : vector<16x64xf32>
    %197 = math.exp %196 : vector<16x64xf32>
    %cst_44 = arith.constant 1.000000e+00 : f32
    %198 = vector.broadcast %cst_44 : f32 to vector<16x64xf32>
    %199 = arith.addf %198, %197 : vector<16x64xf32>
    %200 = arith.divf %198, %199 : vector<16x64xf32>
    %201 = vector.shape_cast %200 : vector<16x64xf32> to vector<1x16x64xf32>
    %202 = vector.broadcast %201 : vector<1x16x64xf32> to vector<3x16x64xf32>
    %203 = arith.mulf %191, %202 : vector<3x16x64xf32>
    %c536 = arith.constant 536 : index
    %c0_45 = arith.constant 0 : index
    %204 = vector.load %arg4[%c536, %c0_45] : memref<856x64xbf16, #tpu.memory_space<vmem>>, vector<64x64xbf16>
    %205 = vector.shape_cast %203 : vector<3x16x64xf32> to vector<48x64xf32>
    %206 = arith.truncf %205 : vector<48x64xf32> to vector<48x64xbf16>
    %cst_46 = arith.constant dense<0.000000e+00> : vector<48x64xf32>
    %207 = tpu.matmul %206, %204, %cst_46 {dimension_numbers = #tpu.dot_dimension_numbers<[1], [0], [0], [1], [0, 0, 1, 1], [], []>} : vector<48x64xbf16>, vector<64x64xbf16>, vector<48x64xf32> -> vector<48x64xf32>
    %208 = vector.shape_cast %207 : vector<48x64xf32> to vector<3x16x64xf32>
    %209 = vector.extract_strided_slice %203 {offsets = [0, 0, 0], sizes = [1, 16, 64], strides = [1, 1, 1]} : vector<3x16x64xf32> to vector<1x16x64xf32>
    %210 = vector.shape_cast %209 : vector<1x16x64xf32> to vector<16x64xf32>
    %211 = vector.extract_strided_slice %208 {offsets = [0, 0, 0], sizes = [1, 16, 64], strides = [1, 1, 1]} : vector<3x16x64xf32> to vector<1x16x64xf32>
    %212 = vector.shape_cast %211 : vector<1x16x64xf32> to vector<16x64xf32>
    %213 = arith.mulf %210, %212 : vector<16x64xf32>
    %214 = vector.extract_strided_slice %203 {offsets = [1, 0, 0], sizes = [1, 16, 64], strides = [1, 1, 1]} : vector<3x16x64xf32> to vector<1x16x64xf32>
    %215 = vector.shape_cast %214 : vector<1x16x64xf32> to vector<16x64xf32>
    %216 = vector.extract_strided_slice %208 {offsets = [1, 0, 0], sizes = [1, 16, 64], strides = [1, 1, 1]} : vector<3x16x64xf32> to vector<1x16x64xf32>
    %217 = vector.shape_cast %216 : vector<1x16x64xf32> to vector<16x64xf32>
    %218 = arith.mulf %215, %217 : vector<16x64xf32>
    %219 = arith.addf %213, %218 : vector<16x64xf32>
    %220 = vector.extract_strided_slice %203 {offsets = [2, 0, 0], sizes = [1, 16, 64], strides = [1, 1, 1]} : vector<3x16x64xf32> to vector<1x16x64xf32>
    %221 = vector.shape_cast %220 : vector<1x16x64xf32> to vector<16x64xf32>
    %222 = vector.extract_strided_slice %208 {offsets = [2, 0, 0], sizes = [1, 16, 64], strides = [1, 1, 1]} : vector<3x16x64xf32> to vector<1x16x64xf32>
    %223 = vector.shape_cast %222 : vector<1x16x64xf32> to vector<16x64xf32>
    %224 = arith.mulf %221, %223 : vector<16x64xf32>
    %225 = arith.addf %219, %224 : vector<16x64xf32>
    %226 = vector.extract_strided_slice %208 {offsets = [0, 0, 0], sizes = [1, 16, 64], strides = [1, 1, 1]} : vector<3x16x64xf32> to vector<1x16x64xf32>
    %227 = vector.shape_cast %226 : vector<1x16x64xf32> to vector<16x64xf32>
    %228 = vector.extract_strided_slice %208 {offsets = [0, 0, 0], sizes = [1, 16, 64], strides = [1, 1, 1]} : vector<3x16x64xf32> to vector<1x16x64xf32>
    %229 = vector.shape_cast %228 : vector<1x16x64xf32> to vector<16x64xf32>
    %230 = arith.mulf %227, %229 : vector<16x64xf32>
    %231 = vector.extract_strided_slice %208 {offsets = [1, 0, 0], sizes = [1, 16, 64], strides = [1, 1, 1]} : vector<3x16x64xf32> to vector<1x16x64xf32>
    %232 = vector.shape_cast %231 : vector<1x16x64xf32> to vector<16x64xf32>
    %233 = vector.extract_strided_slice %208 {offsets = [1, 0, 0], sizes = [1, 16, 64], strides = [1, 1, 1]} : vector<3x16x64xf32> to vector<1x16x64xf32>
    %234 = vector.shape_cast %233 : vector<1x16x64xf32> to vector<16x64xf32>
    %235 = arith.mulf %232, %234 : vector<16x64xf32>
    %236 = arith.addf %230, %235 : vector<16x64xf32>
    %237 = vector.extract_strided_slice %208 {offsets = [2, 0, 0], sizes = [1, 16, 64], strides = [1, 1, 1]} : vector<3x16x64xf32> to vector<1x16x64xf32>
    %238 = vector.shape_cast %237 : vector<1x16x64xf32> to vector<16x64xf32>
    %239 = vector.extract_strided_slice %208 {offsets = [2, 0, 0], sizes = [1, 16, 64], strides = [1, 1, 1]} : vector<3x16x64xf32> to vector<1x16x64xf32>
    %240 = vector.shape_cast %239 : vector<1x16x64xf32> to vector<16x64xf32>
    %241 = arith.mulf %238, %240 : vector<16x64xf32>
    %242 = arith.addf %236, %241 : vector<16x64xf32>
    %cst_47 = arith.constant 9.99999997E-7 : f32
    %243 = vector.broadcast %cst_47 : f32 to vector<16x64xf32>
    %244 = arith.addf %242, %243 : vector<16x64xf32>
    %245 = tpu.reciprocal %244 {approx = true} : vector<16x64xf32> -> vector<16x64xf32>
    %246 = arith.mulf %225, %245 : vector<16x64xf32>
    %247 = vector.shape_cast %225 : vector<16x64xf32> to vector<1x16x64xf32>
    %cst_48 = arith.constant 0.000000e+00 : f32
    %248 = vector.broadcast %cst_48 : f32 to vector<1x16x64xf32>
    %249 = arith.cmpf oge, %247, %248 : vector<1x16x64xf32>
    %250 = vector.shape_cast %246 : vector<16x64xf32> to vector<1x16x64xf32>
    %251 = vector.broadcast %250 : vector<1x16x64xf32> to vector<3x16x64xf32>
    %252 = arith.mulf %251, %208 : vector<3x16x64xf32>
    %253 = arith.subf %203, %252 : vector<3x16x64xf32>
    %254 = vector.shape_cast %249 : vector<1x16x64xi1> to vector<1x16x64xi1>
    %255 = vector.broadcast %254 : vector<1x16x64xi1> to vector<3x16x64xi1>
    %256 = arith.select %255, %203, %253 : vector<3x16x64xi1>, vector<3x16x64xf32>
    %cst_49 = arith.constant 2.000000e-01 : f32
    %257 = vector.broadcast %cst_49 : f32 to vector<3x16x64xf32>
    %258 = arith.mulf %257, %203 : vector<3x16x64xf32>
    %cst_50 = arith.constant 8.000000e-01 : f32
    %259 = vector.broadcast %cst_50 : f32 to vector<3x16x64xf32>
    %260 = arith.mulf %259, %256 : vector<3x16x64xf32>
    %261 = arith.addf %258, %260 : vector<3x16x64xf32>
    %cst_51 = arith.constant 0.000000e+00 : f32
    %262 = vector.broadcast %cst_51 : f32 to vector<16x32xf32>
    %263 = arith.cmpf oge, %187, %262 : vector<16x32xf32>
    %cst_52 = arith.constant 0.00999999977 : f32
    %264 = vector.broadcast %cst_52 : f32 to vector<16x32xf32>
    %265 = arith.mulf %264, %187 : vector<16x32xf32>
    %266 = arith.select %263, %187, %265 : vector<16x32xi1>, vector<16x32xf32>
    %267 = vector.extract_strided_slice %261 {offsets = [0, 0, 0], sizes = [3, 16, 32], strides = [1, 1, 1]} : vector<3x16x64xf32> to vector<3x16x32xf32>
    %268 = vector.extract_strided_slice %261 {offsets = [0, 0, 32], sizes = [3, 16, 32], strides = [1, 1, 1]} : vector<3x16x64xf32> to vector<3x16x32xf32>
    %269 = vector.extract_strided_slice %268 {offsets = [0, 0, 0], sizes = [1, 16, 32], strides = [1, 1, 1]} : vector<3x16x32xf32> to vector<1x16x32xf32>
    %270 = vector.shape_cast %269 : vector<1x16x32xf32> to vector<16x32xf32>
    %271 = vector.extract_strided_slice %2 {offsets = [0, 0], sizes = [16, 1], strides = [1, 1]} : vector<16x3xf32> to vector<16x1xf32>
    %272 = vector.broadcast %271 : vector<16x1xf32> to vector<16x32xf32>
    %273 = arith.mulf %270, %272 : vector<16x32xf32>
    %274 = vector.extract_strided_slice %268 {offsets = [1, 0, 0], sizes = [1, 16, 32], strides = [1, 1, 1]} : vector<3x16x32xf32> to vector<1x16x32xf32>
    %275 = vector.shape_cast %274 : vector<1x16x32xf32> to vector<16x32xf32>
    %276 = vector.extract_strided_slice %2 {offsets = [0, 1], sizes = [16, 1], strides = [1, 1]} : vector<16x3xf32> to vector<16x1xf32>
    %277 = vector.broadcast %276 : vector<16x1xf32> to vector<16x32xf32>
    %278 = arith.mulf %275, %277 : vector<16x32xf32>
    %279 = arith.addf %273, %278 : vector<16x32xf32>
    %280 = vector.extract_strided_slice %268 {offsets = [2, 0, 0], sizes = [1, 16, 32], strides = [1, 1, 1]} : vector<3x16x32xf32> to vector<1x16x32xf32>
    %281 = vector.shape_cast %280 : vector<1x16x32xf32> to vector<16x32xf32>
    %282 = vector.extract_strided_slice %2 {offsets = [0, 2], sizes = [16, 1], strides = [1, 1]} : vector<16x3xf32> to vector<16x1xf32>
    %283 = vector.broadcast %282 : vector<16x1xf32> to vector<16x32xf32>
    %284 = arith.mulf %281, %283 : vector<16x32xf32>
    %285 = arith.addf %279, %284 : vector<16x32xf32>
    %c600 = arith.constant 600 : index
    %c0_53 = arith.constant 0 : index
    %286 = vector.load %arg4[%c600, %c0_53] : memref<856x64xbf16, #tpu.memory_space<vmem>>, vector<32x32xbf16>
    %287 = vector.shape_cast %267 : vector<3x16x32xf32> to vector<48x32xf32>
    %288 = arith.truncf %287 : vector<48x32xf32> to vector<48x32xbf16>
    %cst_54 = arith.constant dense<0.000000e+00> : vector<48x32xf32>
    %289 = tpu.matmul %288, %286, %cst_54 {dimension_numbers = #tpu.dot_dimension_numbers<[1], [0], [0], [1], [0, 0, 1, 1], [], []>} : vector<48x32xbf16>, vector<32x32xbf16>, vector<48x32xf32> -> vector<48x32xf32>
    %290 = vector.shape_cast %289 : vector<48x32xf32> to vector<3x16x32xf32>
    %291 = vector.extract_strided_slice %290 {offsets = [0, 0, 0], sizes = [1, 16, 32], strides = [1, 1, 1]} : vector<3x16x32xf32> to vector<1x16x32xf32>
    %292 = vector.shape_cast %291 : vector<1x16x32xf32> to vector<16x32xf32>
    %293 = vector.extract_strided_slice %290 {offsets = [0, 0, 0], sizes = [1, 16, 32], strides = [1, 1, 1]} : vector<3x16x32xf32> to vector<1x16x32xf32>
    %294 = vector.shape_cast %293 : vector<1x16x32xf32> to vector<16x32xf32>
    %295 = arith.mulf %292, %294 : vector<16x32xf32>
    %296 = vector.extract_strided_slice %290 {offsets = [1, 0, 0], sizes = [1, 16, 32], strides = [1, 1, 1]} : vector<3x16x32xf32> to vector<1x16x32xf32>
    %297 = vector.shape_cast %296 : vector<1x16x32xf32> to vector<16x32xf32>
    %298 = vector.extract_strided_slice %290 {offsets = [1, 0, 0], sizes = [1, 16, 32], strides = [1, 1, 1]} : vector<3x16x32xf32> to vector<1x16x32xf32>
    %299 = vector.shape_cast %298 : vector<1x16x32xf32> to vector<16x32xf32>
    %300 = arith.mulf %297, %299 : vector<16x32xf32>
    %301 = arith.addf %295, %300 : vector<16x32xf32>
    %302 = vector.extract_strided_slice %290 {offsets = [2, 0, 0], sizes = [1, 16, 32], strides = [1, 1, 1]} : vector<3x16x32xf32> to vector<1x16x32xf32>
    %303 = vector.shape_cast %302 : vector<1x16x32xf32> to vector<16x32xf32>
    %304 = vector.extract_strided_slice %290 {offsets = [2, 0, 0], sizes = [1, 16, 32], strides = [1, 1, 1]} : vector<3x16x32xf32> to vector<1x16x32xf32>
    %305 = vector.shape_cast %304 : vector<1x16x32xf32> to vector<16x32xf32>
    %306 = arith.mulf %303, %305 : vector<16x32xf32>
    %307 = arith.addf %301, %306 : vector<16x32xf32>
    %308 = math.sqrt %307 : vector<16x32xf32>
    %309 = tpu.concatenate %308, %266, %285 in 1 : vector<16x32xf32>, vector<16x32xf32>, vector<16x32xf32> -> vector<16x96xf32>
    %c632 = arith.constant 632 : index
    %c0_55 = arith.constant 0 : index
    %310 = vector.load %arg4[%c632, %c0_55] : memref<856x64xbf16, #tpu.memory_space<vmem>>, vector<96x32xbf16>
    %311 = arith.truncf %309 : vector<16x96xf32> to vector<16x96xbf16>
    %cst_56 = arith.constant dense<0.000000e+00> : vector<16x32xf32>
    %312 = tpu.matmul %311, %310, %cst_56 {dimension_numbers = #tpu.dot_dimension_numbers<[1], [0], [0], [1], [0, 0, 1, 1], [], []>} : vector<16x96xbf16>, vector<96x32xbf16>, vector<16x32xf32> -> vector<16x32xf32>
    %c728 = arith.constant 728 : index
    %c0_57 = arith.constant 0 : index
    %313 = vector.load %arg4[%c728, %c0_57] : memref<856x64xbf16, #tpu.memory_space<vmem>>, vector<32x32xbf16>
    %314 = vector.shape_cast %290 : vector<3x16x32xf32> to vector<48x32xf32>
    %315 = arith.truncf %314 : vector<48x32xf32> to vector<48x32xbf16>
    %cst_58 = arith.constant dense<0.000000e+00> : vector<48x32xf32>
    %316 = tpu.matmul %315, %313, %cst_58 {dimension_numbers = #tpu.dot_dimension_numbers<[1], [0], [0], [1], [0, 0, 1, 1], [], []>} : vector<48x32xbf16>, vector<32x32xbf16>, vector<48x32xf32> -> vector<48x32xf32>
    %317 = vector.shape_cast %316 : vector<48x32xf32> to vector<3x16x32xf32>
    %c760 = arith.constant 760 : index
    %c0_59 = arith.constant 0 : index
    %318 = vector.load %arg4[%c760, %c0_59] : memref<856x64xbf16, #tpu.memory_space<vmem>>, vector<32x32xbf16>
    %319 = arith.truncf %312 : vector<16x32xf32> to vector<16x32xbf16>
    %cst_60 = arith.constant dense<0.000000e+00> : vector<16x32xf32>
    %320 = tpu.matmul %319, %318, %cst_60 {dimension_numbers = #tpu.dot_dimension_numbers<[1], [0], [0], [1], [0, 0, 1, 1], [], []>} : vector<16x32xbf16>, vector<32x32xbf16>, vector<16x32xf32> -> vector<16x32xf32>
    %c3 = arith.constant 3 : index
    %c0_61 = arith.constant 0 : index
    %321 = vector.load %arg5[%c3, %c0_61] : memref<8x64xf32, #tpu.memory_space<vmem>>, vector<1x32xf32>
    %322 = vector.broadcast %321 : vector<1x32xf32> to vector<16x32xf32>
    %323 = arith.addf %320, %322 : vector<16x32xf32>
    %324 = arith.negf %323 : vector<16x32xf32>
    %325 = math.exp %324 : vector<16x32xf32>
    %cst_62 = arith.constant 1.000000e+00 : f32
    %326 = vector.broadcast %cst_62 : f32 to vector<16x32xf32>
    %327 = arith.addf %326, %325 : vector<16x32xf32>
    %328 = arith.divf %326, %327 : vector<16x32xf32>
    %329 = vector.shape_cast %328 : vector<16x32xf32> to vector<1x16x32xf32>
    %330 = vector.broadcast %329 : vector<1x16x32xf32> to vector<3x16x32xf32>
    %331 = arith.mulf %317, %330 : vector<3x16x32xf32>
    %c792 = arith.constant 792 : index
    %c0_63 = arith.constant 0 : index
    %332 = vector.load %arg4[%c792, %c0_63] : memref<856x64xbf16, #tpu.memory_space<vmem>>, vector<32x32xbf16>
    %333 = vector.shape_cast %331 : vector<3x16x32xf32> to vector<48x32xf32>
    %334 = arith.truncf %333 : vector<48x32xf32> to vector<48x32xbf16>
    %cst_64 = arith.constant dense<0.000000e+00> : vector<48x32xf32>
    %335 = tpu.matmul %334, %332, %cst_64 {dimension_numbers = #tpu.dot_dimension_numbers<[1], [0], [0], [1], [0, 0, 1, 1], [], []>} : vector<48x32xbf16>, vector<32x32xbf16>, vector<48x32xf32> -> vector<48x32xf32>
    %336 = vector.shape_cast %335 : vector<48x32xf32> to vector<3x16x32xf32>
    %337 = vector.extract_strided_slice %331 {offsets = [0, 0, 0], sizes = [1, 16, 32], strides = [1, 1, 1]} : vector<3x16x32xf32> to vector<1x16x32xf32>
    %338 = vector.shape_cast %337 : vector<1x16x32xf32> to vector<16x32xf32>
    %339 = vector.extract_strided_slice %336 {offsets = [0, 0, 0], sizes = [1, 16, 32], strides = [1, 1, 1]} : vector<3x16x32xf32> to vector<1x16x32xf32>
    %340 = vector.shape_cast %339 : vector<1x16x32xf32> to vector<16x32xf32>
    %341 = arith.mulf %338, %340 : vector<16x32xf32>
    %342 = vector.extract_strided_slice %331 {offsets = [1, 0, 0], sizes = [1, 16, 32], strides = [1, 1, 1]} : vector<3x16x32xf32> to vector<1x16x32xf32>
    %343 = vector.shape_cast %342 : vector<1x16x32xf32> to vector<16x32xf32>
    %344 = vector.extract_strided_slice %336 {offsets = [1, 0, 0], sizes = [1, 16, 32], strides = [1, 1, 1]} : vector<3x16x32xf32> to vector<1x16x32xf32>
    %345 = vector.shape_cast %344 : vector<1x16x32xf32> to vector<16x32xf32>
    %346 = arith.mulf %343, %345 : vector<16x32xf32>
    %347 = arith.addf %341, %346 : vector<16x32xf32>
    %348 = vector.extract_strided_slice %331 {offsets = [2, 0, 0], sizes = [1, 16, 32], strides = [1, 1, 1]} : vector<3x16x32xf32> to vector<1x16x32xf32>
    %349 = vector.shape_cast %348 : vector<1x16x32xf32> to vector<16x32xf32>
    %350 = vector.extract_strided_slice %336 {offsets = [2, 0, 0], sizes = [1, 16, 32], strides = [1, 1, 1]} : vector<3x16x32xf32> to vector<1x16x32xf32>
    %351 = vector.shape_cast %350 : vector<1x16x32xf32> to vector<16x32xf32>
    %352 = arith.mulf %349, %351 : vector<16x32xf32>
    %353 = arith.addf %347, %352 : vector<16x32xf32>
    %354 = vector.extract_strided_slice %336 {offsets = [0, 0, 0], sizes = [1, 16, 32], strides = [1, 1, 1]} : vector<3x16x32xf32> to vector<1x16x32xf32>
    %355 = vector.shape_cast %354 : vector<1x16x32xf32> to vector<16x32xf32>
    %356 = vector.extract_strided_slice %336 {offsets = [0, 0, 0], sizes = [1, 16, 32], strides = [1, 1, 1]} : vector<3x16x32xf32> to vector<1x16x32xf32>
    %357 = vector.shape_cast %356 : vector<1x16x32xf32> to vector<16x32xf32>
    %358 = arith.mulf %355, %357 : vector<16x32xf32>
    %359 = vector.extract_strided_slice %336 {offsets = [1, 0, 0], sizes = [1, 16, 32], strides = [1, 1, 1]} : vector<3x16x32xf32> to vector<1x16x32xf32>
    %360 = vector.shape_cast %359 : vector<1x16x32xf32> to vector<16x32xf32>
    %361 = vector.extract_strided_slice %336 {offsets = [1, 0, 0], sizes = [1, 16, 32], strides = [1, 1, 1]} : vector<3x16x32xf32> to vector<1x16x32xf32>
    %362 = vector.shape_cast %361 : vector<1x16x32xf32> to vector<16x32xf32>
    %363 = arith.mulf %360, %362 : vector<16x32xf32>
    %364 = arith.addf %358, %363 : vector<16x32xf32>
    %365 = vector.extract_strided_slice %336 {offsets = [2, 0, 0], sizes = [1, 16, 32], strides = [1, 1, 1]} : vector<3x16x32xf32> to vector<1x16x32xf32>
    %366 = vector.shape_cast %365 : vector<1x16x32xf32> to vector<16x32xf32>
    %367 = vector.extract_strided_slice %336 {offsets = [2, 0, 0], sizes = [1, 16, 32], strides = [1, 1, 1]} : vector<3x16x32xf32> to vector<1x16x32xf32>
    %368 = vector.shape_cast %367 : vector<1x16x32xf32> to vector<16x32xf32>
    %369 = arith.mulf %366, %368 : vector<16x32xf32>
    %370 = arith.addf %364, %369 : vector<16x32xf32>
    %cst_65 = arith.constant 9.99999997E-7 : f32
    %371 = vector.broadcast %cst_65 : f32 to vector<16x32xf32>
    %372 = arith.addf %370, %371 : vector<16x32xf32>
    %373 = tpu.reciprocal %372 {approx = true} : vector<16x32xf32> -> vector<16x32xf32>
    %374 = arith.mulf %353, %373 : vector<16x32xf32>
    %375 = vector.shape_cast %353 : vector<16x32xf32> to vector<1x16x32xf32>
    %cst_66 = arith.constant 0.000000e+00 : f32
    %376 = vector.broadcast %cst_66 : f32 to vector<1x16x32xf32>
    %377 = arith.cmpf oge, %375, %376 : vector<1x16x32xf32>
    %378 = vector.shape_cast %374 : vector<16x32xf32> to vector<1x16x32xf32>
    %379 = vector.broadcast %378 : vector<1x16x32xf32> to vector<3x16x32xf32>
    %380 = arith.mulf %379, %336 : vector<3x16x32xf32>
    %381 = arith.subf %331, %380 : vector<3x16x32xf32>
    %382 = vector.shape_cast %377 : vector<1x16x32xi1> to vector<1x16x32xi1>
    %383 = vector.broadcast %382 : vector<1x16x32xi1> to vector<3x16x32xi1>
    %384 = arith.select %383, %331, %381 : vector<3x16x32xi1>, vector<3x16x32xf32>
    %cst_67 = arith.constant 2.000000e-01 : f32
    %385 = vector.broadcast %cst_67 : f32 to vector<3x16x32xf32>
    %386 = arith.mulf %385, %331 : vector<3x16x32xf32>
    %cst_68 = arith.constant 8.000000e-01 : f32
    %387 = vector.broadcast %cst_68 : f32 to vector<3x16x32xf32>
    %388 = arith.mulf %387, %384 : vector<3x16x32xf32>
    %389 = arith.addf %386, %388 : vector<3x16x32xf32>
    %cst_69 = arith.constant 0.000000e+00 : f32
    %390 = vector.broadcast %cst_69 : f32 to vector<16x32xf32>
    %391 = arith.cmpf oge, %312, %390 : vector<16x32xf32>
    %cst_70 = arith.constant 0.00999999977 : f32
    %392 = vector.broadcast %cst_70 : f32 to vector<16x32xf32>
    %393 = arith.mulf %392, %312 : vector<16x32xf32>
    %394 = arith.select %391, %312, %393 : vector<16x32xi1>, vector<16x32xf32>
    %c824 = arith.constant 824 : index
    %c0_71 = arith.constant 0 : index
    %395 = vector.load %arg4[%c824, %c0_71] : memref<856x64xbf16, #tpu.memory_space<vmem>>, vector<32x32xbf16>
    %396 = vector.shape_cast %389 : vector<3x16x32xf32> to vector<48x32xf32>
    %397 = arith.truncf %396 : vector<48x32xf32> to vector<48x32xbf16>
    %cst_72 = arith.constant dense<0.000000e+00> : vector<48x32xf32>
    %398 = tpu.matmul %397, %395, %cst_72 {dimension_numbers = #tpu.dot_dimension_numbers<[1], [0], [0], [1], [0, 0, 1, 1], [], []>} : vector<48x32xbf16>, vector<32x32xbf16>, vector<48x32xf32> -> vector<48x32xf32>
    %399 = vector.shape_cast %398 : vector<48x32xf32> to vector<3x16x32xf32>
    %400 = vector.extract_strided_slice %399 {offsets = [0, 0, 0], sizes = [1, 16, 32], strides = [1, 1, 1]} : vector<3x16x32xf32> to vector<1x16x32xf32>
    %401 = vector.shape_cast %400 : vector<1x16x32xf32> to vector<16x32xf32>
    %402 = vector.extract_strided_slice %399 {offsets = [0, 0, 0], sizes = [1, 16, 32], strides = [1, 1, 1]} : vector<3x16x32xf32> to vector<1x16x32xf32>
    %403 = vector.shape_cast %402 : vector<1x16x32xf32> to vector<16x32xf32>
    %404 = arith.mulf %401, %403 : vector<16x32xf32>
    %405 = vector.extract_strided_slice %399 {offsets = [1, 0, 0], sizes = [1, 16, 32], strides = [1, 1, 1]} : vector<3x16x32xf32> to vector<1x16x32xf32>
    %406 = vector.shape_cast %405 : vector<1x16x32xf32> to vector<16x32xf32>
    %407 = vector.extract_strided_slice %399 {offsets = [1, 0, 0], sizes = [1, 16, 32], strides = [1, 1, 1]} : vector<3x16x32xf32> to vector<1x16x32xf32>
    %408 = vector.shape_cast %407 : vector<1x16x32xf32> to vector<16x32xf32>
    %409 = arith.mulf %406, %408 : vector<16x32xf32>
    %410 = arith.addf %404, %409 : vector<16x32xf32>
    %411 = vector.extract_strided_slice %399 {offsets = [2, 0, 0], sizes = [1, 16, 32], strides = [1, 1, 1]} : vector<3x16x32xf32> to vector<1x16x32xf32>
    %412 = vector.shape_cast %411 : vector<1x16x32xf32> to vector<16x32xf32>
    %413 = vector.extract_strided_slice %399 {offsets = [2, 0, 0], sizes = [1, 16, 32], strides = [1, 1, 1]} : vector<3x16x32xf32> to vector<1x16x32xf32>
    %414 = vector.shape_cast %413 : vector<1x16x32xf32> to vector<16x32xf32>
    %415 = arith.mulf %412, %414 : vector<16x32xf32>
    %416 = arith.addf %410, %415 : vector<16x32xf32>
    %417 = math.sqrt %416 : vector<16x32xf32>
    %c4 = arith.constant 4 : index
    %c0_73 = arith.constant 0 : index
    %418 = vector.load %arg5[%c4, %c0_73] : memref<8x64xf32, #tpu.memory_space<vmem>>, vector<1x32xf32>
    %419 = vector.broadcast %418 : vector<1x32xf32> to vector<16x32xf32>
    %420 = arith.mulf %417, %419 : vector<16x32xf32>
    %cst_74 = arith.constant dense<0.000000e+00> : vector<16xf32>
    %421 = vector.multi_reduction <add>, %420, %cst_74 [1] : vector<16x32xf32> to vector<16xf32>
    %422 = vector.shape_cast %421 : vector<16xf32> to vector<16x1xf32>
    %c5 = arith.constant 5 : index
    %c0_75 = arith.constant 0 : index
    %423 = vector.load %arg5[%c5, %c0_75] : memref<8x64xf32, #tpu.memory_space<vmem>>, vector<1x32xf32>
    %424 = vector.broadcast %423 : vector<1x32xf32> to vector<16x32xf32>
    %425 = arith.mulf %394, %424 : vector<16x32xf32>
    %cst_76 = arith.constant dense<0.000000e+00> : vector<16xf32>
    %426 = vector.multi_reduction <add>, %425, %cst_76 [1] : vector<16x32xf32> to vector<16xf32>
    %427 = vector.shape_cast %426 : vector<16xf32> to vector<16x1xf32>
    %428 = arith.addf %422, %427 : vector<16x1xf32>
    %429 = tpu.transpose %428, [1, 0] : vector<16x1xf32> -> vector<1x16xf32>
    %430 = vector.shape_cast %429 : vector<1x16xf32> to vector<1x1x16xf32>
    %c0_77 = arith.constant 0 : index
    %c0_78 = arith.constant 0 : index
    %c0_79 = arith.constant 0 : index
    %431 = vector.load %arg6[%c0_77, %c0_78, %c0_79] : memref<1x1x16xf32, #tpu.memory_space<vmem>>, vector<1x1x16xf32>
    tpu.vector_store %arg6[%c0_77, %c0_78, %c0_79], %430 {strides = array<i32>} : memref<1x1x16xf32, #tpu.memory_space<vmem>>, vector<1x1x16xf32>,
    return
  }
  func.func @transform_0(%arg0: i32) -> (i32, i32) {
    %c0_i32 = arith.constant 0 : i32
    %c0_i32_0 = arith.constant 0 : i32
    return %arg0, %c0_i32 : i32, i32
  }
  func.func @transform_1(%arg0: i32) -> (i32, i32, i32) {
    %c0_i32 = arith.constant 0 : i32
    %c0_i32_0 = arith.constant 0 : i32
    %c0_i32_1 = arith.constant 0 : i32
    return %c0_i32, %arg0, %c0_i32_0 : i32, i32, i32
  }
  func.func @transform_2(%arg0: i32) -> (i32, i32) {
    %c0_i32 = arith.constant 0 : i32
    %c0_i32_0 = arith.constant 0 : i32
    return %arg0, %c0_i32 : i32, i32
  }
  func.func @transform_3(%arg0: i32) -> (i32, i32) {
    %c0_i32 = arith.constant 0 : i32
    %c0_i32_0 = arith.constant 0 : i32
    %c0_i32_1 = arith.constant 0 : i32
    return %c0_i32, %c0_i32_0 : i32, i32
  }
  func.func @transform_4(%arg0: i32) -> (i32, i32) {
    %c0_i32 = arith.constant 0 : i32
    %c0_i32_0 = arith.constant 0 : i32
    %c0_i32_1 = arith.constant 0 : i32
    return %c0_i32, %c0_i32_0 : i32, i32
  }
  func.func @transform_5(%arg0: i32) -> (i32, i32, i32) {
    %c0_i32 = arith.constant 0 : i32
    %c0_i32_0 = arith.constant 0 : i32
    %c0_i32_1 = arith.constant 0 : i32
    return %arg0, %c0_i32, %c0_i32_0 : i32, i32, i32
  }
}

</mosaic_0001>

<llo_original>
// kernel: tpu_custom_call.1
$region0: #{tpu_custom_call.1}
  #allocation0 [shape = 'u32[]', space=smem, size = 0x4, offset = 0x4, fixed_abs, tag = 'smem constant byte address 0x4 - core index']
  #allocation1 [shape = 'u32[144,128]{1,0:T(1,128)}', space=vmem, size = 0x12000, scoped, tag = 'internal scratch']
  %s0 = inlined_call_operand.vmem [shape: bf16[16,16], index: 0, kind: input, shape index: {}]
  %s1 = inlined_call_operand.vmem [shape: bf16[3,16,8], index: 1, kind: input, shape index: {}]
  %s2 = inlined_call_operand.vmem [shape: f32[16,3], index: 2, kind: input, shape index: {}]
  %s3 = inlined_call_operand.vmem [shape: bf16[856,64], index: 3, kind: input, shape index: {}]
  %s4 = inlined_call_operand.vmem [shape: f32[8,64], index: 4, kind: input, shape index: {}]
  %s5 = inlined_call_operand.hbm [shape: f32[1,1,16], index: 5, kind: output, shape index: {}]
  %s6 = sld [smem:[#allocation0]]
  $region30: #{tpu_custom_call.1} parent=0
    _
  %s8 = ssub.s32 1, %s6
  %s9 = scalar_select 0, %s8, %s6
  $region1: #{tpu_custom_call.1} parent=0
    #allocation2 [shape = 'u8[512]{0}', space=vmem, size = 0x400, scoped, tag = 'output window, operand 0, single buffered']
    #allocation3 [shape = 's32[1]{0}', space=sflag, size = 0x4, scoped, tag = 'scoped memory for tpu_custom_call.1']
    %10 = vsyncpa [#allocation3], 0
    // Predicated region
    $region2: #{tpu_custom_call.1} parent=1 // pred_check
      _
    $region3: #{tpu_custom_call.1} parent=1 // pred_check_branch
      %12 = sbr.rel (0) target = $region5
    $region4: #{tpu_custom_call.1} parent=1 // pred_region
      _
    $region5: #{tpu_custom_call.1} parent=1 // pred_fallthru
      _
    // Predicated region
    $region6: #{tpu_custom_call.1} parent=1 // pred_check
      _
    $region7: #{tpu_custom_call.1} parent=1 // pred_check_branch
      %14 = sbr.rel (0) target = $region9
    $region8: #{tpu_custom_call.1} parent=1 // pred_region
      _
    $region9: #{tpu_custom_call.1} parent=1 // pred_fallthru
      _
    // Predicated region
    $region10: #{tpu_custom_call.1} parent=1 // pred_check
      _
    $region11: #{tpu_custom_call.1} parent=1 // pred_check_branch
      %16 = sbr.rel (0) target = $region13
    $region12: #{tpu_custom_call.1} parent=1 // pred_region
      _
    $region13: #{tpu_custom_call.1} parent=1 // pred_fallthru
      _
    // Predicated region
    $region14: #{tpu_custom_call.1} parent=1 // pred_check
      _
    $region15: #{tpu_custom_call.1} parent=1 // pred_check_branch
      %18 = sbr.rel (0) target = $region17
    $region16: #{tpu_custom_call.1} parent=1 // pred_region
      _
    $region17: #{tpu_custom_call.1} parent=1 // pred_fallthru
      _
    // Predicated region
    $region18: #{tpu_custom_call.1} parent=1 // pred_check
      _
    $region19: #{tpu_custom_call.1} parent=1 // pred_check_branch
      %20 = sbr.rel (0) target = $region21
    $region20: #{tpu_custom_call.1} parent=1 // pred_region
      _
    $region21: #{tpu_custom_call.1} parent=1 // pred_fallthru
      _
    %v22 = vld [vmem:[%s0] sm:$0xf]
    %v23 = vld [vmem:[%s0 + $0x4] sm:$0xf]
    %v24 = vld [vmem:[%s1] sm:$0xf]
    %v25 = vld [vmem:[%s1 + $0x4] sm:$0xf]
    %v26 = vld [vmem:[%s1 + $0x8] sm:$0xf]
    %v27 = vld [vmem:[%s1 + $0xc] sm:$0xf]
    %v28 = vld [vmem:[%s1 + $0x10] sm:$0xf]
    %v29 = vld [vmem:[%s1 + $0x14] sm:$0xf]
    %v30 = vld [vmem:[%s2] sm:$0xff]
    %v31 = vld [vmem:[%s2 + $0x8] sm:$0xff]
    %v32 = vld [vmem:[%s3] sm:$0xf]
    %v33 = vld [vmem:[%s3 + $0x4] sm:$0xf]
    %v34 = vld [vmem:[%s3 + $0x8] sm:$0xf]
    %v35 = vld [vmem:[%s3 + $0xc] sm:$0xf]
    %v36 = vld [vmem:[%s3 + $0x10] sm:$0xf]
    %v37 = vld [vmem:[%s3 + $0x14] sm:$0xf]
    %v38 = vld [vmem:[%s3 + $0x18] sm:$0xf]
    %v39 = vld [vmem:[%s3 + $0x1c] sm:$0xf]
    %v40 = vld [vmem:[%s3 + $0x20] sm:$0xf]
    %v41 = vld [vmem:[%s3 + $0x24] sm:$0xf]
    %v42 = vld [vmem:[%s3 + $0x28] sm:$0xf]
    %v43 = vld [vmem:[%s3 + $0x2c] sm:$0xf]
    %v44 = vld [vmem:[%s3 + $0x30] sm:$0xf]
    %v45 = vld [vmem:[%s3 + $0x34] sm:$0xf]
    %v46 = vld [vmem:[%s3 + $0x38] sm:$0xf]
    %v47 = vld [vmem:[%s4] sm:$0x1]
    %v54 = vunpack.c.l.b16 %v24
    %v55 = vunpack.c.l.b16 %v25
    %v56 = vunpack.c.l.b16 %v26
    %v57 = vunpack.c.l.b16 %v27
    %v58 = vunpack.c.l.b16 %v28
    %v59 = vunpack.c.l.b16 %v29
    %v60 = vpack.c.b16 %v55, %v54
    %v61 = vpack.c.b16 %v57, %v56
    %v62 = vpack.c.b16 %v59, %v58
    %vm63 = vcmask 64512
    %v65 = vsel %vm63, %v60, 0
    %v68 = vsel %vm63, %v61, 0
    %v71 = vsel %vm63, %v62, 0
    %vm73 = vcmask 1043456
    %v75 = vsel %vm73, %v32, 0
    %77 = vmatprep.subr.bf16.mxu0 0
    %78 = vmatpush1.bf16.msra.mxu0 0
    %79 = vmatprep.subr.bf16.mxu0 0
    %80 = vmatpush1.bf16.msra.mxu0 0
    %81 = vmatprep.subr.bf16.mxu0 0
    %82 = vmatpush1.bf16.msra.mxu0 0
    %83 = vmatprep.subr.bf16.mxu0 0
    %84 = vmatpush1.bf16.msra.mxu0 0
    %85 = vmatprep.subr.bf16.mxu0 0
    %86 = vmatpush1.bf16.msra.mxu0 0
    %87 = vmatprep.subr.bf16.mxu0 0
    %88 = vmatpush1.bf16.msra.mxu0 0
    %89 = vmatprep.subr.bf16.mxu0 0
    %90 = vmatpush1.bf16.msra.mxu0 0
    %91 = vmatprep.subr.bf16.mxu0 0
    %92 = vmatpush1.bf16.msra.mxu0 %v75
    %93 = vmatprep.subr.bf16.mxu0 0
    %94 = vmatpush2.bf16.msra.mxu0 0
    %95 = vmatprep.subr.bf16.mxu0 0
    %96 = vmatpush2.bf16.msra.mxu0 0
    %97 = vmatprep.subr.bf16.mxu0 0
    %98 = vmatpush2.bf16.msra.mxu0 0
    %99 = vmatprep.subr.bf16.mxu0 0
    %100 = vmatpush2.bf16.msra.mxu0 0
    %101 = vmatprep.subr.bf16.mxu0 0
    %102 = vmatpush2.bf16.msra.mxu0 0
    %103 = vmatprep.subr.bf16.mxu0 0
    %104 = vmatpush2.bf16.msra.mxu0 0
    %105 = vmatprep.subr.bf16.mxu0 0
    %106 = vmatpush2.bf16.msra.mxu0 0
    %107 = vmatprep.subr.bf16.mxu0 0
    %108 = vmatpush2.bf16.msra.mxu0 0
    %109 = vmatprep.mubr.bf16.mxu0 0
    %110 = vmatmul.mubr.bf16.gmra.mxu0 %v65
    %v111 = vpop.f32.mrf.mxu0
    %v112 = vadd.f32 0.0, %v111
    %v113 = vpop.f32.mrf.mxu0
    %v114 = vpop.f32.mrf.mxu0
    %v115 = vadd.f32 0.0, %v114
    %v116 = vpop.f32.mrf.mxu0
    %117 = vmatprep.mubr.bf16.mxu0 0
    %118 = vmatmul.mubr.bf16.gmra.mxu0 %v68
    %v119 = vpop.f32.mrf.mxu0
    %v120 = vadd.f32 0.0, %v119
    %v121 = vpop.f32.mrf.mxu0
    %v122 = vpop.f32.mrf.mxu0
    %v123 = vadd.f32 0.0, %v122
    %v124 = vpop.f32.mrf.mxu0
    %125 = vmatprep.mubr.bf16.mxu0 0
    %126 = vmatmul.mubr.bf16.gmra.mxu0 %v71
    %v127 = vpop.f32.mrf.mxu0
    %v128 = vadd.f32 0.0, %v127
    %v129 = vpop.f32.mrf.mxu0
    %v130 = vpop.f32.mrf.mxu0
    %v131 = vadd.f32 0.0, %v130
    %v132 = vpop.f32.mrf.mxu0
    %133 = vdwg.mxu0
    %v134 = vmul.f32 %v112, %v112
    %v135 = vmul.f32 %v115, %v115
    %v136 = vmul.f32 %v120, %v120
    %v137 = vmul.f32 %v123, %v123
    %v138 = vadd.f32 %v134, %v136
    %v139 = vadd.f32 %v135, %v137
    %v140 = vmul.f32 %v128, %v128
    %v141 = vmul.f32 %v131, %v131
    %v142 = vadd.f32 %v138, %v140
    %v143 = vadd.f32 %v139, %v141
    %v144 = vrsqrt.pop %v142
    %v145 = vmul.f32 %v142, %v144
    %vm146 = vcmp.eq.f32.partialorder %v142, inf
    %v147 = vsel %vm146, %v142, %v145
    %vm148 = vcmp.eq.f32.partialorder %v142, 0.0
    %v149 = vand.u32 %v142, 2147483648
    %v150 = vsel %vm148, %v149, %v147
    %v151 = vrsqrt.pop %v143
    %v152 = vmul.f32 %v143, %v151
    %vm153 = vcmp.eq.f32.partialorder %v143, inf
    %v154 = vsel %vm153, %v143, %v152
    %vm155 = vcmp.eq.f32.partialorder %v143, 0.0
    %v156 = vand.u32 %v143, 2147483648
    %v157 = vsel %vm155, %v156, %v154
    %v158 = vunpack.c.l.bf16 %v22
    %v159 = vunpack.c.l.bf16 %v23
    %162 = vrot.lane.b32.xlu0 %v158, 32
    %v163 = vpop.permute.xlu0 %162
    %164 = vrot.lane.b32.xlu0 %v159, 32
    %v165 = vpop.permute.xlu0 %164
    %vm168 = vcmask 261120
    %v169 = vsel %vm168, %v150, %v163
    %v170 = vsel %vm168, %v157, %v165
    %v171 = vpack.c.bf16 %v170, %v169
    %v178 = vunpack.c.l.b16 %v33
    %v179 = vunpack.c.l.b16 %v34
    %v180 = vunpack.c.l.b16 %v35
    %v181 = vunpack.c.l.b16 %v36
    %v182 = vunpack.c.l.b16 %v37
    %v183 = vunpack.c.l.b16 %v38
    %v184 = vpack.c.b16 %v179, %v178
    %v185 = vpack.c.b16 %v181, %v180
    %v186 = vpack.c.b16 %v183, %v182
    %vm190 = vcmask 392192
    %v192 = vsel %vm190, %v171, 0
    %194 = vmatprep.subr.bf16.mxu0 0
    %195 = vmatpush1.bf16.msra.mxu0 0
    %196 = vmatprep.subr.bf16.mxu0 0
    %197 = vmatpush1.bf16.msra.mxu0 0
    %198 = vmatprep.subr.bf16.mxu0 0
    %199 = vmatpush1.bf16.msra.mxu0 0
    %200 = vmatprep.subr.bf16.mxu0 0
    %201 = vmatpush1.bf16.msra.mxu0 0
    %202 = vmatprep.subr.bf16.mxu0 0
    %203 = vmatpush1.bf16.msra.mxu0 0
    %204 = vmatprep.subr.bf16.mxu0 0
    %205 = vmatpush1.bf16.msra.mxu0 %v186
    %206 = vmatprep.subr.bf16.mxu0 0
    %207 = vmatpush1.bf16.msra.mxu0 %v185
    %208 = vmatprep.subr.bf16.mxu0 0
    %209 = vmatpush1.bf16.msra.mxu0 %v184
    %210 = vmatprep.subr.bf16.mxu0 0
    %211 = vmatpush2.bf16.msra.mxu0 0
    %212 = vmatprep.subr.bf16.mxu0 0
    %213 = vmatpush2.bf16.msra.mxu0 0
    %214 = vmatprep.subr.bf16.mxu0 0
    %215 = vmatpush2.bf16.msra.mxu0 0
    %216 = vmatprep.subr.bf16.mxu0 0
    %217 = vmatpush2.bf16.msra.mxu0 0
    %218 = vmatprep.subr.bf16.mxu0 0
    %219 = vmatpush2.bf16.msra.mxu0 0
    %220 = vmatprep.subr.bf16.mxu0 0
    %221 = vmatpush2.bf16.msra.mxu0 0
    %222 = vmatprep.subr.bf16.mxu0 0
    %223 = vmatpush2.bf16.msra.mxu0 0
    %224 = vmatprep.subr.bf16.mxu0 0
    %225 = vmatpush2.bf16.msra.mxu0 0
    %226 = vmatprep.mubr.bf16.mxu0 0
    %227 = vmatmul.mubr.bf16.gmra.mxu0 %v192
    %v228 = vpop.f32.mrf.mxu0
    %v229 = vadd.f32 0.0, %v228
    %v230 = vpop.f32.mrf.mxu0
    %v231 = vpop.f32.mrf.mxu0
    %v232 = vadd.f32 0.0, %v231
    %v233 = vpop.f32.mrf.mxu0
    %234 = vdwg.mxu0
    %v235 = vpack.c.bf16 %v115, %v112
    %v236 = vpack.c.bf16 %v123, %v120
    %v237 = vpack.c.bf16 %v131, %v128
    %v242 = vunpack.c.l.b16 %v39
    %v243 = vunpack.c.l.b16 %v40
    %v244 = vunpack.c.l.b16 %v41
    %v245 = vunpack.c.l.b16 %v42
    %v246 = vpack.c.b16 %v243, %v242
    %v247 = vpack.c.b16 %v245, %v244
    %v251 = vsel %vm168, %v235, 0
    %v254 = vsel %vm168, %v236, 0
    %v257 = vsel %vm168, %v237, 0
    %259 = vmatprep.subr.bf16.mxu0 0
    %260 = vmatpush1.bf16.msra.mxu0 0
    %261 = vmatprep.subr.bf16.mxu0 0
    %262 = vmatpush1.bf16.msra.mxu0 0
    %263 = vmatprep.subr.bf16.mxu0 0
    %264 = vmatpush1.bf16.msra.mxu0 0
    %265 = vmatprep.subr.bf16.mxu0 0
    %266 = vmatpush1.bf16.msra.mxu0 0
    %267 = vmatprep.subr.bf16.mxu0 0
    %268 = vmatpush1.bf16.msra.mxu0 0
    %269 = vmatprep.subr.bf16.mxu0 0
    %270 = vmatpush1.bf16.msra.mxu0 0
    %271 = vmatprep.subr.bf16.mxu0 0
    %272 = vmatpush1.bf16.msra.mxu0 %v247
    %273 = vmatprep.subr.bf16.mxu0 0
    %274 = vmatpush1.bf16.msra.mxu0 %v246
    %275 = vmatprep.subr.bf16.mxu0 0
    %276 = vmatpush2.bf16.msra.mxu0 0
    %277 = vmatprep.subr.bf16.mxu0 0
    %278 = vmatpush2.bf16.msra.mxu0 0
    %279 = vmatprep.subr.bf16.mxu0 0
    %280 = vmatpush2.bf16.msra.mxu0 0
    %281 = vmatprep.subr.bf16.mxu0 0
    %282 = vmatpush2.bf16.msra.mxu0 0
    %283 = vmatprep.subr.bf16.mxu0 0
    %284 = vmatpush2.bf16.msra.mxu0 0
    %285 = vmatprep.subr.bf16.mxu0 0
    %286 = vmatpush2.bf16.msra.mxu0 0
    %287 = vmatprep.subr.bf16.mxu0 0
    %288 = vmatpush2.bf16.msra.mxu0 0
    %289 = vmatprep.subr.bf16.mxu0 0
    %290 = vmatpush2.bf16.msra.mxu0 0
    %291 = vmatprep.mubr.bf16.mxu0 0
    %292 = vmatmul.mubr.bf16.gmra.mxu0 %v251
    %v293 = vpop.f32.mrf.mxu0
    %v294 = vadd.f32 0.0, %v293
    %v295 = vpop.f32.mrf.mxu0
    %v296 = vpop.f32.mrf.mxu0
    %v297 = vadd.f32 0.0, %v296
    %v298 = vpop.f32.mrf.mxu0
    %299 = vmatprep.mubr.bf16.mxu0 0
    %300 = vmatmul.mubr.bf16.gmra.mxu0 %v254
    %v301 = vpop.f32.mrf.mxu0
    %v302 = vadd.f32 0.0, %v301
    %v303 = vpop.f32.mrf.mxu0
    %v304 = vpop.f32.mrf.mxu0
    %v305 = vadd.f32 0.0, %v304
    %v306 = vpop.f32.mrf.mxu0
    %307 = vmatprep.mubr.bf16.mxu0 0
    %308 = vmatmul.mubr.bf16.gmra.mxu0 %v257
    %v309 = vpop.f32.mrf.mxu0
    %v310 = vadd.f32 0.0, %v309
    %v311 = vpop.f32.mrf.mxu0
    %v312 = vpop.f32.mrf.mxu0
    %v313 = vadd.f32 0.0, %v312
    %v314 = vpop.f32.mrf.mxu0
    %315 = vdwg.mxu0
    %v316 = vpack.c.bf16 %v232, %v229
    %v317 = vlaneseq
    %v318 = vshrl.u32 %v317, 7
    %v319 = vsub.s32 0, %v318
    %v320 = vrot.slane %v47, %v319
    %v325 = vunpack.c.l.b16 %v43
    %v326 = vunpack.c.l.b16 %v44
    %v327 = vunpack.c.l.b16 %v45
    %v328 = vunpack.c.l.b16 %v46
    %v329 = vpack.c.b16 %v326, %v325
    %v330 = vpack.c.b16 %v328, %v327
    %v334 = vsel %vm168, %v316, 0
    %336 = vmatprep.subr.bf16.mxu0 0
    %337 = vmatpush1.bf16.msra.mxu0 0
    %338 = vmatprep.subr.bf16.mxu0 0
    %339 = vmatpush1.bf16.msra.mxu0 0
    %340 = vmatprep.subr.bf16.mxu0 0
    %341 = vmatpush1.bf16.msra.mxu0 0
    %342 = vmatprep.subr.bf16.mxu0 0
    %343 = vmatpush1.bf16.msra.mxu0 0
    %344 = vmatprep.subr.bf16.mxu0 0
    %345 = vmatpush1.bf16.msra.mxu0 0
    %346 = vmatprep.subr.bf16.mxu0 0
    %347 = vmatpush1.bf16.msra.mxu0 0
    %348 = vmatprep.subr.bf16.mxu0 0
    %349 = vmatpush1.bf16.msra.mxu0 %v330
    %350 = vmatprep.subr.bf16.mxu0 0
    %351 = vmatpush1.bf16.msra.mxu0 %v329
    %352 = vmatprep.subr.bf16.mxu0 0
    %353 = vmatpush2.bf16.msra.mxu0 0
    %354 = vmatprep.subr.bf16.mxu0 0
    %355 = vmatpush2.bf16.msra.mxu0 0
    %356 = vmatprep.subr.bf16.mxu0 0
    %357 = vmatpush2.bf16.msra.mxu0 0
    %358 = vmatprep.subr.bf16.mxu0 0
    %359 = vmatpush2.bf16.msra.mxu0 0
    %360 = vmatprep.subr.bf16.mxu0 0
    %361 = vmatpush2.bf16.msra.mxu0 0
    %362 = vmatprep.subr.bf16.mxu0 0
    %363 = vmatpush2.bf16.msra.mxu0 0
    %364 = vmatprep.subr.bf16.mxu0 0
    %365 = vmatpush2.bf16.msra.mxu0 0
    %366 = vmatprep.subr.bf16.mxu0 0
    %367 = vmatpush2.bf16.msra.mxu0 0
    %368 = vmatprep.mubr.bf16.mxu0 0
    %369 = vmatmul.mubr.bf16.gmra.mxu0 %v334
    %v370 = vpop.f32.mrf.mxu0
    %v371 = vadd.f32 %v320, %v370
    %v372 = vpop.f32.mrf.mxu0
    %v373 = vpop.f32.mrf.mxu0
    %v374 = vadd.f32 %v320, %v373
    %v375 = vpop.f32.mrf.mxu0
    %376 = vdwg.mxu0
    %v377 = vxor.u32 %v371, 2147483648
    %v378 = vxor.u32 %v374, 2147483648
    %v379 = vmul.f32 %v377, 1.442695
    %v380 = vpow.pop %v379
    %v381 = vmul.f32 %v378, 1.442695
    %v382 = vpow.pop %v381
    %v383 = vadd.f32 %v380, 1.0
    %v384 = vadd.f32 %v382, 1.0
    %v385 = vrcp.pop %v383
    %v386 = vmul.f32 1.0, %v385
    %v387 = vrcp.pop %v384
    %v388 = vmul.f32 1.0, %v387
    %v389 = vmul.f32 %v294, %v386
    %v390 = vmul.f32 %v297, %v388
    %v391 = vmul.f32 %v302, %v386
    %v392 = vmul.f32 %v305, %v388
    %v393 = vmul.f32 %v310, %v386
    %v394 = vmul.f32 %v313, %v388
    %v395 = vld [vmem:[%s3 + $0x3c] sm:$0xf]
    %v396 = vld [vmem:[%s3 + $0x40] sm:$0xf]
    %v397 = vld [vmem:[%s3 + $0x44] sm:$0xf]
    %v398 = vld [vmem:[%s3 + $0x48] sm:$0xf]
    %v399 = vpack.c.bf16 %v390, %v389
    %v400 = vpack.c.bf16 %v392, %v391
    %v401 = vpack.c.bf16 %v394, %v393
    %v406 = vunpack.c.l.b16 %v395
    %v407 = vunpack.c.l.b16 %v396
    %v408 = vunpack.c.l.b16 %v397
    %v409 = vunpack.c.l.b16 %v398
    %v410 = vpack.c.b16 %v407, %v406
    %v411 = vpack.c.b16 %v409, %v408
    %v415 = vsel %vm168, %v399, 0
    %v418 = vsel %vm168, %v400, 0
    %v421 = vsel %vm168, %v401, 0
    %423 = vmatprep.subr.bf16.mxu0 0
    %424 = vmatpush1.bf16.msra.mxu0 0
    %425 = vmatprep.subr.bf16.mxu0 0
    %426 = vmatpush1.bf16.msra.mxu0 0
    %427 = vmatprep.subr.bf16.mxu0 0
    %428 = vmatpush1.bf16.msra.mxu0 0
    %429 = vmatprep.subr.bf16.mxu0 0
    %430 = vmatpush1.bf16.msra.mxu0 0
    %431 = vmatprep.subr.bf16.mxu0 0
    %432 = vmatpush1.bf16.msra.mxu0 0
    %433 = vmatprep.subr.bf16.mxu0 0
    %434 = vmatpush1.bf16.msra.mxu0 0
    %435 = vmatprep.subr.bf16.mxu0 0
    %436 = vmatpush1.bf16.msra.mxu0 %v411
    %437 = vmatprep.subr.bf16.mxu0 0
    %438 = vmatpush1.bf16.msra.mxu0 %v410
    %439 = vmatprep.subr.bf16.mxu0 0
    %440 = vmatpush2.bf16.msra.mxu0 0
    %441 = vmatprep.subr.bf16.mxu0 0
    %442 = vmatpush2.bf16.msra.mxu0 0
    %443 = vmatprep.subr.bf16.mxu0 0
    %444 = vmatpush2.bf16.msra.mxu0 0
    %445 = vmatprep.subr.bf16.mxu0 0
    %446 = vmatpush2.bf16.msra.mxu0 0
    %447 = vmatprep.subr.bf16.mxu0 0
    %448 = vmatpush2.bf16.msra.mxu0 0
    %449 = vmatprep.subr.bf16.mxu0 0
    %450 = vmatpush2.bf16.msra.mxu0 0
    %451 = vmatprep.subr.bf16.mxu0 0
    %452 = vmatpush2.bf16.msra.mxu0 0
    %453 = vmatprep.subr.bf16.mxu0 0
    %454 = vmatpush2.bf16.msra.mxu0 0
    %455 = vmatprep.mubr.bf16.mxu0 0
    %456 = vmatmul.mubr.bf16.gmra.mxu0 %v415
    %v457 = vpop.f32.mrf.mxu0
    %v458 = vadd.f32 0.0, %v457
    %v459 = vpop.f32.mrf.mxu0
    %v460 = vpop.f32.mrf.mxu0
    %v461 = vadd.f32 0.0, %v460
    %v462 = vpop.f32.mrf.mxu0
    %463 = vmatprep.mubr.bf16.mxu0 0
    %464 = vmatmul.mubr.bf16.gmra.mxu0 %v418
    %v465 = vpop.f32.mrf.mxu0
    %v466 = vadd.f32 0.0, %v465
    %v467 = vpop.f32.mrf.mxu0
    %v468 = vpop.f32.mrf.mxu0
    %v469 = vadd.f32 0.0, %v468
    %v470 = vpop.f32.mrf.mxu0
    %471 = vmatprep.mubr.bf16.mxu0 0
    %472 = vmatmul.mubr.bf16.gmra.mxu0 %v421
    %v473 = vpop.f32.mrf.mxu0
    %v474 = vadd.f32 0.0, %v473
    %v475 = vpop.f32.mrf.mxu0
    %v476 = vpop.f32.mrf.mxu0
    %v477 = vadd.f32 0.0, %v476
    %v478 = vpop.f32.mrf.mxu0
    %479 = vdwg.mxu0
    %v480 = vmul.f32 %v389, %v458
    %v481 = vmul.f32 %v390, %v461
    %v482 = vmul.f32 %v391, %v466
    %v483 = vmul.f32 %v392, %v469
    %v484 = vadd.f32 %v480, %v482
    %v485 = vadd.f32 %v481, %v483
    %v486 = vmul.f32 %v393, %v474
    %v487 = vmul.f32 %v394, %v477
    %v488 = vadd.f32 %v484, %v486
    %v489 = vadd.f32 %v485, %v487
    %v490 = vmul.f32 %v458, %v458
    %v491 = vmul.f32 %v461, %v461
    %v492 = vmul.f32 %v466, %v466
    %v493 = vmul.f32 %v469, %v469
    %v494 = vadd.f32 %v490, %v492
    %v495 = vadd.f32 %v491, %v493
    %v496 = vmul.f32 %v474, %v474
    %v497 = vmul.f32 %v477, %v477
    %v498 = vadd.f32 %v494, %v496
    %v499 = vadd.f32 %v495, %v497
    %v500 = vadd.f32 %v498, 1e-06
    %v501 = vadd.f32 %v499, 1e-06
    %v502 = vrcp.pop %v500
    %v503 = vrcp.pop %v501
    %v504 = vmul.f32 %v488, %v502
    %v505 = vmul.f32 %v489, %v503
    %vm506 = vcmp.ge.f32.partialorder %v488, 0.0
    %vm507 = vcmp.ge.f32.partialorder %v489, 0.0
    %v508 = vmul.f32 %v504, %v458
    %v509 = vmul.f32 %v505, %v461
    %v510 = vmul.f32 %v504, %v466
    %v511 = vmul.f32 %v505, %v469
    %v512 = vmul.f32 %v504, %v474
    %v513 = vmul.f32 %v505, %v477
    %v514 = vsub.f32 %v389, %v508
    %v515 = vsub.f32 %v390, %v509
    %v516 = vsub.f32 %v391, %v510
    %v517 = vsub.f32 %v392, %v511
    %v518 = vsub.f32 %v393, %v512
    %v519 = vsub.f32 %v394, %v513
    %v520 = vsel %vm506, 1, 0
    %v521 = vsel %vm507, 1, 0
    %vm522 = vcmp.eq.s32.totalorder %v520, 1
    %vm523 = vcmp.eq.s32.totalorder %v521, 1
    %v524 = vsel %vm522, %v389, %v514
    %v525 = vsel %vm523, %v390, %v515
    %v526 = vsel %vm522, %v391, %v516
    %v527 = vsel %vm523, %v392, %v517
    %v528 = vsel %vm522, %v393, %v518
    %v529 = vsel %vm523, %v394, %v519
    %v530 = vmul.f32 %v389, 0.2
    %v531 = vmul.f32 %v390, 0.2
    %v532 = vmul.f32 %v391, 0.2
    %v533 = vmul.f32 %v392, 0.2
    %v534 = vmul.f32 %v393, 0.2
    %v535 = vmul.f32 %v394, 0.2
    %v536 = vmul.f32 %v524, 0.8
    %v537 = vmul.f32 %v525, 0.8
    %v538 = vmul.f32 %v526, 0.8
    %v539 = vmul.f32 %v527, 0.8
    %v540 = vmul.f32 %v528, 0.8
    %v541 = vmul.f32 %v529, 0.8
    %v542 = vadd.f32 %v530, %v536
    %v543 = vadd.f32 %v531, %v537
    %v544 = vadd.f32 %v532, %v538
    %v545 = vadd.f32 %v533, %v539
    %v546 = vadd.f32 %v534, %v540
    %v547 = vadd.f32 %v535, %v541
    %vm548 = vcmp.ge.f32.partialorder %v229, 0.0
    %vm549 = vcmp.ge.f32.partialorder %v232, 0.0
    %v550 = vmul.f32 %v229, 0.01
    %v551 = vmul.f32 %v232, 0.01
    %v552 = vsel %vm548, %v229, %v550
    %v553 = vsel %vm549, %v232, %v551
    %v554 = vld [vmem:[%s3 + $0x4c] sm:$0xf]
    %v555 = vld [vmem:[%s3 + $0x50] sm:$0xf]
    %v556 = vld [vmem:[%s3 + $0x54] sm:$0xf]
    %v557 = vld [vmem:[%s3 + $0x58] sm:$0xf]
    %v558 = vld [vmem:[%s3 + $0x5c] sm:$0xf]
    %v559 = vld [vmem:[%s3 + $0x60] sm:$0xf]
    %v560 = vld [vmem:[%s3 + $0x64] sm:$0xf]
    %v561 = vld [vmem:[%s3 + $0x68] sm:$0xf]
    %v562 = vld [vmem:[%s3 + $0x6c] sm:$0xf]
    %v563 = vld [vmem:[%s3 + $0x70] sm:$0xf]
    %v564 = vld [vmem:[%s3 + $0x74] sm:$0xf]
    %v565 = vld [vmem:[%s3 + $0x78] sm:$0xf]
    %v566 = vld [vmem:[%s3 + $0x7c] sm:$0xf]
    %v567 = vld [vmem:[%s3 + $0x80] sm:$0xf]
    %v568 = vld [vmem:[%s3 + $0x84] sm:$0xf]
    %v569 = vld [vmem:[%s3 + $0x88] sm:$0xf]
    %v570 = vld [vmem:[%s3 + $0x8c] sm:$0xf]
    %v571 = vld [vmem:[%s3 + $0x90] sm:$0xf]
    %v572 = vld [vmem:[%s3 + $0x94] sm:$0xf]
    %v573 = vld [vmem:[%s3 + $0x98] sm:$0xf]
    %v574 = vld [vmem:[%s4 + $0x1] sm:$0x1]
    %v575 = vpack.c.bf16 %v543, %v542
    %v576 = vpack.c.bf16 %v545, %v544
    %v577 = vpack.c.bf16 %v547, %v546
    %v582 = vunpack.c.l.b16 %v554
    %v583 = vunpack.c.l.b16 %v555
    %v584 = vunpack.c.l.b16 %v556
    %v585 = vunpack.c.l.b16 %v557
    %v586 = vpack.c.b16 %v583, %v582
    %v587 = vpack.c.b16 %v585, %v584
    %v591 = vsel %vm168, %v575, 0
    %v594 = vsel %vm168, %v576, 0
    %v597 = vsel %vm168, %v577, 0
    %599 = vmatprep.subr.bf16.mxu0 0
    %600 = vmatpush1.bf16.msra.mxu0 0
    %601 = vmatprep.subr.bf16.mxu0 0
    %602 = vmatpush1.bf16.msra.mxu0 0
    %603 = vmatprep.subr.bf16.mxu0 0
    %604 = vmatpush1.bf16.msra.mxu0 0
    %605 = vmatprep.subr.bf16.mxu0 0
    %606 = vmatpush1.bf16.msra.mxu0 0
    %607 = vmatprep.subr.bf16.mxu0 0
    %608 = vmatpush1.bf16.msra.mxu0 0
    %609 = vmatprep.subr.bf16.mxu0 0
    %610 = vmatpush1.bf16.msra.mxu0 0
    %611 = vmatprep.subr.bf16.mxu0 0
    %612 = vmatpush1.bf16.msra.mxu0 %v587
    %613 = vmatprep.subr.bf16.mxu0 0
    %614 = vmatpush1.bf16.msra.mxu0 %v586
    %615 = vmatprep.subr.bf16.mxu0 0
    %616 = vmatpush2.bf16.msra.mxu0 0
    %617 = vmatprep.subr.bf16.mxu0 0
    %618 = vmatpush2.bf16.msra.mxu0 0
    %619 = vmatprep.subr.bf16.mxu0 0
    %620 = vmatpush2.bf16.msra.mxu0 0
    %621 = vmatprep.subr.bf16.mxu0 0
    %622 = vmatpush2.bf16.msra.mxu0 0
    %623 = vmatprep.subr.bf16.mxu0 0
    %624 = vmatpush2.bf16.msra.mxu0 0
    %625 = vmatprep.subr.bf16.mxu0 0
    %626 = vmatpush2.bf16.msra.mxu0 0
    %627 = vmatprep.subr.bf16.mxu0 0
    %628 = vmatpush2.bf16.msra.mxu0 0
    %629 = vmatprep.subr.bf16.mxu0 0
    %630 = vmatpush2.bf16.msra.mxu0 0
    %631 = vmatprep.mubr.bf16.mxu0 0
    %632 = vmatmul.mubr.bf16.gmra.mxu0 %v591
    %v633 = vpop.f32.mrf.mxu0
    %v634 = vadd.f32 0.0, %v633
    %v635 = vpop.f32.mrf.mxu0
    %v636 = vpop.f32.mrf.mxu0
    %v637 = vadd.f32 0.0, %v636
    %v638 = vpop.f32.mrf.mxu0
    %639 = vmatprep.mubr.bf16.mxu0 0
    %640 = vmatmul.mubr.bf16.gmra.mxu0 %v594
    %v641 = vpop.f32.mrf.mxu0
    %v642 = vadd.f32 0.0, %v641
    %v643 = vpop.f32.mrf.mxu0
    %v644 = vpop.f32.mrf.mxu0
    %v645 = vadd.f32 0.0, %v644
    %v646 = vpop.f32.mrf.mxu0
    %647 = vmatprep.mubr.bf16.mxu0 0
    %648 = vmatmul.mubr.bf16.gmra.mxu0 %v597
    %v649 = vpop.f32.mrf.mxu0
    %v650 = vadd.f32 0.0, %v649
    %v651 = vpop.f32.mrf.mxu0
    %v652 = vpop.f32.mrf.mxu0
    %v653 = vadd.f32 0.0, %v652
    %v654 = vpop.f32.mrf.mxu0
    %655 = vdwg.mxu0
    %v656 = vmul.f32 %v634, %v634
    %v657 = vmul.f32 %v637, %v637
    %v658 = vmul.f32 %v642, %v642
    %v659 = vmul.f32 %v645, %v645
    %v660 = vadd.f32 %v656, %v658
    %v661 = vadd.f32 %v657, %v659
    %v662 = vmul.f32 %v650, %v650
    %v663 = vmul.f32 %v653, %v653
    %v664 = vadd.f32 %v660, %v662
    %v665 = vadd.f32 %v661, %v663
    %v666 = vrsqrt.pop %v664
    %v667 = vmul.f32 %v664, %v666
    %vm668 = vcmp.eq.f32.partialorder %v664, inf
    %v669 = vsel %vm668, %v664, %v667
    %vm670 = vcmp.eq.f32.partialorder %v664, 0.0
    %v671 = vand.u32 %v664, 2147483648
    %v672 = vsel %vm670, %v671, %v669
    %v673 = vrsqrt.pop %v665
    %v674 = vmul.f32 %v665, %v673
    %vm675 = vcmp.eq.f32.partialorder %v665, inf
    %v676 = vsel %vm675, %v665, %v674
    %vm677 = vcmp.eq.f32.partialorder %v665, 0.0
    %v678 = vand.u32 %v665, 2147483648
    %v679 = vsel %vm677, %v678, %v676
    %682 = vrot.lane.b32.xlu0 %v552, 32
    %v683 = vpop.permute.xlu0 %682
    %684 = vrot.lane.b32.xlu0 %v553, 32
    %v685 = vpop.permute.xlu0 %684
    %v688 = vsel %vm168, %v672, %v683
    %v689 = vsel %vm168, %v679, %v685
    %v690 = vpack.c.bf16 %v689, %v688
    %v699 = vunpack.c.l.b16 %v558
    %v700 = vunpack.c.l.b16 %v559
    %v701 = vunpack.c.l.b16 %v560
    %v702 = vunpack.c.l.b16 %v561
    %v703 = vunpack.c.l.b16 %v562
    %v704 = vunpack.c.l.b16 %v563
    %v705 = vunpack.c.l.b16 %v564
    %v706 = vunpack.c.l.b16 %v565
    %v707 = vpack.c.b16 %v700, %v699
    %v708 = vpack.c.b16 %v702, %v701
    %v709 = vpack.c.b16 %v704, %v703
    %v710 = vpack.c.b16 %v706, %v705
    %vm715 = vcmask 523264
    %v717 = vsel %vm715, %v690, 0
    %719 = vmatprep.subr.bf16.mxu0 0
    %720 = vmatpush1.bf16.msra.mxu0 0
    %721 = vmatprep.subr.bf16.mxu0 0
    %722 = vmatpush1.bf16.msra.mxu0 0
    %723 = vmatprep.subr.bf16.mxu0 0
    %724 = vmatpush1.bf16.msra.mxu0 0
    %725 = vmatprep.subr.bf16.mxu0 0
    %726 = vmatpush1.bf16.msra.mxu0 0
    %727 = vmatprep.subr.bf16.mxu0 0
    %728 = vmatpush1.bf16.msra.mxu0 %v710
    %729 = vmatprep.subr.bf16.mxu0 0
    %730 = vmatpush1.bf16.msra.mxu0 %v709
    %731 = vmatprep.subr.bf16.mxu0 0
    %732 = vmatpush1.bf16.msra.mxu0 %v708
    %733 = vmatprep.subr.bf16.mxu0 0
    %734 = vmatpush1.bf16.msra.mxu0 %v707
    %735 = vmatprep.subr.bf16.mxu0 0
    %736 = vmatpush2.bf16.msra.mxu0 0
    %737 = vmatprep.subr.bf16.mxu0 0
    %738 = vmatpush2.bf16.msra.mxu0 0
    %739 = vmatprep.subr.bf16.mxu0 0
    %740 = vmatpush2.bf16.msra.mxu0 0
    %741 = vmatprep.subr.bf16.mxu0 0
    %742 = vmatpush2.bf16.msra.mxu0 0
    %743 = vmatprep.subr.bf16.mxu0 0
    %744 = vmatpush2.bf16.msra.mxu0 0
    %745 = vmatprep.subr.bf16.mxu0 0
    %746 = vmatpush2.bf16.msra.mxu0 0
    %747 = vmatprep.subr.bf16.mxu0 0
    %748 = vmatpush2.bf16.msra.mxu0 0
    %749 = vmatprep.subr.bf16.mxu0 0
    %750 = vmatpush2.bf16.msra.mxu0 0
    %751 = vmatprep.mubr.bf16.mxu0 0
    %752 = vmatmul.mubr.bf16.gmra.mxu0 %v717
    %v753 = vpop.f32.mrf.mxu0
    %v754 = vadd.f32 0.0, %v753
    %v755 = vpop.f32.mrf.mxu0
    %v756 = vpop.f32.mrf.mxu0
    %v757 = vadd.f32 0.0, %v756
    %v758 = vpop.f32.mrf.mxu0
    %759 = vdwg.mxu0
    %v760 = vpack.c.bf16 %v637, %v634
    %v761 = vpack.c.bf16 %v645, %v642
    %v762 = vpack.c.bf16 %v653, %v650
    %v767 = vunpack.c.l.b16 %v566
    %v768 = vunpack.c.l.b16 %v567
    %v769 = vunpack.c.l.b16 %v568
    %v770 = vunpack.c.l.b16 %v569
    %v771 = vpack.c.b16 %v768, %v767
    %v772 = vpack.c.b16 %v770, %v769
    %v776 = vsel %vm168, %v760, 0
    %v779 = vsel %vm168, %v761, 0
    %v782 = vsel %vm168, %v762, 0
    %784 = vmatprep.subr.bf16.mxu0 0
    %785 = vmatpush1.bf16.msra.mxu0 0
    %786 = vmatprep.subr.bf16.mxu0 0
    %787 = vmatpush1.bf16.msra.mxu0 0
    %788 = vmatprep.subr.bf16.mxu0 0
    %789 = vmatpush1.bf16.msra.mxu0 0
    %790 = vmatprep.subr.bf16.mxu0 0
    %791 = vmatpush1.bf16.msra.mxu0 0
    %792 = vmatprep.subr.bf16.mxu0 0
    %793 = vmatpush1.bf16.msra.mxu0 0
    %794 = vmatprep.subr.bf16.mxu0 0
    %795 = vmatpush1.bf16.msra.mxu0 0
    %796 = vmatprep.subr.bf16.mxu0 0
    %797 = vmatpush1.bf16.msra.mxu0 %v772
    %798 = vmatprep.subr.bf16.mxu0 0
    %799 = vmatpush1.bf16.msra.mxu0 %v771
    %800 = vmatprep.subr.bf16.mxu0 0
    %801 = vmatpush2.bf16.msra.mxu0 0
    %802 = vmatprep.subr.bf16.mxu0 0
    %803 = vmatpush2.bf16.msra.mxu0 0
    %804 = vmatprep.subr.bf16.mxu0 0
    %805 = vmatpush2.bf16.msra.mxu0 0
    %806 = vmatprep.subr.bf16.mxu0 0
    %807 = vmatpush2.bf16.msra.mxu0 0
    %808 = vmatprep.subr.bf16.mxu0 0
    %809 = vmatpush2.bf16.msra.mxu0 0
    %810 = vmatprep.subr.bf16.mxu0 0
    %811 = vmatpush2.bf16.msra.mxu0 0
    %812 = vmatprep.subr.bf16.mxu0 0
    %813 = vmatpush2.bf16.msra.mxu0 0
    %814 = vmatprep.subr.bf16.mxu0 0
    %815 = vmatpush2.bf16.msra.mxu0 0
    %816 = vmatprep.mubr.bf16.mxu0 0
    %817 = vmatmul.mubr.bf16.gmra.mxu0 %v776
    %v818 = vpop.f32.mrf.mxu0
    %v819 = vadd.f32 0.0, %v818
    %v820 = vpop.f32.mrf.mxu0
    %v821 = vpop.f32.mrf.mxu0
    %v822 = vadd.f32 0.0, %v821
    %v823 = vpop.f32.mrf.mxu0
    %824 = vmatprep.mubr.bf16.mxu0 0
    %825 = vmatmul.mubr.bf16.gmra.mxu0 %v779
    %v826 = vpop.f32.mrf.mxu0
    %v827 = vadd.f32 0.0, %v826
    %v828 = vpop.f32.mrf.mxu0
    %v829 = vpop.f32.mrf.mxu0
    %v830 = vadd.f32 0.0, %v829
    %v831 = vpop.f32.mrf.mxu0
    %832 = vmatprep.mubr.bf16.mxu0 0
    %833 = vmatmul.mubr.bf16.gmra.mxu0 %v782
    %v834 = vpop.f32.mrf.mxu0
    %v835 = vadd.f32 0.0, %v834
    %v836 = vpop.f32.mrf.mxu0
    %v837 = vpop.f32.mrf.mxu0
    %v838 = vadd.f32 0.0, %v837
    %v839 = vpop.f32.mrf.mxu0
    %840 = vdwg.mxu0
    %v841 = vpack.c.bf16 %v757, %v754
    %v842 = vlaneseq
    %v843 = vshrl.u32 %v842, 7
    %v844 = vsub.s32 0, %v843
    %v845 = vrot.slane %v574, %v844
    %v850 = vunpack.c.l.b16 %v570
    %v851 = vunpack.c.l.b16 %v571
    %v852 = vunpack.c.l.b16 %v572
    %v853 = vunpack.c.l.b16 %v573
    %v854 = vpack.c.b16 %v851, %v850
    %v855 = vpack.c.b16 %v853, %v852
    %v859 = vsel %vm168, %v841, 0
    %861 = vmatprep.subr.bf16.mxu0 0
    %862 = vmatpush1.bf16.msra.mxu0 0
    %863 = vmatprep.subr.bf16.mxu0 0
    %864 = vmatpush1.bf16.msra.mxu0 0
    %865 = vmatprep.subr.bf16.mxu0 0
    %866 = vmatpush1.bf16.msra.mxu0 0
    %867 = vmatprep.subr.bf16.mxu0 0
    %868 = vmatpush1.bf16.msra.mxu0 0
    %869 = vmatprep.subr.bf16.mxu0 0
    %870 = vmatpush1.bf16.msra.mxu0 0
    %871 = vmatprep.subr.bf16.mxu0 0
    %872 = vmatpush1.bf16.msra.mxu0 0
    %873 = vmatprep.subr.bf16.mxu0 0
    %874 = vmatpush1.bf16.msra.mxu0 %v855
    %875 = vmatprep.subr.bf16.mxu0 0
    %876 = vmatpush1.bf16.msra.mxu0 %v854
    %877 = vmatprep.subr.bf16.mxu0 0
    %878 = vmatpush2.bf16.msra.mxu0 0
    %879 = vmatprep.subr.bf16.mxu0 0
    %880 = vmatpush2.bf16.msra.mxu0 0
    %881 = vmatprep.subr.bf16.mxu0 0
    %882 = vmatpush2.bf16.msra.mxu0 0
    %883 = vmatprep.subr.bf16.mxu0 0
    %884 = vmatpush2.bf16.msra.mxu0 0
    %885 = vmatprep.subr.bf16.mxu0 0
    %886 = vmatpush2.bf16.msra.mxu0 0
    %887 = vmatprep.subr.bf16.mxu0 0
    %888 = vmatpush2.bf16.msra.mxu0 0
    %889 = vmatprep.subr.bf16.mxu0 0
    %890 = vmatpush2.bf16.msra.mxu0 0
    %891 = vmatprep.subr.bf16.mxu0 0
    %892 = vmatpush2.bf16.msra.mxu0 0
    %893 = vmatprep.mubr.bf16.mxu0 0
    %894 = vmatmul.mubr.bf16.gmra.mxu0 %v859
    %v895 = vpop.f32.mrf.mxu0
    %v896 = vadd.f32 %v845, %v895
    %v897 = vpop.f32.mrf.mxu0
    %v898 = vpop.f32.mrf.mxu0
    %v899 = vadd.f32 %v845, %v898
    %v900 = vpop.f32.mrf.mxu0
    %901 = vdwg.mxu0
    %v902 = vxor.u32 %v896, 2147483648
    %v903 = vxor.u32 %v899, 2147483648
    %v904 = vmul.f32 %v902, 1.442695
    %v905 = vpow.pop %v904
    %v906 = vmul.f32 %v903, 1.442695
    %v907 = vpow.pop %v906
    %v908 = vadd.f32 %v905, 1.0
    %v909 = vadd.f32 %v907, 1.0
    %v910 = vrcp.pop %v908
    %v911 = vmul.f32 1.0, %v910
    %v912 = vrcp.pop %v909
    %v913 = vmul.f32 1.0, %v912
    %v914 = vmul.f32 %v819, %v911
    %v915 = vmul.f32 %v822, %v913
    %v916 = vmul.f32 %v827, %v911
    %v917 = vmul.f32 %v830, %v913
    %v918 = vmul.f32 %v835, %v911
    %v919 = vmul.f32 %v838, %v913
    %v920 = vld [vmem:[%s3 + $0x9c] sm:$0xf]
    %v921 = vld [vmem:[%s3 + $0xa0] sm:$0xf]
    %v922 = vld [vmem:[%s3 + $0xa4] sm:$0xf]
    %v923 = vld [vmem:[%s3 + $0xa8] sm:$0xf]
    %v924 = vld [vmem:[%s3 + $0xac] sm:$0xf]
    %v925 = vld [vmem:[%s3 + $0xb0] sm:$0xf]
    %v926 = vld [vmem:[%s3 + $0xb4] sm:$0xf]
    %v927 = vld [vmem:[%s3 + $0xb8] sm:$0xf]
    %v928 = vld [vmem:[%s3 + $0xbc] sm:$0xf]
    %v929 = vld [vmem:[%s3 + $0xc0] sm:$0xf]
    %v930 = vld [vmem:[%s3 + $0xc4] sm:$0xf]
    %v931 = vld [vmem:[%s3 + $0xc8] sm:$0xf]
    %v932 = vld [vmem:[%s3 + $0xcc] sm:$0xf]
    %v933 = vld [vmem:[%s3 + $0xd0] sm:$0xf]
    %v934 = vld [vmem:[%s3 + $0xd4] sm:$0xf]
    %v935 = vld [vmem:[%s3 + $0xd8] sm:$0xf]
    %v936 = vld [vmem:[%s3 + $0xdc] sm:$0xf]
    %v937 = vld [vmem:[%s3 + $0xe0] sm:$0xf]
    %v938 = vld [vmem:[%s3 + $0xe4] sm:$0xf]
    %v939 = vld [vmem:[%s3 + $0xe8] sm:$0xf]
    %v940 = vld [vmem:[%s3 + $0xec] sm:$0xf]
    %v941 = vld [vmem:[%s3 + $0xf0] sm:$0xf]
    %v942 = vld [vmem:[%s3 + $0xf4] sm:$0xf]
    %v943 = vld [vmem:[%s3 + $0xf8] sm:$0xf]
    %v944 = vld [vmem:[%s3 + $0xfc] sm:$0xf]
    %v945 = vld [vmem:[%s3 + $0x100] sm:$0xf]
    %v946 = vld [vmem:[%s3 + $0x104] sm:$0xf]
    %v947 = vld [vmem:[%s3 + $0x108] sm:$0xf]
    %v948 = vld [vmem:[%s4 + $0x2] sm:$0x1]
    %v949 = vpack.c.bf16 %v915, %v914
    %v950 = vpack.c.bf16 %v917, %v916
    %v951 = vpack.c.bf16 %v919, %v918
    %v956 = vunpack.c.l.b16 %v920
    %v957 = vunpack.c.l.b16 %v921
    %v958 = vunpack.c.l.b16 %v922
    %v959 = vunpack.c.l.b16 %v923
    %v960 = vpack.c.b16 %v957, %v956
    %v961 = vpack.c.b16 %v959, %v958
    %v965 = vsel %vm168, %v949, 0
    %v968 = vsel %vm168, %v950, 0
    %v971 = vsel %vm168, %v951, 0
    %973 = vmatprep.subr.bf16.mxu0 0
    %974 = vmatpush1.bf16.msra.mxu0 0
    %975 = vmatprep.subr.bf16.mxu0 0
    %976 = vmatpush1.bf16.msra.mxu0 0
    %977 = vmatprep.subr.bf16.mxu0 0
    %978 = vmatpush1.bf16.msra.mxu0 0
    %979 = vmatprep.subr.bf16.mxu0 0
    %980 = vmatpush1.bf16.msra.mxu0 0
    %981 = vmatprep.subr.bf16.mxu0 0
    %982 = vmatpush1.bf16.msra.mxu0 0
    %983 = vmatprep.subr.bf16.mxu0 0
    %984 = vmatpush1.bf16.msra.mxu0 0
    %985 = vmatprep.subr.bf16.mxu0 0
    %986 = vmatpush1.bf16.msra.mxu0 %v961
    %987 = vmatprep.subr.bf16.mxu0 0
    %988 = vmatpush1.bf16.msra.mxu0 %v960
    %989 = vmatprep.subr.bf16.mxu0 0
    %990 = vmatpush2.bf16.msra.mxu0 0
    %991 = vmatprep.subr.bf16.mxu0 0
    %992 = vmatpush2.bf16.msra.mxu0 0
    %993 = vmatprep.subr.bf16.mxu0 0
    %994 = vmatpush2.bf16.msra.mxu0 0
    %995 = vmatprep.subr.bf16.mxu0 0
    %996 = vmatpush2.bf16.msra.mxu0 0
    %997 = vmatprep.subr.bf16.mxu0 0
    %998 = vmatpush2.bf16.msra.mxu0 0
    %999 = vmatprep.subr.bf16.mxu0 0
    %1000 = vmatpush2.bf16.msra.mxu0 0
    %1001 = vmatprep.subr.bf16.mxu0 0
    %1002 = vmatpush2.bf16.msra.mxu0 0
    %1003 = vmatprep.subr.bf16.mxu0 0
    %1004 = vmatpush2.bf16.msra.mxu0 0
    %1005 = vmatprep.mubr.bf16.mxu0 0
    %1006 = vmatmul.mubr.bf16.gmra.mxu0 %v965
    %v1007 = vpop.f32.mrf.mxu0
    %v1008 = vadd.f32 0.0, %v1007
    %v1009 = vpop.f32.mrf.mxu0
    %v1010 = vpop.f32.mrf.mxu0
    %v1011 = vadd.f32 0.0, %v1010
    %v1012 = vpop.f32.mrf.mxu0
    %1013 = vmatprep.mubr.bf16.mxu0 0
    %1014 = vmatmul.mubr.bf16.gmra.mxu0 %v968
    %v1015 = vpop.f32.mrf.mxu0
    %v1016 = vadd.f32 0.0, %v1015
    %v1017 = vpop.f32.mrf.mxu0
    %v1018 = vpop.f32.mrf.mxu0
    %v1019 = vadd.f32 0.0, %v1018
    %v1020 = vpop.f32.mrf.mxu0
    %1021 = vmatprep.mubr.bf16.mxu0 0
    %1022 = vmatmul.mubr.bf16.gmra.mxu0 %v971
    %v1023 = vpop.f32.mrf.mxu0
    %v1024 = vadd.f32 0.0, %v1023
    %v1025 = vpop.f32.mrf.mxu0
    %v1026 = vpop.f32.mrf.mxu0
    %v1027 = vadd.f32 0.0, %v1026
    %v1028 = vpop.f32.mrf.mxu0
    %1029 = vdwg.mxu0
    %v1030 = vmul.f32 %v1008, %v1008
    %v1031 = vmul.f32 %v1011, %v1011
    %v1032 = vmul.f32 %v1016, %v1016
    %v1033 = vmul.f32 %v1019, %v1019
    %v1034 = vadd.f32 %v1030, %v1032
    %v1035 = vadd.f32 %v1031, %v1033
    %v1036 = vmul.f32 %v1024, %v1024
    %v1037 = vmul.f32 %v1027, %v1027
    %v1038 = vadd.f32 %v1034, %v1036
    %v1039 = vadd.f32 %v1035, %v1037
    %v1040 = vrsqrt.pop %v1038
    %v1041 = vmul.f32 %v1038, %v1040
    %vm1042 = vcmp.eq.f32.partialorder %v1038, inf
    %v1043 = vsel %vm1042, %v1038, %v1041
    %vm1044 = vcmp.eq.f32.partialorder %v1038, 0.0
    %v1045 = vand.u32 %v1038, 2147483648
    %v1046 = vsel %vm1044, %v1045, %v1043
    %v1047 = vrsqrt.pop %v1039
    %v1048 = vmul.f32 %v1039, %v1047
    %vm1049 = vcmp.eq.f32.partialorder %v1039, inf
    %v1050 = vsel %vm1049, %v1039, %v1048
    %vm1051 = vcmp.eq.f32.partialorder %v1039, 0.0
    %v1052 = vand.u32 %v1039, 2147483648
    %v1053 = vsel %vm1051, %v1052, %v1050
    %1056 = vrot.lane.b32.xlu0 %v754, 64
    %v1057 = vpop.permute.xlu0 %1056
    %1058 = vrot.lane.b32.xlu0 %v757, 64
    %v1059 = vpop.permute.xlu0 %1058
    %v1062 = vsel %vm715, %v1046, %v1057
    %v1063 = vsel %vm715, %v1053, %v1059
    %v1064 = vpack.c.bf16 %v1063, %v1062
    %v1077 = vunpack.c.l.b16 %v924
    %v1078 = vunpack.c.l.b16 %v925
    %v1079 = vunpack.c.l.b16 %v926
    %v1080 = vunpack.c.l.b16 %v927
    %v1081 = vunpack.c.l.b16 %v928
    %v1082 = vunpack.c.l.b16 %v929
    %v1083 = vunpack.c.l.b16 %v930
    %v1084 = vunpack.c.l.b16 %v931
    %v1085 = vunpack.c.l.b16 %v932
    %v1086 = vunpack.c.l.b16 %v933
    %v1087 = vunpack.c.l.b16 %v934
    %v1088 = vunpack.c.l.b16 %v935
    %v1089 = vpack.c.b16 %v1078, %v1077
    %v1090 = vpack.c.b16 %v1080, %v1079
    %v1091 = vpack.c.b16 %v1082, %v1081
    %v1092 = vpack.c.b16 %v1084, %v1083
    %v1093 = vpack.c.b16 %v1086, %v1085
    %v1094 = vpack.c.b16 %v1088, %v1087
    %vm1101 = vcmask 785408
    %v1103 = vsel %vm1101, %v1064, 0
    %1105 = vmatprep.subr.bf16.mxu0 0
    %1106 = vmatpush1.bf16.msra.mxu0 0
    %1107 = vmatprep.subr.bf16.mxu0 0
    %1108 = vmatpush1.bf16.msra.mxu0 0
    %1109 = vmatprep.subr.bf16.mxu0 0
    %1110 = vmatpush1.bf16.msra.mxu0 %v1094
    %1111 = vmatprep.subr.bf16.mxu0 0
    %1112 = vmatpush1.bf16.msra.mxu0 %v1093
    %1113 = vmatprep.subr.bf16.mxu0 0
    %1114 = vmatpush1.bf16.msra.mxu0 %v1092
    %1115 = vmatprep.subr.bf16.mxu0 0
    %1116 = vmatpush1.bf16.msra.mxu0 %v1091
    %1117 = vmatprep.subr.bf16.mxu0 0
    %1118 = vmatpush1.bf16.msra.mxu0 %v1090
    %1119 = vmatprep.subr.bf16.mxu0 0
    %1120 = vmatpush1.bf16.msra.mxu0 %v1089
    %1121 = vmatprep.subr.bf16.mxu0 0
    %1122 = vmatpush2.bf16.msra.mxu0 0
    %1123 = vmatprep.subr.bf16.mxu0 0
    %1124 = vmatpush2.bf16.msra.mxu0 0
    %1125 = vmatprep.subr.bf16.mxu0 0
    %1126 = vmatpush2.bf16.msra.mxu0 0
    %1127 = vmatprep.subr.bf16.mxu0 0
    %1128 = vmatpush2.bf16.msra.mxu0 0
    %1129 = vmatprep.subr.bf16.mxu0 0
    %1130 = vmatpush2.bf16.msra.mxu0 0
    %1131 = vmatprep.subr.bf16.mxu0 0
    %1132 = vmatpush2.bf16.msra.mxu0 0
    %1133 = vmatprep.subr.bf16.mxu0 0
    %1134 = vmatpush2.bf16.msra.mxu0 0
    %1135 = vmatprep.subr.bf16.mxu0 0
    %1136 = vmatpush2.bf16.msra.mxu0 0
    %1137 = vmatprep.mubr.bf16.mxu0 0
    %1138 = vmatmul.mubr.bf16.gmra.mxu0 %v1103
    %v1139 = vpop.f32.mrf.mxu0
    %v1140 = vadd.f32 0.0, %v1139
    %v1141 = vpop.f32.mrf.mxu0
    %v1142 = vpop.f32.mrf.mxu0
    %v1143 = vadd.f32 0.0, %v1142
    %v1144 = vpop.f32.mrf.mxu0
    %1145 = vdwg.mxu0
    %v1146 = vpack.c.bf16 %v1011, %v1008
    %v1147 = vpack.c.bf16 %v1019, %v1016
    %v1148 = vpack.c.bf16 %v1027, %v1024
    %v1157 = vunpack.c.l.b16 %v936
    %v1158 = vunpack.c.l.b16 %v937
    %v1159 = vunpack.c.l.b16 %v938
    %v1160 = vunpack.c.l.b16 %v939
    %v1161 = vunpack.c.l.b16 %v940
    %v1162 = vunpack.c.l.b16 %v941
    %v1163 = vunpack.c.l.b16 %v942
    %v1164 = vunpack.c.l.b16 %v943
    %v1165 = vpack.c.b16 %v1158, %v1157
    %v1166 = vpack.c.b16 %v1160, %v1159
    %v1167 = vpack.c.b16 %v1162, %v1161
    %v1168 = vpack.c.b16 %v1164, %v1163
    %v1174 = vsel %vm715, %v1146, 0
    %v1177 = vsel %vm715, %v1147, 0
    %v1180 = vsel %vm715, %v1148, 0
    %1182 = vmatprep.subr.bf16.mxu0 0
    %1183 = vmatpush1.bf16.msra.mxu0 0
    %1184 = vmatprep.subr.bf16.mxu0 0
    %1185 = vmatpush1.bf16.msra.mxu0 0
    %1186 = vmatprep.subr.bf16.mxu0 0
    %1187 = vmatpush1.bf16.msra.mxu0 0
    %1188 = vmatprep.subr.bf16.mxu0 0
    %1189 = vmatpush1.bf16.msra.mxu0 0
    %1190 = vmatprep.subr.bf16.mxu0 0
    %1191 = vmatpush1.bf16.msra.mxu0 %v1168
    %1192 = vmatprep.subr.bf16.mxu0 0
    %1193 = vmatpush1.bf16.msra.mxu0 %v1167
    %1194 = vmatprep.subr.bf16.mxu0 0
    %1195 = vmatpush1.bf16.msra.mxu0 %v1166
    %1196 = vmatprep.subr.bf16.mxu0 0
    %1197 = vmatpush1.bf16.msra.mxu0 %v1165
    %1198 = vmatprep.subr.bf16.mxu0 0
    %1199 = vmatpush2.bf16.msra.mxu0 0
    %1200 = vmatprep.subr.bf16.mxu0 0
    %1201 = vmatpush2.bf16.msra.mxu0 0
    %1202 = vmatprep.subr.bf16.mxu0 0
    %1203 = vmatpush2.bf16.msra.mxu0 0
    %1204 = vmatprep.subr.bf16.mxu0 0
    %1205 = vmatpush2.bf16.msra.mxu0 0
    %1206 = vmatprep.subr.bf16.mxu0 0
    %1207 = vmatpush2.bf16.msra.mxu0 0
    %1208 = vmatprep.subr.bf16.mxu0 0
    %1209 = vmatpush2.bf16.msra.mxu0 0
    %1210 = vmatprep.subr.bf16.mxu0 0
    %1211 = vmatpush2.bf16.msra.mxu0 0
    %1212 = vmatprep.subr.bf16.mxu0 0
    %1213 = vmatpush2.bf16.msra.mxu0 0
    %1214 = vmatprep.mubr.bf16.mxu0 0
    %1215 = vmatmul.mubr.bf16.gmra.mxu0 %v1174
    %v1216 = vpop.f32.mrf.mxu0
    %v1217 = vadd.f32 0.0, %v1216
    %v1218 = vpop.f32.mrf.mxu0
    %v1219 = vpop.f32.mrf.mxu0
    %v1220 = vadd.f32 0.0, %v1219
    %v1221 = vpop.f32.mrf.mxu0
    %1222 = vmatprep.mubr.bf16.mxu0 0
    %1223 = vmatmul.mubr.bf16.gmra.mxu0 %v1177
    %v1224 = vpop.f32.mrf.mxu0
    %v1225 = vadd.f32 0.0, %v1224
    %v1226 = vpop.f32.mrf.mxu0
    %v1227 = vpop.f32.mrf.mxu0
    %v1228 = vadd.f32 0.0, %v1227
    %v1229 = vpop.f32.mrf.mxu0
    %1230 = vmatprep.mubr.bf16.mxu0 0
    %1231 = vmatmul.mubr.bf16.gmra.mxu0 %v1180
    %v1232 = vpop.f32.mrf.mxu0
    %v1233 = vadd.f32 0.0, %v1232
    %v1234 = vpop.f32.mrf.mxu0
    %v1235 = vpop.f32.mrf.mxu0
    %v1236 = vadd.f32 0.0, %v1235
    %v1237 = vpop.f32.mrf.mxu0
    %1238 = vdwg.mxu0
    %v1239 = vpack.c.bf16 %v1143, %v1140
    %v1240 = vlaneseq
    %v1241 = vshrl.u32 %v1240, 7
    %v1242 = vsub.s32 0, %v1241
    %v1243 = vrot.slane %v948, %v1242
    %v1248 = vunpack.c.l.b16 %v944
    %v1249 = vunpack.c.l.b16 %v945
    %v1250 = vunpack.c.l.b16 %v946
    %v1251 = vunpack.c.l.b16 %v947
    %v1252 = vpack.c.b16 %v1249, %v1248
    %v1253 = vpack.c.b16 %v1251, %v1250
    %v1257 = vsel %vm168, %v1239, 0
    %1259 = vmatprep.subr.bf16.mxu0 0
    %1260 = vmatpush1.bf16.msra.mxu0 0
    %1261 = vmatprep.subr.bf16.mxu0 0
    %1262 = vmatpush1.bf16.msra.mxu0 0
    %1263 = vmatprep.subr.bf16.mxu0 0
    %1264 = vmatpush1.bf16.msra.mxu0 0
    %1265 = vmatprep.subr.bf16.mxu0 0
    %1266 = vmatpush1.bf16.msra.mxu0 0
    %1267 = vmatprep.subr.bf16.mxu0 0
    %1268 = vmatpush1.bf16.msra.mxu0 0
    %1269 = vmatprep.subr.bf16.mxu0 0
    %1270 = vmatpush1.bf16.msra.mxu0 0
    %1271 = vmatprep.subr.bf16.mxu0 0
    %1272 = vmatpush1.bf16.msra.mxu0 %v1253
    %1273 = vmatprep.subr.bf16.mxu0 0
    %1274 = vmatpush1.bf16.msra.mxu0 %v1252
    %1275 = vmatprep.subr.bf16.mxu0 0
    %1276 = vmatpush2.bf16.msra.mxu0 0
    %1277 = vmatprep.subr.bf16.mxu0 0
    %1278 = vmatpush2.bf16.msra.mxu0 0
    %1279 = vmatprep.subr.bf16.mxu0 0
    %1280 = vmatpush2.bf16.msra.mxu0 0
    %1281 = vmatprep.subr.bf16.mxu0 0
    %1282 = vmatpush2.bf16.msra.mxu0 0
    %1283 = vmatprep.subr.bf16.mxu0 0
    %1284 = vmatpush2.bf16.msra.mxu0 0
    %1285 = vmatprep.subr.bf16.mxu0 0
    %1286 = vmatpush2.bf16.msra.mxu0 0
    %1287 = vmatprep.subr.bf16.mxu0 0
    %1288 = vmatpush2.bf16.msra.mxu0 0
    %1289 = vmatprep.subr.bf16.mxu0 0
    %1290 = vmatpush2.bf16.msra.mxu0 0
    %1291 = vmatprep.mubr.bf16.mxu0 0
    %1292 = vmatmul.mubr.bf16.gmra.mxu0 %v1257
    %v1293 = vpop.f32.mrf.mxu0
    %v1294 = vadd.f32 %v1243, %v1293
    %v1295 = vpop.f32.mrf.mxu0
    %v1296 = vpop.f32.mrf.mxu0
    %v1297 = vadd.f32 %v1243, %v1296
    %v1298 = vpop.f32.mrf.mxu0
    %1299 = vdwg.mxu0
    %v1300 = vxor.u32 %v1294, 2147483648
    %v1301 = vxor.u32 %v1297, 2147483648
    %v1302 = vmul.f32 %v1300, 1.442695
    %v1303 = vpow.pop %v1302
    %v1304 = vmul.f32 %v1301, 1.442695
    %v1305 = vpow.pop %v1304
    %v1306 = vadd.f32 %v1303, 1.0
    %v1307 = vadd.f32 %v1305, 1.0
    %v1308 = vrcp.pop %v1306
    %v1309 = vmul.f32 1.0, %v1308
    %v1310 = vrcp.pop %v1307
    %v1311 = vmul.f32 1.0, %v1310
    %v1312 = vmul.f32 %v1217, %v1309
    %v1313 = vmul.f32 %v1220, %v1311
    %v1314 = vmul.f32 %v1225, %v1309
    %v1315 = vmul.f32 %v1228, %v1311
    %v1316 = vmul.f32 %v1233, %v1309
    %v1317 = vmul.f32 %v1236, %v1311
    %v1318 = vld [vmem:[%s3 + $0x10c] sm:$0xf]
    %v1319 = vld [vmem:[%s3 + $0x110] sm:$0xf]
    %v1320 = vld [vmem:[%s3 + $0x114] sm:$0xf]
    %v1321 = vld [vmem:[%s3 + $0x118] sm:$0xf]
    %v1322 = vld [vmem:[%s3 + $0x11c] sm:$0xf]
    %v1323 = vld [vmem:[%s3 + $0x120] sm:$0xf]
    %v1324 = vld [vmem:[%s3 + $0x124] sm:$0xf]
    %v1325 = vld [vmem:[%s3 + $0x128] sm:$0xf]
    %v1326 = vpack.c.bf16 %v1313, %v1312
    %v1327 = vpack.c.bf16 %v1315, %v1314
    %v1328 = vpack.c.bf16 %v1317, %v1316
    %v1337 = vunpack.c.l.b16 %v1318
    %v1338 = vunpack.c.l.b16 %v1319
    %v1339 = vunpack.c.l.b16 %v1320
    %v1340 = vunpack.c.l.b16 %v1321
    %v1341 = vunpack.c.l.b16 %v1322
    %v1342 = vunpack.c.l.b16 %v1323
    %v1343 = vunpack.c.l.b16 %v1324
    %v1344 = vunpack.c.l.b16 %v1325
    %v1345 = vpack.c.b16 %v1338, %v1337
    %v1346 = vpack.c.b16 %v1340, %v1339
    %v1347 = vpack.c.b16 %v1342, %v1341
    %v1348 = vpack.c.b16 %v1344, %v1343
    %v1354 = vsel %vm715, %v1326, 0
    %v1357 = vsel %vm715, %v1327, 0
    %v1360 = vsel %vm715, %v1328, 0
    %1362 = vmatprep.subr.bf16.mxu0 0
    %1363 = vmatpush1.bf16.msra.mxu0 0
    %1364 = vmatprep.subr.bf16.mxu0 0
    %1365 = vmatpush1.bf16.msra.mxu0 0
    %1366 = vmatprep.subr.bf16.mxu0 0
    %1367 = vmatpush1.bf16.msra.mxu0 0
    %1368 = vmatprep.subr.bf16.mxu0 0
    %1369 = vmatpush1.bf16.msra.mxu0 0
    %1370 = vmatprep.subr.bf16.mxu0 0
    %1371 = vmatpush1.bf16.msra.mxu0 %v1348
    %1372 = vmatprep.subr.bf16.mxu0 0
    %1373 = vmatpush1.bf16.msra.mxu0 %v1347
    %1374 = vmatprep.subr.bf16.mxu0 0
    %1375 = vmatpush1.bf16.msra.mxu0 %v1346
    %1376 = vmatprep.subr.bf16.mxu0 0
    %1377 = vmatpush1.bf16.msra.mxu0 %v1345
    %1378 = vmatprep.subr.bf16.mxu0 0
    %1379 = vmatpush2.bf16.msra.mxu0 0
    %1380 = vmatprep.subr.bf16.mxu0 0
    %1381 = vmatpush2.bf16.msra.mxu0 0
    %1382 = vmatprep.subr.bf16.mxu0 0
    %1383 = vmatpush2.bf16.msra.mxu0 0
    %1384 = vmatprep.subr.bf16.mxu0 0
    %1385 = vmatpush2.bf16.msra.mxu0 0
    %1386 = vmatprep.subr.bf16.mxu0 0
    %1387 = vmatpush2.bf16.msra.mxu0 0
    %1388 = vmatprep.subr.bf16.mxu0 0
    %1389 = vmatpush2.bf16.msra.mxu0 0
    %1390 = vmatprep.subr.bf16.mxu0 0
    %1391 = vmatpush2.bf16.msra.mxu0 0
    %1392 = vmatprep.subr.bf16.mxu0 0
    %1393 = vmatpush2.bf16.msra.mxu0 0
    %1394 = vmatprep.mubr.bf16.mxu0 0
    %1395 = vmatmul.mubr.bf16.gmra.mxu0 %v1354
    %v1396 = vpop.f32.mrf.mxu0
    %v1397 = vadd.f32 0.0, %v1396
    %v1398 = vpop.f32.mrf.mxu0
    %v1399 = vpop.f32.mrf.mxu0
    %v1400 = vadd.f32 0.0, %v1399
    %v1401 = vpop.f32.mrf.mxu0
    %1402 = vmatprep.mubr.bf16.mxu0 0
    %1403 = vmatmul.mubr.bf16.gmra.mxu0 %v1357
    %v1404 = vpop.f32.mrf.mxu0
    %v1405 = vadd.f32 0.0, %v1404
    %v1406 = vpop.f32.mrf.mxu0
    %v1407 = vpop.f32.mrf.mxu0
    %v1408 = vadd.f32 0.0, %v1407
    %v1409 = vpop.f32.mrf.mxu0
    %1410 = vmatprep.mubr.bf16.mxu0 0
    %1411 = vmatmul.mubr.bf16.gmra.mxu0 %v1360
    %v1412 = vpop.f32.mrf.mxu0
    %v1413 = vadd.f32 0.0, %v1412
    %v1414 = vpop.f32.mrf.mxu0
    %v1415 = vpop.f32.mrf.mxu0
    %v1416 = vadd.f32 0.0, %v1415
    %v1417 = vpop.f32.mrf.mxu0
    %1418 = vdwg.mxu0
    %v1419 = vmul.f32 %v1312, %v1397
    %v1420 = vmul.f32 %v1313, %v1400
    %v1421 = vmul.f32 %v1314, %v1405
    %v1422 = vmul.f32 %v1315, %v1408
    %v1423 = vadd.f32 %v1419, %v1421
    %v1424 = vadd.f32 %v1420, %v1422
    %v1425 = vmul.f32 %v1316, %v1413
    %v1426 = vmul.f32 %v1317, %v1416
    %v1427 = vadd.f32 %v1423, %v1425
    %v1428 = vadd.f32 %v1424, %v1426
    %v1429 = vmul.f32 %v1397, %v1397
    %v1430 = vmul.f32 %v1400, %v1400
    %v1431 = vmul.f32 %v1405, %v1405
    %v1432 = vmul.f32 %v1408, %v1408
    %v1433 = vadd.f32 %v1429, %v1431
    %v1434 = vadd.f32 %v1430, %v1432
    %v1435 = vmul.f32 %v1413, %v1413
    %v1436 = vmul.f32 %v1416, %v1416
    %v1437 = vadd.f32 %v1433, %v1435
    %v1438 = vadd.f32 %v1434, %v1436
    %v1439 = vadd.f32 %v1437, 1e-06
    %v1440 = vadd.f32 %v1438, 1e-06
    %v1441 = vrcp.pop %v1439
    %v1442 = vrcp.pop %v1440
    %v1443 = vmul.f32 %v1427, %v1441
    %v1444 = vmul.f32 %v1428, %v1442
    %vm1445 = vcmp.ge.f32.partialorder %v1427, 0.0
    %vm1446 = vcmp.ge.f32.partialorder %v1428, 0.0
    %v1447 = vmul.f32 %v1443, %v1397
    %v1448 = vmul.f32 %v1444, %v1400
    %v1449 = vmul.f32 %v1443, %v1405
    %v1450 = vmul.f32 %v1444, %v1408
    %v1451 = vmul.f32 %v1443, %v1413
    %v1452 = vmul.f32 %v1444, %v1416
    %v1453 = vsub.f32 %v1312, %v1447
    %v1454 = vsub.f32 %v1313, %v1448
    %v1455 = vsub.f32 %v1314, %v1449
    %v1456 = vsub.f32 %v1315, %v1450
    %v1457 = vsub.f32 %v1316, %v1451
    %v1458 = vsub.f32 %v1317, %v1452
    %v1459 = vsel %vm1445, 1, 0
    %v1460 = vsel %vm1446, 1, 0
    %vm1461 = vcmp.eq.s32.totalorder %v1459, 1
    %vm1462 = vcmp.eq.s32.totalorder %v1460, 1
    %v1463 = vsel %vm1461, %v1312, %v1453
    %v1464 = vsel %vm1462, %v1313, %v1454
    %v1465 = vsel %vm1461, %v1314, %v1455
    %v1466 = vsel %vm1462, %v1315, %v1456
    %v1467 = vsel %vm1461, %v1316, %v1457
    %v1468 = vsel %vm1462, %v1317, %v1458
    %v1469 = vmul.f32 %v1312, 0.2
    %v1470 = vmul.f32 %v1313, 0.2
    %v1471 = vmul.f32 %v1314, 0.2
    %v1472 = vmul.f32 %v1315, 0.2
    %v1473 = vmul.f32 %v1316, 0.2
    %v1474 = vmul.f32 %v1317, 0.2
    %v1475 = vmul.f32 %v1463, 0.8
    %v1476 = vmul.f32 %v1464, 0.8
    %v1477 = vmul.f32 %v1465, 0.8
    %v1478 = vmul.f32 %v1466, 0.8
    %v1479 = vmul.f32 %v1467, 0.8
    %v1480 = vmul.f32 %v1468, 0.8
    %v1481 = vadd.f32 %v1469, %v1475
    %v1482 = vadd.f32 %v1470, %v1476
    %v1483 = vadd.f32 %v1471, %v1477
    %v1484 = vadd.f32 %v1472, %v1478
    %v1485 = vadd.f32 %v1473, %v1479
    %v1486 = vadd.f32 %v1474, %v1480
    %vm1487 = vcmp.ge.f32.partialorder %v1140, 0.0
    %vm1488 = vcmp.ge.f32.partialorder %v1143, 0.0
    %v1489 = vmul.f32 %v1140, 0.01
    %v1490 = vmul.f32 %v1143, 0.01
    %v1491 = vsel %vm1487, %v1140, %v1489
    %v1492 = vsel %vm1488, %v1143, %v1490
    %1494 = vset.pattern.permute.xlu0 0
    %1495 = vperm.xlu0 %1494, %v30
    %v1496 = vpop.permute.xlu0 %1495
    %1499 = vset.pattern.permute.xlu0 0
    %1500 = vperm.xlu0 %1499, %v31
    %v1501 = vpop.permute.xlu0 %1500
    %v1503 = vmul.f32 %v1481, %v1496
    %v1504 = vmul.f32 %v1482, %v1501
    %1505 = vset.pattern.permute.xlu0 1
    %1506 = vperm.xlu0 %1505, %v30
    %v1507 = vpop.permute.xlu0 %1506
    %1509 = vset.pattern.permute.xlu0 1
    %1510 = vperm.xlu0 %1509, %v31
    %v1511 = vpop.permute.xlu0 %1510
    %v1513 = vmul.f32 %v1483, %v1507
    %v1514 = vmul.f32 %v1484, %v1511
    %v1515 = vadd.f32 %v1503, %v1513
    %v1516 = vadd.f32 %v1504, %v1514
    %1517 = vset.pattern.permute.xlu0 2
    %1518 = vperm.xlu0 %1517, %v30
    %v1519 = vpop.permute.xlu0 %1518
    %1521 = vset.pattern.permute.xlu0 2
    %1522 = vperm.xlu0 %1521, %v31
    %v1523 = vpop.permute.xlu0 %1522
    %v1525 = vmul.f32 %v1485, %v1519
    %v1526 = vmul.f32 %v1486, %v1523
    %v1527 = vadd.f32 %v1515, %v1525
    %v1528 = vadd.f32 %v1516, %v1526
    %v1529 = vld [vmem:[%s3 + $0x12c] sm:$0xf]
    %v1530 = vld [vmem:[%s3 + $0x130] sm:$0xf]
    %v1531 = vld [vmem:[%s3 + $0x134] sm:$0xf]
    %v1532 = vld [vmem:[%s3 + $0x138] sm:$0xf]
    %v1533 = vpack.c.bf16 %v1482, %v1481
    %v1534 = vpack.c.bf16 %v1484, %v1483
    %v1535 = vpack.c.bf16 %v1486, %v1485
    %v1540 = vunpack.c.l.b16 %v1529
    %v1541 = vunpack.c.l.b16 %v1530
    %v1542 = vunpack.c.l.b16 %v1531
    %v1543 = vunpack.c.l.b16 %v1532
    %v1544 = vpack.c.b16 %v1541, %v1540
    %v1545 = vpack.c.b16 %v1543, %v1542
    %v1549 = vsel %vm168, %v1533, 0
    %v1552 = vsel %vm168, %v1534, 0
    %v1555 = vsel %vm168, %v1535, 0
    %1557 = vmatprep.subr.bf16.mxu0 0
    %1558 = vmatpush1.bf16.msra.mxu0 0
    %1559 = vmatprep.subr.bf16.mxu0 0
    %1560 = vmatpush1.bf16.msra.mxu0 0
    %1561 = vmatprep.subr.bf16.mxu0 0
    %1562 = vmatpush1.bf16.msra.mxu0 0
    %1563 = vmatprep.subr.bf16.mxu0 0
    %1564 = vmatpush1.bf16.msra.mxu0 0
    %1565 = vmatprep.subr.bf16.mxu0 0
    %1566 = vmatpush1.bf16.msra.mxu0 0
    %1567 = vmatprep.subr.bf16.mxu0 0
    %1568 = vmatpush1.bf16.msra.mxu0 0
    %1569 = vmatprep.subr.bf16.mxu0 0
    %1570 = vmatpush1.bf16.msra.mxu0 %v1545
    %1571 = vmatprep.subr.bf16.mxu0 0
    %1572 = vmatpush1.bf16.msra.mxu0 %v1544
    %1573 = vmatprep.subr.bf16.mxu0 0
    %1574 = vmatpush2.bf16.msra.mxu0 0
    %1575 = vmatprep.subr.bf16.mxu0 0
    %1576 = vmatpush2.bf16.msra.mxu0 0
    %1577 = vmatprep.subr.bf16.mxu0 0
    %1578 = vmatpush2.bf16.msra.mxu0 0
    %1579 = vmatprep.subr.bf16.mxu0 0
    %1580 = vmatpush2.bf16.msra.mxu0 0
    %1581 = vmatprep.subr.bf16.mxu0 0
    %1582 = vmatpush2.bf16.msra.mxu0 0
    %1583 = vmatprep.subr.bf16.mxu0 0
    %1584 = vmatpush2.bf16.msra.mxu0 0
    %1585 = vmatprep.subr.bf16.mxu0 0
    %1586 = vmatpush2.bf16.msra.mxu0 0
    %1587 = vmatprep.subr.bf16.mxu0 0
    %1588 = vmatpush2.bf16.msra.mxu0 0
    %1589 = vmatprep.mubr.bf16.mxu0 0
    %1590 = vmatmul.mubr.bf16.gmra.mxu0 %v1549
    %v1591 = vpop.f32.mrf.mxu0
    %v1592 = vadd.f32 0.0, %v1591
    %v1593 = vpop.f32.mrf.mxu0
    %v1594 = vpop.f32.mrf.mxu0
    %v1595 = vadd.f32 0.0, %v1594
    %v1596 = vpop.f32.mrf.mxu0
    %1597 = vmatprep.mubr.bf16.mxu0 0
    %1598 = vmatmul.mubr.bf16.gmra.mxu0 %v1552
    %v1599 = vpop.f32.mrf.mxu0
    %v1600 = vadd.f32 0.0, %v1599
    %v1601 = vpop.f32.mrf.mxu0
    %v1602 = vpop.f32.mrf.mxu0
    %v1603 = vadd.f32 0.0, %v1602
    %v1604 = vpop.f32.mrf.mxu0
    %1605 = vmatprep.mubr.bf16.mxu0 0
    %1606 = vmatmul.mubr.bf16.gmra.mxu0 %v1555
    %v1607 = vpop.f32.mrf.mxu0
    %v1608 = vadd.f32 0.0, %v1607
    %v1609 = vpop.f32.mrf.mxu0
    %v1610 = vpop.f32.mrf.mxu0
    %v1611 = vadd.f32 0.0, %v1610
    %v1612 = vpop.f32.mrf.mxu0
    %1613 = vdwg.mxu0
    %v1614 = vmul.f32 %v1592, %v1592
    %v1615 = vmul.f32 %v1595, %v1595
    %v1616 = vmul.f32 %v1600, %v1600
    %v1617 = vmul.f32 %v1603, %v1603
    %v1618 = vadd.f32 %v1614, %v1616
    %v1619 = vadd.f32 %v1615, %v1617
    %v1620 = vmul.f32 %v1608, %v1608
    %v1621 = vmul.f32 %v1611, %v1611
    %v1622 = vadd.f32 %v1618, %v1620
    %v1623 = vadd.f32 %v1619, %v1621
    %v1624 = vrsqrt.pop %v1622
    %v1625 = vmul.f32 %v1622, %v1624
    %vm1626 = vcmp.eq.f32.partialorder %v1622, inf
    %v1627 = vsel %vm1626, %v1622, %v1625
    %vm1628 = vcmp.eq.f32.partialorder %v1622, 0.0
    %v1629 = vand.u32 %v1622, 2147483648
    %v1630 = vsel %vm1628, %v1629, %v1627
    %v1631 = vrsqrt.pop %v1623
    %v1632 = vmul.f32 %v1623, %v1631
    %vm1633 = vcmp.eq.f32.partialorder %v1623, inf
    %v1634 = vsel %vm1633, %v1623, %v1632
    %vm1635 = vcmp.eq.f32.partialorder %v1623, 0.0
    %v1636 = vand.u32 %v1623, 2147483648
    %v1637 = vsel %vm1635, %v1636, %v1634
    %1640 = vrot.lane.b32.xlu0 %v1491, 32
    %v1641 = vpop.permute.xlu0 %1640
    %1642 = vrot.lane.b32.xlu0 %v1492, 32
    %v1643 = vpop.permute.xlu0 %1642
    %1648 = vrot.lane.b32.xlu0 %v1527, 32
    %v1649 = vpop.permute.xlu0 %1648
    %1650 = vrot.lane.b32.xlu0 %v1528, 32
    %v1651 = vpop.permute.xlu0 %1650
    %v1654 = vsel %vm168, %v1630, %v1641
    %v1655 = vsel %vm168, %v1637, %v1643
    %v1656 = vsel %vm715, %v1654, %v1649
    %v1657 = vsel %vm715, %v1655, %v1651
    %v1658 = vld [vmem:[%s3 + $0x13c] sm:$0xf]
    %v1659 = vld [vmem:[%s3 + $0x140] sm:$0xf]
    %v1660 = vld [vmem:[%s3 + $0x144] sm:$0xf]
    %v1661 = vld [vmem:[%s3 + $0x148] sm:$0xf]
    %v1662 = vld [vmem:[%s3 + $0x14c] sm:$0xf]
    %v1663 = vld [vmem:[%s3 + $0x150] sm:$0xf]
    %v1664 = vld [vmem:[%s3 + $0x154] sm:$0xf]
    %v1665 = vld [vmem:[%s3 + $0x158] sm:$0xf]
    %v1666 = vld [vmem:[%s3 + $0x15c] sm:$0xf]
    %v1667 = vld [vmem:[%s3 + $0x160] sm:$0xf]
    %v1668 = vld [vmem:[%s3 + $0x164] sm:$0xf]
    %v1669 = vld [vmem:[%s3 + $0x168] sm:$0xf]
    %v1670 = vpack.c.bf16 %v1657, %v1656
    %v1683 = vunpack.c.l.b16 %v1658
    %v1684 = vunpack.c.l.b16 %v1659
    %v1685 = vunpack.c.l.b16 %v1660
    %v1686 = vunpack.c.l.b16 %v1661
    %v1687 = vunpack.c.l.b16 %v1662
    %v1688 = vunpack.c.l.b16 %v1663
    %v1689 = vunpack.c.l.b16 %v1664
    %v1690 = vunpack.c.l.b16 %v1665
    %v1691 = vunpack.c.l.b16 %v1666
    %v1692 = vunpack.c.l.b16 %v1667
    %v1693 = vunpack.c.l.b16 %v1668
    %v1694 = vunpack.c.l.b16 %v1669
    %v1695 = vpack.c.b16 %v1684, %v1683
    %v1696 = vpack.c.b16 %v1686, %v1685
    %v1697 = vpack.c.b16 %v1688, %v1687
    %v1698 = vpack.c.b16 %v1690, %v1689
    %v1699 = vpack.c.b16 %v1692, %v1691
    %v1700 = vpack.c.b16 %v1694, %v1693
    %v1708 = vsel %vm1101, %v1670, 0
    %1710 = vmatprep.subr.bf16.mxu0 0
    %1711 = vmatpush1.bf16.msra.mxu0 0
    %1712 = vmatprep.subr.bf16.mxu0 0
    %1713 = vmatpush1.bf16.msra.mxu0 0
    %1714 = vmatprep.subr.bf16.mxu0 0
    %1715 = vmatpush1.bf16.msra.mxu0 %v1700
    %1716 = vmatprep.subr.bf16.mxu0 0
    %1717 = vmatpush1.bf16.msra.mxu0 %v1699
    %1718 = vmatprep.subr.bf16.mxu0 0
    %1719 = vmatpush1.bf16.msra.mxu0 %v1698
    %1720 = vmatprep.subr.bf16.mxu0 0
    %1721 = vmatpush1.bf16.msra.mxu0 %v1697
    %1722 = vmatprep.subr.bf16.mxu0 0
    %1723 = vmatpush1.bf16.msra.mxu0 %v1696
    %1724 = vmatprep.subr.bf16.mxu0 0
    %1725 = vmatpush1.bf16.msra.mxu0 %v1695
    %1726 = vmatprep.subr.bf16.mxu0 0
    %1727 = vmatpush2.bf16.msra.mxu0 0
    %1728 = vmatprep.subr.bf16.mxu0 0
    %1729 = vmatpush2.bf16.msra.mxu0 0
    %1730 = vmatprep.subr.bf16.mxu0 0
    %1731 = vmatpush2.bf16.msra.mxu0 0
    %1732 = vmatprep.subr.bf16.mxu0 0
    %1733 = vmatpush2.bf16.msra.mxu0 0
    %1734 = vmatprep.subr.bf16.mxu0 0
    %1735 = vmatpush2.bf16.msra.mxu0 0
    %1736 = vmatprep.subr.bf16.mxu0 0
    %1737 = vmatpush2.bf16.msra.mxu0 0
    %1738 = vmatprep.subr.bf16.mxu0 0
    %1739 = vmatpush2.bf16.msra.mxu0 0
    %1740 = vmatprep.subr.bf16.mxu0 0
    %1741 = vmatpush2.bf16.msra.mxu0 0
    %1742 = vmatprep.mubr.bf16.mxu0 0
    %1743 = vmatmul.mubr.bf16.gmra.mxu0 %v1708
    %v1744 = vpop.f32.mrf.mxu0
    %v1745 = vadd.f32 0.0, %v1744
    %v1746 = vpop.f32.mrf.mxu0
    %v1747 = vpop.f32.mrf.mxu0
    %v1748 = vadd.f32 0.0, %v1747
    %v1749 = vpop.f32.mrf.mxu0
    %1750 = vdwg.mxu0
    %v1751 = vld [vmem:[%s3 + $0x16c] sm:$0xf]
    %v1752 = vld [vmem:[%s3 + $0x170] sm:$0xf]
    %v1753 = vld [vmem:[%s3 + $0x174] sm:$0xf]
    %v1754 = vld [vmem:[%s3 + $0x178] sm:$0xf]
    %v1755 = vpack.c.bf16 %v1595, %v1592
    %v1756 = vpack.c.bf16 %v1603, %v1600
    %v1757 = vpack.c.bf16 %v1611, %v1608
    %v1762 = vunpack.c.l.b16 %v1751
    %v1763 = vunpack.c.l.b16 %v1752
    %v1764 = vunpack.c.l.b16 %v1753
    %v1765 = vunpack.c.l.b16 %v1754
    %v1766 = vpack.c.b16 %v1763, %v1762
    %v1767 = vpack.c.b16 %v1765, %v1764
    %v1771 = vsel %vm168, %v1755, 0
    %v1774 = vsel %vm168, %v1756, 0
    %v1777 = vsel %vm168, %v1757, 0
    %1779 = vmatprep.subr.bf16.mxu0 0
    %1780 = vmatpush1.bf16.msra.mxu0 0
    %1781 = vmatprep.subr.bf16.mxu0 0
    %1782 = vmatpush1.bf16.msra.mxu0 0
    %1783 = vmatprep.subr.bf16.mxu0 0
    %1784 = vmatpush1.bf16.msra.mxu0 0
    %1785 = vmatprep.subr.bf16.mxu0 0
    %1786 = vmatpush1.bf16.msra.mxu0 0
    %1787 = vmatprep.subr.bf16.mxu0 0
    %1788 = vmatpush1.bf16.msra.mxu0 0
    %1789 = vmatprep.subr.bf16.mxu0 0
    %1790 = vmatpush1.bf16.msra.mxu0 0
    %1791 = vmatprep.subr.bf16.mxu0 0
    %1792 = vmatpush1.bf16.msra.mxu0 %v1767
    %1793 = vmatprep.subr.bf16.mxu0 0
    %1794 = vmatpush1.bf16.msra.mxu0 %v1766
    %1795 = vmatprep.subr.bf16.mxu0 0
    %1796 = vmatpush2.bf16.msra.mxu0 0
    %1797 = vmatprep.subr.bf16.mxu0 0
    %1798 = vmatpush2.bf16.msra.mxu0 0
    %1799 = vmatprep.subr.bf16.mxu0 0
    %1800 = vmatpush2.bf16.msra.mxu0 0
    %1801 = vmatprep.subr.bf16.mxu0 0
    %1802 = vmatpush2.bf16.msra.mxu0 0
    %1803 = vmatprep.subr.bf16.mxu0 0
    %1804 = vmatpush2.bf16.msra.mxu0 0
    %1805 = vmatprep.subr.bf16.mxu0 0
    %1806 = vmatpush2.bf16.msra.mxu0 0
    %1807 = vmatprep.subr.bf16.mxu0 0
    %1808 = vmatpush2.bf16.msra.mxu0 0
    %1809 = vmatprep.subr.bf16.mxu0 0
    %1810 = vmatpush2.bf16.msra.mxu0 0
    %1811 = vmatprep.mubr.bf16.mxu0 0
    %1812 = vmatmul.mubr.bf16.gmra.mxu0 %v1771
    %v1813 = vpop.f32.mrf.mxu0
    %v1814 = vadd.f32 0.0, %v1813
    %v1815 = vpop.f32.mrf.mxu0
    %v1816 = vpop.f32.mrf.mxu0
    %v1817 = vadd.f32 0.0, %v1816
    %v1818 = vpop.f32.mrf.mxu0
    %1819 = vmatprep.mubr.bf16.mxu0 0
    %1820 = vmatmul.mubr.bf16.gmra.mxu0 %v1774
    %v1821 = vpop.f32.mrf.mxu0
    %v1822 = vadd.f32 0.0, %v1821
    %v1823 = vpop.f32.mrf.mxu0
    %v1824 = vpop.f32.mrf.mxu0
    %v1825 = vadd.f32 0.0, %v1824
    %v1826 = vpop.f32.mrf.mxu0
    %1827 = vmatprep.mubr.bf16.mxu0 0
    %1828 = vmatmul.mubr.bf16.gmra.mxu0 %v1777
    %v1829 = vpop.f32.mrf.mxu0
    %v1830 = vadd.f32 0.0, %v1829
    %v1831 = vpop.f32.mrf.mxu0
    %v1832 = vpop.f32.mrf.mxu0
    %v1833 = vadd.f32 0.0, %v1832
    %v1834 = vpop.f32.mrf.mxu0
    %1835 = vdwg.mxu0
    %v1836 = vld [vmem:[%s3 + $0x17c] sm:$0xf]
    %v1837 = vld [vmem:[%s3 + $0x180] sm:$0xf]
    %v1838 = vld [vmem:[%s3 + $0x184] sm:$0xf]
    %v1839 = vld [vmem:[%s3 + $0x188] sm:$0xf]
    %v1840 = vpack.c.bf16 %v1748, %v1745
    %v1841 = vld [vmem:[%s4 + $0x3] sm:$0x1]
    %v1842 = vlaneseq
    %v1843 = vshrl.u32 %v1842, 7
    %v1844 = vsub.s32 0, %v1843
    %v1845 = vrot.slane %v1841, %v1844
    %v1850 = vunpack.c.l.b16 %v1836
    %v1851 = vunpack.c.l.b16 %v1837
    %v1852 = vunpack.c.l.b16 %v1838
    %v1853 = vunpack.c.l.b16 %v1839
    %v1854 = vpack.c.b16 %v1851, %v1850
    %v1855 = vpack.c.b16 %v1853, %v1852
    %v1859 = vsel %vm168, %v1840, 0
    %1861 = vmatprep.subr.bf16.mxu0 0
    %1862 = vmatpush1.bf16.msra.mxu0 0
    %1863 = vmatprep.subr.bf16.mxu0 0
    %1864 = vmatpush1.bf16.msra.mxu0 0
    %1865 = vmatprep.subr.bf16.mxu0 0
    %1866 = vmatpush1.bf16.msra.mxu0 0
    %1867 = vmatprep.subr.bf16.mxu0 0
    %1868 = vmatpush1.bf16.msra.mxu0 0
    %1869 = vmatprep.subr.bf16.mxu0 0
    %1870 = vmatpush1.bf16.msra.mxu0 0
    %1871 = vmatprep.subr.bf16.mxu0 0
    %1872 = vmatpush1.bf16.msra.mxu0 0
    %1873 = vmatprep.subr.bf16.mxu0 0
    %1874 = vmatpush1.bf16.msra.mxu0 %v1855
    %1875 = vmatprep.subr.bf16.mxu0 0
    %1876 = vmatpush1.bf16.msra.mxu0 %v1854
    %1877 = vmatprep.subr.bf16.mxu0 0
    %1878 = vmatpush2.bf16.msra.mxu0 0
    %1879 = vmatprep.subr.bf16.mxu0 0
    %1880 = vmatpush2.bf16.msra.mxu0 0
    %1881 = vmatprep.subr.bf16.mxu0 0
    %1882 = vmatpush2.bf16.msra.mxu0 0
    %1883 = vmatprep.subr.bf16.mxu0 0
    %1884 = vmatpush2.bf16.msra.mxu0 0
    %1885 = vmatprep.subr.bf16.mxu0 0
    %1886 = vmatpush2.bf16.msra.mxu0 0
    %1887 = vmatprep.subr.bf16.mxu0 0
    %1888 = vmatpush2.bf16.msra.mxu0 0
    %1889 = vmatprep.subr.bf16.mxu0 0
    %1890 = vmatpush2.bf16.msra.mxu0 0
    %1891 = vmatprep.subr.bf16.mxu0 0
    %1892 = vmatpush2.bf16.msra.mxu0 0
    %1893 = vmatprep.mubr.bf16.mxu0 0
    %1894 = vmatmul.mubr.bf16.gmra.mxu0 %v1859
    %v1895 = vpop.f32.mrf.mxu0
    %v1896 = vadd.f32 %v1845, %v1895
    %v1897 = vpop.f32.mrf.mxu0
    %v1898 = vpop.f32.mrf.mxu0
    %v1899 = vadd.f32 %v1845, %v1898
    %v1900 = vpop.f32.mrf.mxu0
    %1901 = vdwg.mxu0
    %v1902 = vxor.u32 %v1896, 2147483648
    %v1903 = vxor.u32 %v1899, 2147483648
    %v1904 = vmul.f32 %v1902, 1.442695
    %v1905 = vpow.pop %v1904
    %v1906 = vmul.f32 %v1903, 1.442695
    %v1907 = vpow.pop %v1906
    %v1908 = vadd.f32 %v1905, 1.0
    %v1909 = vadd.f32 %v1907, 1.0
    %v1910 = vrcp.pop %v1908
    %v1911 = vmul.f32 1.0, %v1910
    %v1912 = vrcp.pop %v1909
    %v1913 = vmul.f32 1.0, %v1912
    %v1914 = vmul.f32 %v1814, %v1911
    %v1915 = vmul.f32 %v1817, %v1913
    %v1916 = vmul.f32 %v1822, %v1911
    %v1917 = vmul.f32 %v1825, %v1913
    %v1918 = vmul.f32 %v1830, %v1911
    %v1919 = vmul.f32 %v1833, %v1913
    %v1920 = vld [vmem:[%s3 + $0x18c] sm:$0xf]
    %v1921 = vld [vmem:[%s3 + $0x190] sm:$0xf]
    %v1922 = vld [vmem:[%s3 + $0x194] sm:$0xf]
    %v1923 = vld [vmem:[%s3 + $0x198] sm:$0xf]
    %v1924 = vpack.c.bf16 %v1915, %v1914
    %v1925 = vpack.c.bf16 %v1917, %v1916
    %v1926 = vpack.c.bf16 %v1919, %v1918
    %v1931 = vunpack.c.l.b16 %v1920
    %v1932 = vunpack.c.l.b16 %v1921
    %v1933 = vunpack.c.l.b16 %v1922
    %v1934 = vunpack.c.l.b16 %v1923
    %v1935 = vpack.c.b16 %v1932, %v1931
    %v1936 = vpack.c.b16 %v1934, %v1933
    %v1940 = vsel %vm168, %v1924, 0
    %v1943 = vsel %vm168, %v1925, 0
    %v1946 = vsel %vm168, %v1926, 0
    %1948 = vmatprep.subr.bf16.mxu0 0
    %1949 = vmatpush1.bf16.msra.mxu0 0
    %1950 = vmatprep.subr.bf16.mxu0 0
    %1951 = vmatpush1.bf16.msra.mxu0 0
    %1952 = vmatprep.subr.bf16.mxu0 0
    %1953 = vmatpush1.bf16.msra.mxu0 0
    %1954 = vmatprep.subr.bf16.mxu0 0
    %1955 = vmatpush1.bf16.msra.mxu0 0
    %1956 = vmatprep.subr.bf16.mxu0 0
    %1957 = vmatpush1.bf16.msra.mxu0 0
    %1958 = vmatprep.subr.bf16.mxu0 0
    %1959 = vmatpush1.bf16.msra.mxu0 0
    %1960 = vmatprep.subr.bf16.mxu0 0
    %1961 = vmatpush1.bf16.msra.mxu0 %v1936
    %1962 = vmatprep.subr.bf16.mxu0 0
    %1963 = vmatpush1.bf16.msra.mxu0 %v1935
    %1964 = vmatprep.subr.bf16.mxu0 0
    %1965 = vmatpush2.bf16.msra.mxu0 0
    %1966 = vmatprep.subr.bf16.mxu0 0
    %1967 = vmatpush2.bf16.msra.mxu0 0
    %1968 = vmatprep.subr.bf16.mxu0 0
    %1969 = vmatpush2.bf16.msra.mxu0 0
    %1970 = vmatprep.subr.bf16.mxu0 0
    %1971 = vmatpush2.bf16.msra.mxu0 0
    %1972 = vmatprep.subr.bf16.mxu0 0
    %1973 = vmatpush2.bf16.msra.mxu0 0
    %1974 = vmatprep.subr.bf16.mxu0 0
    %1975 = vmatpush2.bf16.msra.mxu0 0
    %1976 = vmatprep.subr.bf16.mxu0 0
    %1977 = vmatpush2.bf16.msra.mxu0 0
    %1978 = vmatprep.subr.bf16.mxu0 0
    %1979 = vmatpush2.bf16.msra.mxu0 0
    %1980 = vmatprep.mubr.bf16.mxu0 0
    %1981 = vmatmul.mubr.bf16.gmra.mxu0 %v1940
    %v1982 = vpop.f32.mrf.mxu0
    %v1983 = vadd.f32 0.0, %v1982
    %v1984 = vpop.f32.mrf.mxu0
    %v1985 = vpop.f32.mrf.mxu0
    %v1986 = vadd.f32 0.0, %v1985
    %v1987 = vpop.f32.mrf.mxu0
    %1988 = vmatprep.mubr.bf16.mxu0 0
    %1989 = vmatmul.mubr.bf16.gmra.mxu0 %v1943
    %v1990 = vpop.f32.mrf.mxu0
    %v1991 = vadd.f32 0.0, %v1990
    %v1992 = vpop.f32.mrf.mxu0
    %v1993 = vpop.f32.mrf.mxu0
    %v1994 = vadd.f32 0.0, %v1993
    %v1995 = vpop.f32.mrf.mxu0
    %1996 = vmatprep.mubr.bf16.mxu0 0
    %1997 = vmatmul.mubr.bf16.gmra.mxu0 %v1946
    %v1998 = vpop.f32.mrf.mxu0
    %v1999 = vadd.f32 0.0, %v1998
    %v2000 = vpop.f32.mrf.mxu0
    %v2001 = vpop.f32.mrf.mxu0
    %v2002 = vadd.f32 0.0, %v2001
    %v2003 = vpop.f32.mrf.mxu0
    %2004 = vdwg.mxu0
    %v2005 = vmul.f32 %v1914, %v1983
    %v2006 = vmul.f32 %v1915, %v1986
    %v2007 = vmul.f32 %v1916, %v1991
    %v2008 = vmul.f32 %v1917, %v1994
    %v2009 = vadd.f32 %v2005, %v2007
    %v2010 = vadd.f32 %v2006, %v2008
    %v2011 = vmul.f32 %v1918, %v1999
    %v2012 = vmul.f32 %v1919, %v2002
    %v2013 = vadd.f32 %v2009, %v2011
    %v2014 = vadd.f32 %v2010, %v2012
    %v2015 = vmul.f32 %v1983, %v1983
    %v2016 = vmul.f32 %v1986, %v1986
    %v2017 = vmul.f32 %v1991, %v1991
    %v2018 = vmul.f32 %v1994, %v1994
    %v2019 = vadd.f32 %v2015, %v2017
    %v2020 = vadd.f32 %v2016, %v2018
    %v2021 = vmul.f32 %v1999, %v1999
    %v2022 = vmul.f32 %v2002, %v2002
    %v2023 = vadd.f32 %v2019, %v2021
    %v2024 = vadd.f32 %v2020, %v2022
    %v2025 = vadd.f32 %v2023, 1e-06
    %v2026 = vadd.f32 %v2024, 1e-06
    %v2027 = vrcp.pop %v2025
    %v2028 = vrcp.pop %v2026
    %v2029 = vmul.f32 %v2013, %v2027
    %v2030 = vmul.f32 %v2014, %v2028
    %vm2031 = vcmp.ge.f32.partialorder %v2013, 0.0
    %vm2032 = vcmp.ge.f32.partialorder %v2014, 0.0
    %v2033 = vmul.f32 %v2029, %v1983
    %v2034 = vmul.f32 %v2030, %v1986
    %v2035 = vmul.f32 %v2029, %v1991
    %v2036 = vmul.f32 %v2030, %v1994
    %v2037 = vmul.f32 %v2029, %v1999
    %v2038 = vmul.f32 %v2030, %v2002
    %v2039 = vsub.f32 %v1914, %v2033
    %v2040 = vsub.f32 %v1915, %v2034
    %v2041 = vsub.f32 %v1916, %v2035
    %v2042 = vsub.f32 %v1917, %v2036
    %v2043 = vsub.f32 %v1918, %v2037
    %v2044 = vsub.f32 %v1919, %v2038
    %v2045 = vsel %vm2031, 1, 0
    %v2046 = vsel %vm2032, 1, 0
    %vm2047 = vcmp.eq.s32.totalorder %v2045, 1
    %vm2048 = vcmp.eq.s32.totalorder %v2046, 1
    %v2049 = vsel %vm2047, %v1914, %v2039
    %v2050 = vsel %vm2048, %v1915, %v2040
    %v2051 = vsel %vm2047, %v1916, %v2041
    %v2052 = vsel %vm2048, %v1917, %v2042
    %v2053 = vsel %vm2047, %v1918, %v2043
    %v2054 = vsel %vm2048, %v1919, %v2044
    %v2055 = vmul.f32 %v1914, 0.2
    %v2056 = vmul.f32 %v1915, 0.2
    %v2057 = vmul.f32 %v1916, 0.2
    %v2058 = vmul.f32 %v1917, 0.2
    %v2059 = vmul.f32 %v1918, 0.2
    %v2060 = vmul.f32 %v1919, 0.2
    %v2061 = vmul.f32 %v2049, 0.8
    %v2062 = vmul.f32 %v2050, 0.8
    %v2063 = vmul.f32 %v2051, 0.8
    %v2064 = vmul.f32 %v2052, 0.8
    %v2065 = vmul.f32 %v2053, 0.8
    %v2066 = vmul.f32 %v2054, 0.8
    %v2067 = vadd.f32 %v2055, %v2061
    %v2068 = vadd.f32 %v2056, %v2062
    %v2069 = vadd.f32 %v2057, %v2063
    %v2070 = vadd.f32 %v2058, %v2064
    %v2071 = vadd.f32 %v2059, %v2065
    %v2072 = vadd.f32 %v2060, %v2066
    %vm2073 = vcmp.ge.f32.partialorder %v1745, 0.0
    %vm2074 = vcmp.ge.f32.partialorder %v1748, 0.0
    %v2075 = vmul.f32 %v1745, 0.01
    %v2076 = vmul.f32 %v1748, 0.01
    %v2077 = vsel %vm2073, %v1745, %v2075
    %v2078 = vsel %vm2074, %v1748, %v2076
    %v2079 = vld [vmem:[%s3 + $0x19c] sm:$0xf]
    %v2080 = vld [vmem:[%s3 + $0x1a0] sm:$0xf]
    %v2081 = vld [vmem:[%s3 + $0x1a4] sm:$0xf]
    %v2082 = vld [vmem:[%s3 + $0x1a8] sm:$0xf]
    %v2083 = vpack.c.bf16 %v2068, %v2067
    %v2084 = vpack.c.bf16 %v2070, %v2069
    %v2085 = vpack.c.bf16 %v2072, %v2071
    %v2090 = vunpack.c.l.b16 %v2079
    %v2091 = vunpack.c.l.b16 %v2080
    %v2092 = vunpack.c.l.b16 %v2081
    %v2093 = vunpack.c.l.b16 %v2082
    %v2094 = vpack.c.b16 %v2091, %v2090
    %v2095 = vpack.c.b16 %v2093, %v2092
    %v2099 = vsel %vm168, %v2083, 0
    %v2102 = vsel %vm168, %v2084, 0
    %v2105 = vsel %vm168, %v2085, 0
    %2107 = vmatprep.subr.bf16.mxu0 0
    %2108 = vmatpush1.bf16.msra.mxu0 0
    %2109 = vmatprep.subr.bf16.mxu0 0
    %2110 = vmatpush1.bf16.msra.mxu0 0
    %2111 = vmatprep.subr.bf16.mxu0 0
    %2112 = vmatpush1.bf16.msra.mxu0 0
    %2113 = vmatprep.subr.bf16.mxu0 0
    %2114 = vmatpush1.bf16.msra.mxu0 0
    %2115 = vmatprep.subr.bf16.mxu0 0
    %2116 = vmatpush1.bf16.msra.mxu0 0
    %2117 = vmatprep.subr.bf16.mxu0 0
    %2118 = vmatpush1.bf16.msra.mxu0 0
    %2119 = vmatprep.subr.bf16.mxu0 0
    %2120 = vmatpush1.bf16.msra.mxu0 %v2095
    %2121 = vmatprep.subr.bf16.mxu0 0
    %2122 = vmatpush1.bf16.msra.mxu0 %v2094
    %2123 = vmatprep.subr.bf16.mxu0 0
    %2124 = vmatpush2.bf16.msra.mxu0 0
    %2125 = vmatprep.subr.bf16.mxu0 0
    %2126 = vmatpush2.bf16.msra.mxu0 0
    %2127 = vmatprep.subr.bf16.mxu0 0
    %2128 = vmatpush2.bf16.msra.mxu0 0
    %2129 = vmatprep.subr.bf16.mxu0 0
    %2130 = vmatpush2.bf16.msra.mxu0 0
    %2131 = vmatprep.subr.bf16.mxu0 0
    %2132 = vmatpush2.bf16.msra.mxu0 0
    %2133 = vmatprep.subr.bf16.mxu0 0
    %2134 = vmatpush2.bf16.msra.mxu0 0
    %2135 = vmatprep.subr.bf16.mxu0 0
    %2136 = vmatpush2.bf16.msra.mxu0 0
    %2137 = vmatprep.subr.bf16.mxu0 0
    %2138 = vmatpush2.bf16.msra.mxu0 0
    %2139 = vmatprep.mubr.bf16.mxu0 0
    %2140 = vmatmul.mubr.bf16.gmra.mxu0 %v2099
    %v2141 = vpop.f32.mrf.mxu0
    %v2142 = vadd.f32 0.0, %v2141
    %v2143 = vpop.f32.mrf.mxu0
    %v2144 = vpop.f32.mrf.mxu0
    %v2145 = vadd.f32 0.0, %v2144
    %v2146 = vpop.f32.mrf.mxu0
    %2147 = vmatprep.mubr.bf16.mxu0 0
    %2148 = vmatmul.mubr.bf16.gmra.mxu0 %v2102
    %v2149 = vpop.f32.mrf.mxu0
    %v2150 = vadd.f32 0.0, %v2149
    %v2151 = vpop.f32.mrf.mxu0
    %v2152 = vpop.f32.mrf.mxu0
    %v2153 = vadd.f32 0.0, %v2152
    %v2154 = vpop.f32.mrf.mxu0
    %2155 = vmatprep.mubr.bf16.mxu0 0
    %2156 = vmatmul.mubr.bf16.gmra.mxu0 %v2105
    %v2157 = vpop.f32.mrf.mxu0
    %v2158 = vadd.f32 0.0, %v2157
    %v2159 = vpop.f32.mrf.mxu0
    %v2160 = vpop.f32.mrf.mxu0
    %v2161 = vadd.f32 0.0, %v2160
    %v2162 = vpop.f32.mrf.mxu0
    %2163 = vdwg.mxu0
    %v2164 = vmul.f32 %v2142, %v2142
    %v2165 = vmul.f32 %v2145, %v2145
    %v2166 = vmul.f32 %v2150, %v2150
    %v2167 = vmul.f32 %v2153, %v2153
    %v2168 = vadd.f32 %v2164, %v2166
    %v2169 = vadd.f32 %v2165, %v2167
    %v2170 = vmul.f32 %v2158, %v2158
    %v2171 = vmul.f32 %v2161, %v2161
    %v2172 = vadd.f32 %v2168, %v2170
    %v2173 = vadd.f32 %v2169, %v2171
    %v2174 = vrsqrt.pop %v2172
    %v2175 = vmul.f32 %v2172, %v2174
    %vm2176 = vcmp.eq.f32.partialorder %v2172, inf
    %v2177 = vsel %vm2176, %v2172, %v2175
    %vm2178 = vcmp.eq.f32.partialorder %v2172, 0.0
    %v2179 = vand.u32 %v2172, 2147483648
    %v2180 = vsel %vm2178, %v2179, %v2177
    %v2181 = vrsqrt.pop %v2173
    %v2182 = vmul.f32 %v2173, %v2181
    %vm2183 = vcmp.eq.f32.partialorder %v2173, inf
    %v2184 = vsel %vm2183, %v2173, %v2182
    %vm2185 = vcmp.eq.f32.partialorder %v2173, 0.0
    %v2186 = vand.u32 %v2173, 2147483648
    %v2187 = vsel %vm2185, %v2186, %v2184
    %v2188 = vld [vmem:[%s4 + $0x4] sm:$0x1]
    %v2189 = vlaneseq
    %v2190 = vshrl.u32 %v2189, 7
    %v2191 = vsub.s32 0, %v2190
    %v2192 = vrot.slane %v2188, %v2191
    %v2193 = vmul.f32 %v2180, %v2192
    %v2194 = vmul.f32 %v2187, %v2192
    %v2195 = vsel %vm168, %v2193, 0.0
    %2196 = vadd.xlane.f32.xlu0 %v2195
    %v2197 = vpop.xlane.xlu0 %2196
    %v2198 = vsel %vm168, %v2194, 0.0
    %2199 = vadd.xlane.f32.xlu0 %v2198
    %v2200 = vpop.xlane.xlu0 %2199
    %v2201 = vld [vmem:[%s4 + $0x5] sm:$0x1]
    %v2202 = vlaneseq
    %v2203 = vshrl.u32 %v2202, 7
    %v2204 = vsub.s32 0, %v2203
    %v2205 = vrot.slane %v2201, %v2204
    %v2206 = vmul.f32 %v2077, %v2205
    %v2207 = vmul.f32 %v2078, %v2205
    %v2208 = vsel %vm168, %v2206, 0.0
    %2209 = vadd.xlane.f32.xlu0 %v2208
    %v2210 = vpop.xlane.xlu0 %2209
    %v2211 = vsel %vm168, %v2207, 0.0
    %2212 = vadd.xlane.f32.xlu0 %v2211
    %v2213 = vpop.xlane.xlu0 %2212
    %v2214 = vadd.f32 %v2197, %v2210
    %v2215 = vadd.f32 %v2200, %v2213
    %2216 = vxpose.xlu0.b32.start [1/16] %v2214, 128
    %2217 = vxpose.xlu0.b32.cont [2/16] %v2215, 128
    %2218 = vxpose.xlu0.b32.cont [3/16] 0.0, 128
    %2219 = vxpose.xlu0.b32.cont [4/16] 0.0, 128
    %2220 = vxpose.xlu0.b32.cont [5/16] 0.0, 128
    %2221 = vxpose.xlu0.b32.cont [6/16] 0.0, 128
    %2222 = vxpose.xlu0.b32.cont [7/16] 0.0, 128
    %2223 = vxpose.xlu0.b32.cont [8/16] 0.0, 128
    %2224 = vxpose.xlu0.b32.cont [9/16] 0.0, 128
    %2225 = vxpose.xlu0.b32.cont [10/16] 0.0, 128
    %2226 = vxpose.xlu0.b32.cont [11/16] 0.0, 128
    %2227 = vxpose.xlu0.b32.cont [12/16] 0.0, 128
    %2228 = vxpose.xlu0.b32.cont [13/16] 0.0, 128
    %2229 = vxpose.xlu0.b32.cont [14/16] 0.0, 128
    %2230 = vxpose.xlu0.b32.cont [15/16] 0.0, 128
    %2231 = vxpose.xlu0.b32.end [16/16] 0.0, 128
    %v2232 = vpop.trf.xlu0
    %v2233 = vpop.trf.xlu0
    %v2234 = vpop.trf.xlu0
    %v2235 = vpop.trf.xlu0
    %v2236 = vpop.trf.xlu0
    %v2237 = vpop.trf.xlu0
    %v2238 = vpop.trf.xlu0
    %v2239 = vpop.trf.xlu0
    %v2240 = vpop.trf.xlu0
    %v2241 = vpop.trf.xlu0
    %v2242 = vpop.trf.xlu0
    %v2243 = vpop.trf.xlu0
    %v2244 = vpop.trf.xlu0
    %v2245 = vpop.trf.xlu0
    %v2246 = vpop.trf.xlu0
    %v2247 = vpop.trf.xlu0
    %vm2248 = vcmask 122880
    %2249 = vst.msk [vmem:[#allocation2] sm:$0x1] %vm2248, %v2232
    // Predicated region
    $region22: #{tpu_custom_call.1} parent=1 // pred_check
      _
    $region23: #{tpu_custom_call.1} parent=1 // pred_check_branch
      %2251 = sbr.rel (0) target = $region25
    $region24: #{tpu_custom_call.1} parent=1 // pred_region
      %s2253 = ssub.s32 16, 16
      %2254 = vsyncadd [#allocation3], %s2253
      %s2256 = sshll.u32 [#allocation2], 4
      %s2257 = int_to_ptr.vmem [resolvable:$true] %s2256
      %2259 = dma.vmem_to_hbm [thread:$0]  %s2257, 16, %s5, [#allocation3]
    $region25: #{tpu_custom_call.1} parent=1 // pred_fallthru
      _
    // Predicated region
    $region26: #{tpu_custom_call.1} parent=1 // pred_check
      _
    $region27: #{tpu_custom_call.1} parent=1 // pred_check_branch
      %2261 = sbr.rel (0) target = $region29
    $region28: #{tpu_custom_call.1} parent=1 // pred_region
      %2262 = dma.done [#allocation3], 16
    $region29: #{tpu_custom_call.1} parent=1 // pred_fallthru
      _
    %2263 = vsyncpa [#allocation3], 1

</llo_original>
